<compile_context>
chip_gen: v7x
topology: tpu7x:2x2x1
jax: 0.10.0
libtpu: 0.0.40
codegen_flags: <defaults>
</compile_context>

<pallas_src>
import functools
import math

import jax
import jax.numpy as jnp
from jax.experimental import pallas as pl
from jax.experimental.pallas import tpu as pltpu


# ----------------------------------------------------------------------------
# Shared math (used by the Pallas kernel and by the pure-JAX reference)
# ----------------------------------------------------------------------------
def _layernorm(v, g, b, eps=1e-5):
    mu = jnp.mean(v, axis=-1, keepdims=True)
    var = jnp.mean(jnp.square(v - mu), axis=-1, keepdims=True)
    return (v - mu) * jax.lax.rsqrt(var + eps) * g + b


def _attention(y_ln, inproj_w, inproj_b, outproj_w, outproj_b, *,
               heads, q_start, approx_recip):
    """Multi-head self-attention over y_ln (B, S, W).

    Queries start at row `q_start` (keys/values use all rows), so the last
    layer can skip the input-token queries whose outputs the module discards.
    Heads are packed into a single batched contraction (no per-head matmuls).
    """
    B, S, W = y_ln.shape
    H = heads
    Dh = W // H
    scale = Dh ** -0.5
    cdt = inproj_w.dtype                     # bf16 compute dtype for the MXU

    qkv = jnp.dot(y_ln.reshape(B * S, W).astype(cdt), inproj_w,
                  preferred_element_type=jnp.float32) + inproj_b
    qkv = qkv.reshape(B, S, 3 * W)
    q = qkv[..., :W][:, q_start:, :] * scale             # (B, Sq, W)  f32
    k = qkv[..., W:2 * W]                                 # (B, S,  W)
    v = qkv[..., 2 * W:]                                  # (B, S,  W)
    Sq = S - q_start

    def to_heads(t):
        # (B, St, W) -> (H*B, St, Dh): static lane slices + leading-axis stack
        # (transpose-free -> Mosaic-friendly relayout).
        St = t.shape[1]
        return jnp.stack(
            [t[:, :, h * Dh:(h + 1) * Dh] for h in range(H)], axis=0
        ).reshape(H * B, St, Dh)

    qh = to_heads(q).astype(cdt)
    kh = to_heads(k).astype(cdt)
    vh = to_heads(v).astype(cdt)

    s = jnp.einsum('zqd,zkd->zqk', qh, kh,
                   preferred_element_type=jnp.float32)    # (H*B, Sq, S)
    s = s - jnp.max(s, axis=-1, keepdims=True)
    e = jnp.exp(s)
    denom = jnp.sum(e, axis=-1, keepdims=True)
    if approx_recip:
        p = e * pl.reciprocal(denom, approx=True)         # EUP slot, ~free
    else:
        p = e / denom
    o = jnp.einsum('zqk,zkd->zqd', p.astype(cdt), vh,
                   preferred_element_type=jnp.float32)    # (H*B, Sq, Dh)
    o = o.reshape(H, B, Sq, Dh)
    o = jnp.concatenate([o[h] for h in range(H)], axis=-1)   # (B, Sq, W)

    o = jnp.dot(o.reshape(B * Sq, W).astype(cdt), outproj_w,
                preferred_element_type=jnp.float32) + outproj_b
    return o.reshape(B, Sq, W)


def _mlp(y_ln, fc_w, fc_b, proj_w, proj_b):
    B, S, W = y_ln.shape
    cdt = fc_w.dtype
    h = jnp.dot(y_ln.reshape(B * S, W).astype(cdt), fc_w,
                preferred_element_type=jnp.float32) + fc_b
    h = h * jax.nn.sigmoid(1.702 * h)                      # QuickGELU (f32)
    h = jnp.dot(h.astype(cdt), proj_w,
                preferred_element_type=jnp.float32) + proj_b
    return h.reshape(B, S, W)


def _step_math(x_step, mem, mask_step, pos, init_mem,
               lnpre_g, lnpre_b, layer_params, num_layers, *,
               heads, approx_recip):
    """One recurrent step: returns the new memory tokens (B, M, W)."""
    B, N, W = x_step.shape

    x_step = x_step + pos[None]                            # (B, N, W)
    mem = mem * mask_step + (1.0 - mask_step) * init_mem[None]

    y = jnp.concatenate([x_step, mem], axis=1)             # (B, S, W)
    y = _layernorm(y, lnpre_g, lnpre_b)

    # Static unroll: each iteration loads ONE layer's weights via
    # layer_params(l) (per-layer ref indexing), keeping only ~12*W^2 floats
    # live at a time.  For large `layers`, switch to lax.fori_loop with dynamic
    # first-axis ref indexing to bound live ranges further.
    for l in range(num_layers):
        (ln1_g, ln1_b, inproj_w, inproj_b, outproj_w, outproj_b,
         ln2_g, ln2_b, fc_w, fc_b, proj_w, proj_b) = layer_params(l)
        last = (l == num_layers - 1)
        q_start = N if last else 0   # last layer: memory-token queries only

        ln1 = _layernorm(y, ln1_g, ln1_b)
        attn = _attention(ln1, inproj_w, inproj_b, outproj_w, outproj_b,
                          heads=heads, q_start=q_start,
                          approx_recip=approx_recip)
        y = (y[:, q_start:, :] if last else y) + attn

        ln2 = _layernorm(y, ln2_g, ln2_b)
        y = y + _mlp(ln2, fc_w, fc_b, proj_w, proj_b)

    return y                                               # (B, M, W)


# ----------------------------------------------------------------------------
# Pallas kernel: grid = (sampler_chunks, num_steps), memory in VMEM scratch
# ----------------------------------------------------------------------------
def _recurrent_transformer_kernel(
        x_ref, mem0_ref, mask_ref, pos_ref, initmem_ref,
        lnpre_g_ref, lnpre_b_ref,
        ln1_g_ref, ln1_b_ref, inproj_w_ref, inproj_b_ref,
        outproj_w_ref, outproj_b_ref,
        ln2_g_ref, ln2_b_ref, fc_w_ref, fc_b_ref, proj_w_ref, proj_b_ref,
        mem_steps_ref, mem_final_ref,
        mem_scratch,
        *, num_layers, heads):
    step = pl.program_id(1)

    @pl.when(step == 0)
    def _():
        mem_scratch[...] = mem0_ref[...]

    def layer_params(l):         # per-layer loads from the refs
        return (ln1_g_ref[l], ln1_b_ref[l],
                inproj_w_ref[l], inproj_b_ref[l],
                outproj_w_ref[l], outproj_b_ref[l],
                ln2_g_ref[l], ln2_b_ref[l],
                fc_w_ref[l], fc_b_ref[l],
                proj_w_ref[l], proj_b_ref[l])

    mem_new = _step_math(
        x_ref[0], mem_scratch[...], mask_ref[0],
        pos_ref[...], initmem_ref[...],
        lnpre_g_ref[...], lnpre_b_ref[...],
        layer_params, num_layers,
        heads=heads, approx_recip=True)

    mem_scratch[...] = mem_new
    mem_steps_ref[...] = mem_new[None]            # written every step

    @pl.when(step == pl.num_programs(1) - 1)
    def _():
        mem_final_ref[...] = mem_new[None]        # resident block: last step only


def recurrent_transformer_pallas(x, memory, memory_reset_mask, params, *,
                                 num_memory, heads, num_sampler_chunks=None):
    T, B, N, W = x.shape
    M = num_memory
    L = params['ln1_g'].shape[0]
    f32 = jnp.float32

    if num_sampler_chunks is None:
        num_sampler_chunks = 2 if (B >= 2 and B % 2 == 0) else 1
    assert B % num_sampler_chunks == 0
    NB = num_sampler_chunks
    Bc = B // NB

    # Lane-dense reset mask: (T, B, 1) -> (T, B, 1, W) so the per-step block
    # (1, Bc, 1, W) keeps the chunked B dim out of the tiled (last two) dims.
    mask4 = jnp.broadcast_to(
        memory_reset_mask.astype(f32)[:, :, :, None], (T, B, 1, W))

    def full(shape):
        n = len(shape)
        return pl.BlockSpec(shape, lambda b, s, _n=n: (0,) * _n)

    grid_spec = pltpu.PrefetchScalarGridSpec(
        num_scalar_prefetch=0,
        grid=(NB, T),
        in_specs=[
            pl.BlockSpec((1, Bc, N, W), lambda b, s: (s, b, 0, 0)),   # x
            pl.BlockSpec((Bc, M, W),    lambda b, s: (b, 0, 0)),      # initial memory
            pl.BlockSpec((1, Bc, 1, W), lambda b, s: (s, b, 0, 0)),   # reset mask
            full((N, W)),                                             # positional emb
            full((M, W)),                                             # initial mem emb
            full((1, W)), full((1, W)),                               # ln_pre g / b
            full((L, 1, W)), full((L, 1, W)),                         # ln_1 g / b
            full((L, W, 3 * W)), full((L, 1, 3 * W)),                 # attn in_proj w/b
            full((L, W, W)), full((L, 1, W)),                         # attn out_proj w/b
            full((L, 1, W)), full((L, 1, W)),                         # ln_2 g / b
            full((L, W, 4 * W)), full((L, 1, 4 * W)),                 # mlp c_fc w/b
            full((L, 4 * W, W)), full((L, 1, W)),                     # mlp c_proj w/b
        ],
        out_specs=[
            pl.BlockSpec((1, Bc, M, W), lambda b, s: (s, b, 0, 0)),   # per-step memory
            pl.BlockSpec((1, Bc, M, W), lambda b, s: (0, b, 0, 0)),   # final memory
        ],
        scratch_shapes=[pltpu.VMEM((Bc, M, W), f32)],
    )

    out_shape = (jax.ShapeDtypeStruct((T, B, M, W), f32),
                 jax.ShapeDtypeStruct((1, B, M, W), f32))

    # VMEM budget: resident weights x2 buffers + per-step blocks x2 + scratch
    # + margin, clamped to sane physical limits.
    def nbytes(a):
        return math.prod(a.shape) * jnp.dtype(a.dtype).itemsize
    weight_keys = ('pos', 'init_mem', 'lnpre_g', 'lnpre_b', 'ln1_g', 'ln1_b',
                   'inproj_w', 'inproj_b', 'outproj_w', 'outproj_b',
                   'ln2_g', 'ln2_b', 'fc_w', 'fc_b', 'proj_w', 'proj_b')
    resident = sum(nbytes(params[k]) for k in weight_keys) + B * M * W * 4
    per_step = (Bc * N * W + Bc * W + 2 * Bc * M * W) * 4
    scratch_b = Bc * M * W * 4
    vmem_limit = int(min(110 * 2 ** 20,
                         max(32 * 2 ** 20,
                             2 * (resident + per_step) + scratch_b
                             + 8 * 2 ** 20)))
    # TODO(synk): for configs where the full bf16 weight stack exceeds ~50 MiB
    # (v7x), stream the per-layer weights from HBM with memory_space=pl.ANY +
    # pltpu.emit_pipeline instead of keeping all L layers VMEM-resident.

    kernel = functools.partial(_recurrent_transformer_kernel,
                               num_layers=L, heads=heads)
    return pl.pallas_call(
        kernel,
        grid_spec=grid_spec,
        out_shape=out_shape,
        compiler_params=pltpu.CompilerParams(
            # sampler chunks are independent -> "parallel" (both TCs on v7x);
            # the step axis carries the recurrence -> sequential "arbitrary".
            dimension_semantics=("parallel", "arbitrary"),
            vmem_limit_bytes=vmem_limit),
    )(x, memory[0], mask4,
      params['pos'], params['init_mem'],
      params['lnpre_g'], params['lnpre_b'],
      params['ln1_g'], params['ln1_b'],
      params['inproj_w'], params['inproj_b'],
      params['outproj_w'], params['outproj_b'],
      params['ln2_g'], params['ln2_b'],
      params['fc_w'], params['fc_b'],
      params['proj_w'], params['proj_b'])


# ----------------------------------------------------------------------------
# Pure-JAX reference (same math, plain loop) for correctness checking
# ----------------------------------------------------------------------------
def reference_forward(x, memory, mask, params, *, num_memory, heads):
    T, B, N, W = x.shape
    L = params['ln1_g'].shape[0]
    mem = memory[0]

    def layer_params(l):
        return (params['ln1_g'][l], params['ln1_b'][l],
                params['inproj_w'][l], params['inproj_b'][l],
                params['outproj_w'][l], params['outproj_b'][l],
                params['ln2_g'][l], params['ln2_b'][l],
                params['fc_w'][l], params['fc_b'][l],
                params['proj_w'][l], params['proj_b'][l])

    mem_steps = []
    for t in range(T):
        mem = _step_math(
            x[t], mem, mask[t][:, :, None].astype(jnp.float32),
            params['pos'], params['init_mem'],
            params['lnpre_g'], params['lnpre_b'],
            layer_params, L, heads=heads, approx_recip=False)
        mem_steps.append(mem)
    return jnp.stack(mem_steps, axis=0), mem[None]


# ----------------------------------------------------------------------------
# Deterministic parameter init (shapes follow the nn.Module __init__)
# ----------------------------------------------------------------------------
def init_params(key, num_inputs, num_memory, width, layers,
                weight_dtype=jnp.bfloat16):
    W, L = width, layers
    scale = W ** -0.5
    keys = iter(jax.random.split(key, 16))

    def nrm(shape, s, dtype=jnp.float32):
        return (s * jax.random.normal(next(keys), shape)).astype(dtype)

    return dict(
        pos=nrm((num_inputs, W), scale),
        init_mem=nrm((num_memory, W), scale),
        lnpre_g=jnp.ones((1, W), jnp.float32),
        lnpre_b=jnp.zeros((1, W), jnp.float32),
        ln1_g=jnp.ones((L, 1, W), jnp.float32),
        ln1_b=jnp.zeros((L, 1, W), jnp.float32),
        # weights pre-transposed (in_features, out_features), bf16 for the MXU
        # path; biases / LayerNorm params stay f32.
        inproj_w=nrm((L, W, 3 * W), W ** -0.5, weight_dtype),
        inproj_b=nrm((L, 1, 3 * W), 0.02),
        outproj_w=nrm((L, W, W), W ** -0.5, weight_dtype),
        outproj_b=nrm((L, 1, W), 0.02),
        ln2_g=jnp.ones((L, 1, W), jnp.float32),
        ln2_b=jnp.zeros((L, 1, W), jnp.float32),
        fc_w=nrm((L, W, 4 * W), W ** -0.5, weight_dtype),
        fc_b=nrm((L, 1, 4 * W), 0.02),
        proj_w=nrm((L, 4 * W, W), (4 * W) ** -0.5, weight_dtype),
        proj_b=nrm((L, 1, W), 0.02),
    )


if __name__ == "__main__":
    num_steps, num_samplers = 3, 2
    num_inputs, num_memory, width, layers, heads = 6, 2, 128, 2, 4  # W lane-dense

    key = jax.random.PRNGKey(0)
    k1, k2, k3, kp = jax.random.split(key, 4)
    x = jax.random.normal(
        k1, (num_steps, num_samplers, num_inputs, width), jnp.float32)
    memory = jax.random.normal(
        k2, (1, num_samplers, num_memory, width), jnp.float32)
    memory_reset_mask = (
        jax.random.uniform(k3, (num_steps, num_samplers, 1)) > 0.5
    ).astype(jnp.float32)
    params = init_params(kp, num_inputs, num_memory, width, layers)

    mem_steps, mem_final = recurrent_transformer_pallas(
        x, memory, memory_reset_mask, params,
        num_memory=num_memory, heads=heads)
    jax.block_until_ready((mem_steps, mem_final))

    ref_steps, ref_final = reference_forward(
        x, memory, memory_reset_mask, params,
        num_memory=num_memory, heads=heads)

    assert mem_steps.shape == (num_steps, num_samplers, num_memory, width)
    assert mem_final.shape == (1, num_samplers, num_memory, width)
    # bf16 matmuls + approx softmax reciprocal -> loosened tolerance.
    assert jnp.allclose(mem_steps, ref_steps, atol=2e-2, rtol=2e-2), \
        "per-step memory mismatch"
    assert jnp.allclose(mem_final, ref_final, atol=2e-2, rtol=2e-2), \
        "final memory mismatch"
    print("KERNEL_OK")
</pallas_src>

<mosaic_0001>
module attributes {stable_mosaic.version = 11 : i64} {
  func.func @_recurrent_transformer_kernel(%arg0: i32, %arg1: i32, %arg2: memref<1x1x6x128xf32, #tpu.memory_space<vmem>>, %arg3: memref<1x2x128xf32, #tpu.memory_space<vmem>>, %arg4: memref<1x1x1x128xf32, #tpu.memory_space<vmem>>, %arg5: memref<6x128xf32, #tpu.memory_space<vmem>>, %arg6: memref<2x128xf32, #tpu.memory_space<vmem>>, %arg7: memref<1x128xf32, #tpu.memory_space<vmem>>, %arg8: memref<1x128xf32, #tpu.memory_space<vmem>>, %arg9: memref<2x1x128xf32, #tpu.memory_space<vmem>>, %arg10: memref<2x1x128xf32, #tpu.memory_space<vmem>>, %arg11: memref<2x128x384xbf16, #tpu.memory_space<vmem>>, %arg12: memref<2x1x384xf32, #tpu.memory_space<vmem>>, %arg13: memref<2x128x128xbf16, #tpu.memory_space<vmem>>, %arg14: memref<2x1x128xf32, #tpu.memory_space<vmem>>, %arg15: memref<2x1x128xf32, #tpu.memory_space<vmem>>, %arg16: memref<2x1x128xf32, #tpu.memory_space<vmem>>, %arg17: memref<2x128x512xbf16, #tpu.memory_space<vmem>>, %arg18: memref<2x1x512xf32, #tpu.memory_space<vmem>>, %arg19: memref<2x512x128xbf16, #tpu.memory_space<vmem>>, %arg20: memref<2x1x128xf32, #tpu.memory_space<vmem>>, %arg21: memref<1x1x2x128xf32, #tpu.memory_space<vmem>>, %arg22: memref<1x1x2x128xf32, #tpu.memory_space<vmem>>, %arg23: memref<1x2x128xf32, #tpu.memory_space<vmem>>) attributes {dimension_semantics = [#tpu.dimension_semantics<parallel>, #tpu.dimension_semantics<arbitrary>], iteration_bounds = array<i64: 2, 3>, scalar_prefetch = 0 : i64, scratch_operands = 1 : i64, tpu.core_type = #tpu.core_type<tc>, window_params = [{transform_indices = @transform_0, window_bounds = array<i64: 1, 1, 6, 128>}, {transform_indices = @transform_1, window_bounds = array<i64: 1, 2, 128>}, {transform_indices = @transform_2, window_bounds = array<i64: 1, 1, 1, 128>}, {pipeline_mode = #tpu.pipeline_mode<synchronous>, transform_indices = @transform_3, window_bounds = array<i64: 6, 128>}, {pipeline_mode = #tpu.pipeline_mode<synchronous>, transform_indices = @transform_4, window_bounds = array<i64: 2, 128>}, {pipeline_mode = #tpu.pipeline_mode<synchronous>, transform_indices = @transform_5, window_bounds = array<i64: 1, 128>}, {pipeline_mode = #tpu.pipeline_mode<synchronous>, transform_indices = @transform_6, window_bounds = array<i64: 1, 128>}, {pipeline_mode = #tpu.pipeline_mode<synchronous>, transform_indices = @transform_7, window_bounds = array<i64: 2, 1, 128>}, {pipeline_mode = #tpu.pipeline_mode<synchronous>, transform_indices = @transform_8, window_bounds = array<i64: 2, 1, 128>}, {pipeline_mode = #tpu.pipeline_mode<synchronous>, transform_indices = @transform_9, window_bounds = array<i64: 2, 128, 384>}, {pipeline_mode = #tpu.pipeline_mode<synchronous>, transform_indices = @transform_10, window_bounds = array<i64: 2, 1, 384>}, {pipeline_mode = #tpu.pipeline_mode<synchronous>, transform_indices = @transform_11, window_bounds = array<i64: 2, 128, 128>}, {pipeline_mode = #tpu.pipeline_mode<synchronous>, transform_indices = @transform_12, window_bounds = array<i64: 2, 1, 128>}, {pipeline_mode = #tpu.pipeline_mode<synchronous>, transform_indices = @transform_13, window_bounds = array<i64: 2, 1, 128>}, {pipeline_mode = #tpu.pipeline_mode<synchronous>, transform_indices = @transform_14, window_bounds = array<i64: 2, 1, 128>}, {pipeline_mode = #tpu.pipeline_mode<synchronous>, transform_indices = @transform_15, window_bounds = array<i64: 2, 128, 512>}, {pipeline_mode = #tpu.pipeline_mode<synchronous>, transform_indices = @transform_16, window_bounds = array<i64: 2, 1, 512>}, {pipeline_mode = #tpu.pipeline_mode<synchronous>, transform_indices = @transform_17, window_bounds = array<i64: 2, 512, 128>}, {pipeline_mode = #tpu.pipeline_mode<synchronous>, transform_indices = @transform_18, window_bounds = array<i64: 2, 1, 128>}, {transform_indices = @transform_19, window_bounds = array<i64: 1, 1, 2, 128>}, {transform_indices = @transform_20, window_bounds = array<i64: 1, 1, 2, 128>}]} {
    %c0_i32 = arith.constant 0 : i32
    %0 = arith.cmpi eq, %arg1, %c0_i32 : i32
    %1 = arith.extui %0 : i1 to i32
    %c0_i32_0 = arith.constant 0 : i32
    %2 = arith.cmpi ne, %1, %c0_i32_0 : i32
    scf.if %2 {
      %c0_145 = arith.constant 0 : index
      %c0_146 = arith.constant 0 : index
      %c0_147 = arith.constant 0 : index
      %385 = vector.load %arg3[%c0_145, %c0_146, %c0_147] : memref<1x2x128xf32, #tpu.memory_space<vmem>>, vector<1x2x128xf32>
      %c0_148 = arith.constant 0 : index
      %c0_149 = arith.constant 0 : index
      %c0_150 = arith.constant 0 : index
      %386 = vector.load %arg23[%c0_148, %c0_149, %c0_150] : memref<1x2x128xf32, #tpu.memory_space<vmem>>, vector<1x2x128xf32>
      tpu.vector_store %arg23[%c0_148, %c0_149, %c0_150], %385 {strides = array<i32>} : memref<1x2x128xf32, #tpu.memory_space<vmem>>, vector<1x2x128xf32>,
    } else {
    }
    %c0 = arith.constant 0 : index
    %c0_1 = arith.constant 0 : index
    %c0_2 = arith.constant 0 : index
    %c0_3 = arith.constant 0 : index
    %3 = vector.load %arg2[%c0, %c0_1, %c0_2, %c0_3] : memref<1x1x6x128xf32, #tpu.memory_space<vmem>>, vector<1x1x6x128xf32>
    %4 = vector.shape_cast %3 : vector<1x1x6x128xf32> to vector<1x6x128xf32>
    %c0_4 = arith.constant 0 : index
    %c0_5 = arith.constant 0 : index
    %c0_6 = arith.constant 0 : index
    %5 = vector.load %arg23[%c0_4, %c0_5, %c0_6] : memref<1x2x128xf32, #tpu.memory_space<vmem>>, vector<1x2x128xf32>
    %c0_7 = arith.constant 0 : index
    %c0_8 = arith.constant 0 : index
    %c0_9 = arith.constant 0 : index
    %c0_10 = arith.constant 0 : index
    %6 = vector.load %arg4[%c0_7, %c0_8, %c0_9, %c0_10] : memref<1x1x1x128xf32, #tpu.memory_space<vmem>>, vector<1x1x1x128xf32>
    %7 = vector.shape_cast %6 : vector<1x1x1x128xf32> to vector<1x1x128xf32>
    %c0_11 = arith.constant 0 : index
    %c0_12 = arith.constant 0 : index
    %8 = vector.load %arg5[%c0_11, %c0_12] : memref<6x128xf32, #tpu.memory_space<vmem>>, vector<6x128xf32>
    %c0_13 = arith.constant 0 : index
    %c0_14 = arith.constant 0 : index
    %9 = vector.load %arg6[%c0_13, %c0_14] : memref<2x128xf32, #tpu.memory_space<vmem>>, vector<2x128xf32>
    %c0_15 = arith.constant 0 : index
    %c0_16 = arith.constant 0 : index
    %10 = vector.load %arg7[%c0_15, %c0_16] : memref<1x128xf32, #tpu.memory_space<vmem>>, vector<1x128xf32>
    %c0_17 = arith.constant 0 : index
    %c0_18 = arith.constant 0 : index
    %11 = vector.load %arg8[%c0_17, %c0_18] : memref<1x128xf32, #tpu.memory_space<vmem>>, vector<1x128xf32>
    %12 = vector.shape_cast %8 : vector<6x128xf32> to vector<1x6x128xf32>
    %13 = arith.addf %4, %12 : vector<1x6x128xf32>
    %14 = vector.broadcast %7 : vector<1x1x128xf32> to vector<1x2x128xf32>
    %15 = arith.mulf %5, %14 : vector<1x2x128xf32>
    %cst = arith.constant 1.000000e+00 : f32
    %16 = vector.broadcast %cst : f32 to vector<1x1x128xf32>
    %17 = arith.subf %16, %7 : vector<1x1x128xf32>
    %18 = vector.shape_cast %9 : vector<2x128xf32> to vector<1x2x128xf32>
    %19 = vector.broadcast %17 : vector<1x1x128xf32> to vector<1x2x128xf32>
    %20 = arith.mulf %19, %18 : vector<1x2x128xf32>
    %21 = arith.addf %15, %20 : vector<1x2x128xf32>
    %22 = tpu.concatenate %13, %21 in 1 : vector<1x6x128xf32>, vector<1x2x128xf32> -> vector<1x8x128xf32>
    %cst_19 = arith.constant dense<0.000000e+00> : vector<1x8xf32>
    %23 = vector.multi_reduction <add>, %22, %cst_19 [2] : vector<1x8x128xf32> to vector<1x8xf32>
    %24 = vector.shape_cast %23 : vector<1x8xf32> to vector<1x8x1xf32>
    %cst_20 = arith.constant 1.280000e+02 : f32
    %25 = vector.broadcast %cst_20 : f32 to vector<1x8x1xf32>
    %26 = arith.divf %24, %25 : vector<1x8x1xf32>
    %27 = vector.broadcast %26 : vector<1x8x1xf32> to vector<1x8x128xf32>
    %28 = arith.subf %22, %27 : vector<1x8x128xf32>
    %29 = arith.mulf %28, %28 : vector<1x8x128xf32>
    %cst_21 = arith.constant dense<0.000000e+00> : vector<1x8xf32>
    %30 = vector.multi_reduction <add>, %29, %cst_21 [2] : vector<1x8x128xf32> to vector<1x8xf32>
    %31 = vector.shape_cast %30 : vector<1x8xf32> to vector<1x8x1xf32>
    %cst_22 = arith.constant 1.280000e+02 : f32
    %32 = vector.broadcast %cst_22 : f32 to vector<1x8x1xf32>
    %33 = arith.divf %31, %32 : vector<1x8x1xf32>
    %34 = vector.broadcast %26 : vector<1x8x1xf32> to vector<1x8x128xf32>
    %35 = arith.subf %22, %34 : vector<1x8x128xf32>
    %cst_23 = arith.constant 9.99999974E-6 : f32
    %36 = vector.broadcast %cst_23 : f32 to vector<1x8x1xf32>
    %37 = arith.addf %33, %36 : vector<1x8x1xf32>
    %38 = math.rsqrt %37 : vector<1x8x1xf32>
    %39 = vector.broadcast %38 : vector<1x8x1xf32> to vector<1x8x128xf32>
    %40 = arith.mulf %35, %39 : vector<1x8x128xf32>
    %41 = vector.shape_cast %10 : vector<1x128xf32> to vector<1x1x128xf32>
    %42 = vector.broadcast %41 : vector<1x1x128xf32> to vector<1x8x128xf32>
    %43 = arith.mulf %40, %42 : vector<1x8x128xf32>
    %44 = vector.shape_cast %11 : vector<1x128xf32> to vector<1x1x128xf32>
    %45 = vector.broadcast %44 : vector<1x1x128xf32> to vector<1x8x128xf32>
    %46 = arith.addf %43, %45 : vector<1x8x128xf32>
    %c0_24 = arith.constant 0 : index
    %c0_25 = arith.constant 0 : index
    %c0_26 = arith.constant 0 : index
    %47 = vector.load %arg9[%c0_24, %c0_25, %c0_26] : memref<2x1x128xf32, #tpu.memory_space<vmem>>, vector<1x1x128xf32>
    %48 = vector.shape_cast %47 : vector<1x1x128xf32> to vector<1x128xf32>
    %c0_27 = arith.constant 0 : index
    %c0_28 = arith.constant 0 : index
    %c0_29 = arith.constant 0 : index
    %49 = vector.load %arg10[%c0_27, %c0_28, %c0_29] : memref<2x1x128xf32, #tpu.memory_space<vmem>>, vector<1x1x128xf32>
    %50 = vector.shape_cast %49 : vector<1x1x128xf32> to vector<1x128xf32>
    %c0_30 = arith.constant 0 : index
    %c0_31 = arith.constant 0 : index
    %c0_32 = arith.constant 0 : index
    %51 = vector.load %arg11[%c0_30, %c0_31, %c0_32] : memref<2x128x384xbf16, #tpu.memory_space<vmem>>, vector<1x128x384xbf16>
    %52 = vector.shape_cast %51 : vector<1x128x384xbf16> to vector<128x384xbf16>
    %c0_33 = arith.constant 0 : index
    %c0_34 = arith.constant 0 : index
    %c0_35 = arith.constant 0 : index
    %53 = vector.load %arg12[%c0_33, %c0_34, %c0_35] : memref<2x1x384xf32, #tpu.memory_space<vmem>>, vector<1x1x384xf32>
    %54 = vector.shape_cast %53 : vector<1x1x384xf32> to vector<1x384xf32>
    %c0_36 = arith.constant 0 : index
    %c0_37 = arith.constant 0 : index
    %c0_38 = arith.constant 0 : index
    %55 = vector.load %arg13[%c0_36, %c0_37, %c0_38] : memref<2x128x128xbf16, #tpu.memory_space<vmem>>, vector<1x128x128xbf16>
    %56 = vector.shape_cast %55 : vector<1x128x128xbf16> to vector<128x128xbf16>
    %c0_39 = arith.constant 0 : index
    %c0_40 = arith.constant 0 : index
    %c0_41 = arith.constant 0 : index
    %57 = vector.load %arg14[%c0_39, %c0_40, %c0_41] : memref<2x1x128xf32, #tpu.memory_space<vmem>>, vector<1x1x128xf32>
    %58 = vector.shape_cast %57 : vector<1x1x128xf32> to vector<1x128xf32>
    %c0_42 = arith.constant 0 : index
    %c0_43 = arith.constant 0 : index
    %c0_44 = arith.constant 0 : index
    %59 = vector.load %arg15[%c0_42, %c0_43, %c0_44] : memref<2x1x128xf32, #tpu.memory_space<vmem>>, vector<1x1x128xf32>
    %60 = vector.shape_cast %59 : vector<1x1x128xf32> to vector<1x128xf32>
    %c0_45 = arith.constant 0 : index
    %c0_46 = arith.constant 0 : index
    %c0_47 = arith.constant 0 : index
    %61 = vector.load %arg16[%c0_45, %c0_46, %c0_47] : memref<2x1x128xf32, #tpu.memory_space<vmem>>, vector<1x1x128xf32>
    %62 = vector.shape_cast %61 : vector<1x1x128xf32> to vector<1x128xf32>
    %c0_48 = arith.constant 0 : index
    %c0_49 = arith.constant 0 : index
    %c0_50 = arith.constant 0 : index
    %63 = vector.load %arg17[%c0_48, %c0_49, %c0_50] : memref<2x128x512xbf16, #tpu.memory_space<vmem>>, vector<1x128x512xbf16>
    %64 = vector.shape_cast %63 : vector<1x128x512xbf16> to vector<128x512xbf16>
    %c0_51 = arith.constant 0 : index
    %c0_52 = arith.constant 0 : index
    %c0_53 = arith.constant 0 : index
    %65 = vector.load %arg18[%c0_51, %c0_52, %c0_53] : memref<2x1x512xf32, #tpu.memory_space<vmem>>, vector<1x1x512xf32>
    %66 = vector.shape_cast %65 : vector<1x1x512xf32> to vector<1x512xf32>
    %c0_54 = arith.constant 0 : index
    %c0_55 = arith.constant 0 : index
    %c0_56 = arith.constant 0 : index
    %67 = vector.load %arg19[%c0_54, %c0_55, %c0_56] : memref<2x512x128xbf16, #tpu.memory_space<vmem>>, vector<1x512x128xbf16>
    %68 = vector.shape_cast %67 : vector<1x512x128xbf16> to vector<512x128xbf16>
    %c0_57 = arith.constant 0 : index
    %c0_58 = arith.constant 0 : index
    %c0_59 = arith.constant 0 : index
    %69 = vector.load %arg20[%c0_57, %c0_58, %c0_59] : memref<2x1x128xf32, #tpu.memory_space<vmem>>, vector<1x1x128xf32>
    %70 = vector.shape_cast %69 : vector<1x1x128xf32> to vector<1x128xf32>
    %cst_60 = arith.constant dense<0.000000e+00> : vector<1x8xf32>
    %71 = vector.multi_reduction <add>, %46, %cst_60 [2] : vector<1x8x128xf32> to vector<1x8xf32>
    %72 = vector.shape_cast %71 : vector<1x8xf32> to vector<1x8x1xf32>
    %cst_61 = arith.constant 1.280000e+02 : f32
    %73 = vector.broadcast %cst_61 : f32 to vector<1x8x1xf32>
    %74 = arith.divf %72, %73 : vector<1x8x1xf32>
    %75 = vector.broadcast %74 : vector<1x8x1xf32> to vector<1x8x128xf32>
    %76 = arith.subf %46, %75 : vector<1x8x128xf32>
    %77 = arith.mulf %76, %76 : vector<1x8x128xf32>
    %cst_62 = arith.constant dense<0.000000e+00> : vector<1x8xf32>
    %78 = vector.multi_reduction <add>, %77, %cst_62 [2] : vector<1x8x128xf32> to vector<1x8xf32>
    %79 = vector.shape_cast %78 : vector<1x8xf32> to vector<1x8x1xf32>
    %cst_63 = arith.constant 1.280000e+02 : f32
    %80 = vector.broadcast %cst_63 : f32 to vector<1x8x1xf32>
    %81 = arith.divf %79, %80 : vector<1x8x1xf32>
    %82 = vector.broadcast %74 : vector<1x8x1xf32> to vector<1x8x128xf32>
    %83 = arith.subf %46, %82 : vector<1x8x128xf32>
    %cst_64 = arith.constant 9.99999974E-6 : f32
    %84 = vector.broadcast %cst_64 : f32 to vector<1x8x1xf32>
    %85 = arith.addf %81, %84 : vector<1x8x1xf32>
    %86 = math.rsqrt %85 : vector<1x8x1xf32>
    %87 = vector.broadcast %86 : vector<1x8x1xf32> to vector<1x8x128xf32>
    %88 = arith.mulf %83, %87 : vector<1x8x128xf32>
    %89 = vector.shape_cast %48 : vector<1x128xf32> to vector<1x1x128xf32>
    %90 = vector.broadcast %89 : vector<1x1x128xf32> to vector<1x8x128xf32>
    %91 = arith.mulf %88, %90 : vector<1x8x128xf32>
    %92 = vector.shape_cast %50 : vector<1x128xf32> to vector<1x1x128xf32>
    %93 = vector.broadcast %92 : vector<1x1x128xf32> to vector<1x8x128xf32>
    %94 = arith.addf %91, %93 : vector<1x8x128xf32>
    %95 = vector.shape_cast %94 : vector<1x8x128xf32> to vector<8x128xf32>
    %96 = arith.truncf %95 : vector<8x128xf32> to vector<8x128xbf16>
    %cst_65 = arith.constant dense<0.000000e+00> : vector<8x384xf32>
    %97 = tpu.matmul %96, %52, %cst_65 {dimension_numbers = #tpu.dot_dimension_numbers<[1], [0], [0], [1], [0, 0, 1, 1], [], []>} : vector<8x128xbf16>, vector<128x384xbf16>, vector<8x384xf32> -> vector<8x384xf32>
    %98 = vector.broadcast %54 : vector<1x384xf32> to vector<8x384xf32>
    %99 = arith.addf %97, %98 : vector<8x384xf32>
    %100 = vector.shape_cast %99 : vector<8x384xf32> to vector<1x8x384xf32>
    %101 = vector.extract_strided_slice %100 {offsets = [0, 0, 0], sizes = [1, 8, 128], strides = [1, 1, 1]} : vector<1x8x384xf32> to vector<1x8x128xf32>
    %cst_66 = arith.constant 0.176776692 : f32
    %102 = vector.broadcast %cst_66 : f32 to vector<1x8x128xf32>
    %103 = arith.mulf %101, %102 : vector<1x8x128xf32>
    %104 = vector.extract_strided_slice %100 {offsets = [0, 0, 128], sizes = [1, 8, 128], strides = [1, 1, 1]} : vector<1x8x384xf32> to vector<1x8x128xf32>
    %105 = vector.extract_strided_slice %100 {offsets = [0, 0, 256], sizes = [1, 8, 128], strides = [1, 1, 1]} : vector<1x8x384xf32> to vector<1x8x128xf32>
    %106 = vector.extract_strided_slice %103 {offsets = [0, 0, 0], sizes = [1, 8, 32], strides = [1, 1, 1]} : vector<1x8x128xf32> to vector<1x8x32xf32>
    %107 = vector.extract_strided_slice %103 {offsets = [0, 0, 32], sizes = [1, 8, 32], strides = [1, 1, 1]} : vector<1x8x128xf32> to vector<1x8x32xf32>
    %108 = vector.extract_strided_slice %103 {offsets = [0, 0, 64], sizes = [1, 8, 32], strides = [1, 1, 1]} : vector<1x8x128xf32> to vector<1x8x32xf32>
    %109 = vector.extract_strided_slice %103 {offsets = [0, 0, 96], sizes = [1, 8, 32], strides = [1, 1, 1]} : vector<1x8x128xf32> to vector<1x8x32xf32>
    %110 = vector.shape_cast %106 : vector<1x8x32xf32> to vector<1x1x8x32xf32>
    %111 = vector.shape_cast %107 : vector<1x8x32xf32> to vector<1x1x8x32xf32>
    %112 = vector.shape_cast %108 : vector<1x8x32xf32> to vector<1x1x8x32xf32>
    %113 = vector.shape_cast %109 : vector<1x8x32xf32> to vector<1x1x8x32xf32>
    %114 = tpu.concatenate %110, %111, %112, %113 in 0 : vector<1x1x8x32xf32>, vector<1x1x8x32xf32>, vector<1x1x8x32xf32>, vector<1x1x8x32xf32> -> vector<4x1x8x32xf32>
    %115 = vector.shape_cast %114 : vector<4x1x8x32xf32> to vector<4x8x32xf32>
    %116 = arith.truncf %115 : vector<4x8x32xf32> to vector<4x8x32xbf16>
    %117 = vector.extract_strided_slice %104 {offsets = [0, 0, 0], sizes = [1, 8, 32], strides = [1, 1, 1]} : vector<1x8x128xf32> to vector<1x8x32xf32>
    %118 = vector.extract_strided_slice %104 {offsets = [0, 0, 32], sizes = [1, 8, 32], strides = [1, 1, 1]} : vector<1x8x128xf32> to vector<1x8x32xf32>
    %119 = vector.extract_strided_slice %104 {offsets = [0, 0, 64], sizes = [1, 8, 32], strides = [1, 1, 1]} : vector<1x8x128xf32> to vector<1x8x32xf32>
    %120 = vector.extract_strided_slice %104 {offsets = [0, 0, 96], sizes = [1, 8, 32], strides = [1, 1, 1]} : vector<1x8x128xf32> to vector<1x8x32xf32>
    %121 = vector.shape_cast %117 : vector<1x8x32xf32> to vector<1x1x8x32xf32>
    %122 = vector.shape_cast %118 : vector<1x8x32xf32> to vector<1x1x8x32xf32>
    %123 = vector.shape_cast %119 : vector<1x8x32xf32> to vector<1x1x8x32xf32>
    %124 = vector.shape_cast %120 : vector<1x8x32xf32> to vector<1x1x8x32xf32>
    %125 = tpu.concatenate %121, %122, %123, %124 in 0 : vector<1x1x8x32xf32>, vector<1x1x8x32xf32>, vector<1x1x8x32xf32>, vector<1x1x8x32xf32> -> vector<4x1x8x32xf32>
    %126 = vector.shape_cast %125 : vector<4x1x8x32xf32> to vector<4x8x32xf32>
    %127 = arith.truncf %126 : vector<4x8x32xf32> to vector<4x8x32xbf16>
    %128 = vector.extract_strided_slice %105 {offsets = [0, 0, 0], sizes = [1, 8, 32], strides = [1, 1, 1]} : vector<1x8x128xf32> to vector<1x8x32xf32>
    %129 = vector.extract_strided_slice %105 {offsets = [0, 0, 32], sizes = [1, 8, 32], strides = [1, 1, 1]} : vector<1x8x128xf32> to vector<1x8x32xf32>
    %130 = vector.extract_strided_slice %105 {offsets = [0, 0, 64], sizes = [1, 8, 32], strides = [1, 1, 1]} : vector<1x8x128xf32> to vector<1x8x32xf32>
    %131 = vector.extract_strided_slice %105 {offsets = [0, 0, 96], sizes = [1, 8, 32], strides = [1, 1, 1]} : vector<1x8x128xf32> to vector<1x8x32xf32>
    %132 = vector.shape_cast %128 : vector<1x8x32xf32> to vector<1x1x8x32xf32>
    %133 = vector.shape_cast %129 : vector<1x8x32xf32> to vector<1x1x8x32xf32>
    %134 = vector.shape_cast %130 : vector<1x8x32xf32> to vector<1x1x8x32xf32>
    %135 = vector.shape_cast %131 : vector<1x8x32xf32> to vector<1x1x8x32xf32>
    %136 = tpu.concatenate %132, %133, %134, %135 in 0 : vector<1x1x8x32xf32>, vector<1x1x8x32xf32>, vector<1x1x8x32xf32>, vector<1x1x8x32xf32> -> vector<4x1x8x32xf32>
    %137 = vector.shape_cast %136 : vector<4x1x8x32xf32> to vector<4x8x32xf32>
    %138 = arith.truncf %137 : vector<4x8x32xf32> to vector<4x8x32xbf16>
    "tpu.trace_start"() <{level = 10 : i32, message = "zqd,zkd->zqk"}> : () -> ()
    %cst_67 = arith.constant dense<0.000000e+00> : vector<4x8x8xf32>
    %139 = tpu.matmul %116, %127, %cst_67 {dimension_numbers = #tpu.dot_dimension_numbers<[2], [2], [1], [1], [0, 0, 0, 1, 1, 1], [0], [0]>} : vector<4x8x32xbf16>, vector<4x8x32xbf16>, vector<4x8x8xf32> -> vector<4x8x8xf32>
    "tpu.trace_stop"() : () -> ()
    %cst_68 = arith.constant dense<0xFF800000> : vector<4x8xf32>
    %140 = vector.multi_reduction <maximumf>, %139, %cst_68 [2] : vector<4x8x8xf32> to vector<4x8xf32>
    %141 = vector.shape_cast %140 : vector<4x8xf32> to vector<4x8x1xf32>
    %142 = vector.broadcast %141 : vector<4x8x1xf32> to vector<4x8x8xf32>
    %143 = arith.subf %139, %142 : vector<4x8x8xf32>
    %144 = math.exp %143 : vector<4x8x8xf32>
    %cst_69 = arith.constant dense<0.000000e+00> : vector<4x8xf32>
    %145 = vector.multi_reduction <add>, %144, %cst_69 [2] : vector<4x8x8xf32> to vector<4x8xf32>
    %146 = vector.shape_cast %145 : vector<4x8xf32> to vector<4x8x1xf32>
    %147 = tpu.reciprocal %146 {approx = true} : vector<4x8x1xf32> -> vector<4x8x1xf32>
    %148 = vector.broadcast %147 : vector<4x8x1xf32> to vector<4x8x8xf32>
    %149 = arith.mulf %144, %148 : vector<4x8x8xf32>
    %150 = arith.truncf %149 : vector<4x8x8xf32> to vector<4x8x8xbf16>
    "tpu.trace_start"() <{level = 10 : i32, message = "zqk,zkd->zqd"}> : () -> ()
    %cst_70 = arith.constant dense<0.000000e+00> : vector<4x8x32xf32>
    %151 = tpu.matmul %150, %138, %cst_70 {dimension_numbers = #tpu.dot_dimension_numbers<[2], [1], [1], [2], [0, 0, 0, 1, 1, 2], [0], [0]>} : vector<4x8x8xbf16>, vector<4x8x32xbf16>, vector<4x8x32xf32> -> vector<4x8x32xf32>
    "tpu.trace_stop"() : () -> ()
    %152 = vector.shape_cast %151 : vector<4x8x32xf32> to vector<4x1x8x32xf32>
    %153 = vector.extract_strided_slice %152 {offsets = [0, 0, 0, 0], sizes = [1, 1, 8, 32], strides = [1, 1, 1, 1]} : vector<4x1x8x32xf32> to vector<1x1x8x32xf32>
    %154 = vector.shape_cast %153 : vector<1x1x8x32xf32> to vector<1x8x32xf32>
    %155 = vector.extract_strided_slice %152 {offsets = [1, 0, 0, 0], sizes = [1, 1, 8, 32], strides = [1, 1, 1, 1]} : vector<4x1x8x32xf32> to vector<1x1x8x32xf32>
    %156 = vector.shape_cast %155 : vector<1x1x8x32xf32> to vector<1x8x32xf32>
    %157 = vector.extract_strided_slice %152 {offsets = [2, 0, 0, 0], sizes = [1, 1, 8, 32], strides = [1, 1, 1, 1]} : vector<4x1x8x32xf32> to vector<1x1x8x32xf32>
    %158 = vector.shape_cast %157 : vector<1x1x8x32xf32> to vector<1x8x32xf32>
    %159 = vector.extract_strided_slice %152 {offsets = [3, 0, 0, 0], sizes = [1, 1, 8, 32], strides = [1, 1, 1, 1]} : vector<4x1x8x32xf32> to vector<1x1x8x32xf32>
    %160 = vector.shape_cast %159 : vector<1x1x8x32xf32> to vector<1x8x32xf32>
    %161 = tpu.concatenate %154, %156, %158, %160 in 2 : vector<1x8x32xf32>, vector<1x8x32xf32>, vector<1x8x32xf32>, vector<1x8x32xf32> -> vector<1x8x128xf32>
    %162 = vector.shape_cast %161 : vector<1x8x128xf32> to vector<8x128xf32>
    %163 = arith.truncf %162 : vector<8x128xf32> to vector<8x128xbf16>
    %cst_71 = arith.constant dense<0.000000e+00> : vector<8x128xf32>
    %164 = tpu.matmul %163, %56, %cst_71 {dimension_numbers = #tpu.dot_dimension_numbers<[1], [0], [0], [1], [0, 0, 1, 1], [], []>} : vector<8x128xbf16>, vector<128x128xbf16>, vector<8x128xf32> -> vector<8x128xf32>
    %165 = vector.broadcast %58 : vector<1x128xf32> to vector<8x128xf32>
    %166 = arith.addf %164, %165 : vector<8x128xf32>
    %167 = vector.shape_cast %166 : vector<8x128xf32> to vector<1x8x128xf32>
    %168 = arith.addf %46, %167 : vector<1x8x128xf32>
    %cst_72 = arith.constant dense<0.000000e+00> : vector<1x8xf32>
    %169 = vector.multi_reduction <add>, %168, %cst_72 [2] : vector<1x8x128xf32> to vector<1x8xf32>
    %170 = vector.shape_cast %169 : vector<1x8xf32> to vector<1x8x1xf32>
    %cst_73 = arith.constant 1.280000e+02 : f32
    %171 = vector.broadcast %cst_73 : f32 to vector<1x8x1xf32>
    %172 = arith.divf %170, %171 : vector<1x8x1xf32>
    %173 = vector.broadcast %172 : vector<1x8x1xf32> to vector<1x8x128xf32>
    %174 = arith.subf %168, %173 : vector<1x8x128xf32>
    %175 = arith.mulf %174, %174 : vector<1x8x128xf32>
    %cst_74 = arith.constant dense<0.000000e+00> : vector<1x8xf32>
    %176 = vector.multi_reduction <add>, %175, %cst_74 [2] : vector<1x8x128xf32> to vector<1x8xf32>
    %177 = vector.shape_cast %176 : vector<1x8xf32> to vector<1x8x1xf32>
    %cst_75 = arith.constant 1.280000e+02 : f32
    %178 = vector.broadcast %cst_75 : f32 to vector<1x8x1xf32>
    %179 = arith.divf %177, %178 : vector<1x8x1xf32>
    %180 = vector.broadcast %172 : vector<1x8x1xf32> to vector<1x8x128xf32>
    %181 = arith.subf %168, %180 : vector<1x8x128xf32>
    %cst_76 = arith.constant 9.99999974E-6 : f32
    %182 = vector.broadcast %cst_76 : f32 to vector<1x8x1xf32>
    %183 = arith.addf %179, %182 : vector<1x8x1xf32>
    %184 = math.rsqrt %183 : vector<1x8x1xf32>
    %185 = vector.broadcast %184 : vector<1x8x1xf32> to vector<1x8x128xf32>
    %186 = arith.mulf %181, %185 : vector<1x8x128xf32>
    %187 = vector.shape_cast %60 : vector<1x128xf32> to vector<1x1x128xf32>
    %188 = vector.broadcast %187 : vector<1x1x128xf32> to vector<1x8x128xf32>
    %189 = arith.mulf %186, %188 : vector<1x8x128xf32>
    %190 = vector.shape_cast %62 : vector<1x128xf32> to vector<1x1x128xf32>
    %191 = vector.broadcast %190 : vector<1x1x128xf32> to vector<1x8x128xf32>
    %192 = arith.addf %189, %191 : vector<1x8x128xf32>
    %193 = vector.shape_cast %192 : vector<1x8x128xf32> to vector<8x128xf32>
    %194 = arith.truncf %193 : vector<8x128xf32> to vector<8x128xbf16>
    %cst_77 = arith.constant dense<0.000000e+00> : vector<8x512xf32>
    %195 = tpu.matmul %194, %64, %cst_77 {dimension_numbers = #tpu.dot_dimension_numbers<[1], [0], [0], [1], [0, 0, 1, 1], [], []>} : vector<8x128xbf16>, vector<128x512xbf16>, vector<8x512xf32> -> vector<8x512xf32>
    %196 = vector.broadcast %66 : vector<1x512xf32> to vector<8x512xf32>
    %197 = arith.addf %195, %196 : vector<8x512xf32>
    %cst_78 = arith.constant 1.702000e+00 : f32
    %198 = vector.broadcast %cst_78 : f32 to vector<8x512xf32>
    %199 = arith.mulf %198, %197 : vector<8x512xf32>
    %200 = arith.negf %199 : vector<8x512xf32>
    %201 = math.exp %200 : vector<8x512xf32>
    %cst_79 = arith.constant 1.000000e+00 : f32
    %202 = vector.broadcast %cst_79 : f32 to vector<8x512xf32>
    %203 = arith.addf %202, %201 : vector<8x512xf32>
    %204 = arith.divf %202, %203 : vector<8x512xf32>
    %205 = arith.mulf %197, %204 : vector<8x512xf32>
    %206 = arith.truncf %205 : vector<8x512xf32> to vector<8x512xbf16>
    %cst_80 = arith.constant dense<0.000000e+00> : vector<8x128xf32>
    %207 = tpu.matmul %206, %68, %cst_80 {dimension_numbers = #tpu.dot_dimension_numbers<[1], [0], [0], [1], [0, 0, 1, 1], [], []>} : vector<8x512xbf16>, vector<512x128xbf16>, vector<8x128xf32> -> vector<8x128xf32>
    %208 = vector.broadcast %70 : vector<1x128xf32> to vector<8x128xf32>
    %209 = arith.addf %207, %208 : vector<8x128xf32>
    %210 = vector.shape_cast %209 : vector<8x128xf32> to vector<1x8x128xf32>
    %211 = arith.addf %168, %210 : vector<1x8x128xf32>
    %c1 = arith.constant 1 : index
    %c0_81 = arith.constant 0 : index
    %c0_82 = arith.constant 0 : index
    %212 = vector.load %arg9[%c1, %c0_81, %c0_82] : memref<2x1x128xf32, #tpu.memory_space<vmem>>, vector<1x1x128xf32>
    %213 = vector.shape_cast %212 : vector<1x1x128xf32> to vector<1x128xf32>
    %c1_83 = arith.constant 1 : index
    %c0_84 = arith.constant 0 : index
    %c0_85 = arith.constant 0 : index
    %214 = vector.load %arg10[%c1_83, %c0_84, %c0_85] : memref<2x1x128xf32, #tpu.memory_space<vmem>>, vector<1x1x128xf32>
    %215 = vector.shape_cast %214 : vector<1x1x128xf32> to vector<1x128xf32>
    %c1_86 = arith.constant 1 : index
    %c0_87 = arith.constant 0 : index
    %c0_88 = arith.constant 0 : index
    %216 = vector.load %arg11[%c1_86, %c0_87, %c0_88] : memref<2x128x384xbf16, #tpu.memory_space<vmem>>, vector<1x128x384xbf16>
    %217 = vector.shape_cast %216 : vector<1x128x384xbf16> to vector<128x384xbf16>
    %c1_89 = arith.constant 1 : index
    %c0_90 = arith.constant 0 : index
    %c0_91 = arith.constant 0 : index
    %218 = vector.load %arg12[%c1_89, %c0_90, %c0_91] : memref<2x1x384xf32, #tpu.memory_space<vmem>>, vector<1x1x384xf32>
    %219 = vector.shape_cast %218 : vector<1x1x384xf32> to vector<1x384xf32>
    %c1_92 = arith.constant 1 : index
    %c0_93 = arith.constant 0 : index
    %c0_94 = arith.constant 0 : index
    %220 = vector.load %arg13[%c1_92, %c0_93, %c0_94] : memref<2x128x128xbf16, #tpu.memory_space<vmem>>, vector<1x128x128xbf16>
    %221 = vector.shape_cast %220 : vector<1x128x128xbf16> to vector<128x128xbf16>
    %c1_95 = arith.constant 1 : index
    %c0_96 = arith.constant 0 : index
    %c0_97 = arith.constant 0 : index
    %222 = vector.load %arg14[%c1_95, %c0_96, %c0_97] : memref<2x1x128xf32, #tpu.memory_space<vmem>>, vector<1x1x128xf32>
    %223 = vector.shape_cast %222 : vector<1x1x128xf32> to vector<1x128xf32>
    %c1_98 = arith.constant 1 : index
    %c0_99 = arith.constant 0 : index
    %c0_100 = arith.constant 0 : index
    %224 = vector.load %arg15[%c1_98, %c0_99, %c0_100] : memref<2x1x128xf32, #tpu.memory_space<vmem>>, vector<1x1x128xf32>
    %225 = vector.shape_cast %224 : vector<1x1x128xf32> to vector<1x128xf32>
    %c1_101 = arith.constant 1 : index
    %c0_102 = arith.constant 0 : index
    %c0_103 = arith.constant 0 : index
    %226 = vector.load %arg16[%c1_101, %c0_102, %c0_103] : memref<2x1x128xf32, #tpu.memory_space<vmem>>, vector<1x1x128xf32>
    %227 = vector.shape_cast %226 : vector<1x1x128xf32> to vector<1x128xf32>
    %c1_104 = arith.constant 1 : index
    %c0_105 = arith.constant 0 : index
    %c0_106 = arith.constant 0 : index
    %228 = vector.load %arg17[%c1_104, %c0_105, %c0_106] : memref<2x128x512xbf16, #tpu.memory_space<vmem>>, vector<1x128x512xbf16>
    %229 = vector.shape_cast %228 : vector<1x128x512xbf16> to vector<128x512xbf16>
    %c1_107 = arith.constant 1 : index
    %c0_108 = arith.constant 0 : index
    %c0_109 = arith.constant 0 : index
    %230 = vector.load %arg18[%c1_107, %c0_108, %c0_109] : memref<2x1x512xf32, #tpu.memory_space<vmem>>, vector<1x1x512xf32>
    %231 = vector.shape_cast %230 : vector<1x1x512xf32> to vector<1x512xf32>
    %c1_110 = arith.constant 1 : index
    %c0_111 = arith.constant 0 : index
    %c0_112 = arith.constant 0 : index
    %232 = vector.load %arg19[%c1_110, %c0_111, %c0_112] : memref<2x512x128xbf16, #tpu.memory_space<vmem>>, vector<1x512x128xbf16>
    %233 = vector.shape_cast %232 : vector<1x512x128xbf16> to vector<512x128xbf16>
    %c1_113 = arith.constant 1 : index
    %c0_114 = arith.constant 0 : index
    %c0_115 = arith.constant 0 : index
    %234 = vector.load %arg20[%c1_113, %c0_114, %c0_115] : memref<2x1x128xf32, #tpu.memory_space<vmem>>, vector<1x1x128xf32>
    %235 = vector.shape_cast %234 : vector<1x1x128xf32> to vector<1x128xf32>
    %cst_116 = arith.constant dense<0.000000e+00> : vector<1x8xf32>
    %236 = vector.multi_reduction <add>, %211, %cst_116 [2] : vector<1x8x128xf32> to vector<1x8xf32>
    %237 = vector.shape_cast %236 : vector<1x8xf32> to vector<1x8x1xf32>
    %cst_117 = arith.constant 1.280000e+02 : f32
    %238 = vector.broadcast %cst_117 : f32 to vector<1x8x1xf32>
    %239 = arith.divf %237, %238 : vector<1x8x1xf32>
    %240 = vector.broadcast %239 : vector<1x8x1xf32> to vector<1x8x128xf32>
    %241 = arith.subf %211, %240 : vector<1x8x128xf32>
    %242 = arith.mulf %241, %241 : vector<1x8x128xf32>
    %cst_118 = arith.constant dense<0.000000e+00> : vector<1x8xf32>
    %243 = vector.multi_reduction <add>, %242, %cst_118 [2] : vector<1x8x128xf32> to vector<1x8xf32>
    %244 = vector.shape_cast %243 : vector<1x8xf32> to vector<1x8x1xf32>
    %cst_119 = arith.constant 1.280000e+02 : f32
    %245 = vector.broadcast %cst_119 : f32 to vector<1x8x1xf32>
    %246 = arith.divf %244, %245 : vector<1x8x1xf32>
    %247 = vector.broadcast %239 : vector<1x8x1xf32> to vector<1x8x128xf32>
    %248 = arith.subf %211, %247 : vector<1x8x128xf32>
    %cst_120 = arith.constant 9.99999974E-6 : f32
    %249 = vector.broadcast %cst_120 : f32 to vector<1x8x1xf32>
    %250 = arith.addf %246, %249 : vector<1x8x1xf32>
    %251 = math.rsqrt %250 : vector<1x8x1xf32>
    %252 = vector.broadcast %251 : vector<1x8x1xf32> to vector<1x8x128xf32>
    %253 = arith.mulf %248, %252 : vector<1x8x128xf32>
    %254 = vector.shape_cast %213 : vector<1x128xf32> to vector<1x1x128xf32>
    %255 = vector.broadcast %254 : vector<1x1x128xf32> to vector<1x8x128xf32>
    %256 = arith.mulf %253, %255 : vector<1x8x128xf32>
    %257 = vector.shape_cast %215 : vector<1x128xf32> to vector<1x1x128xf32>
    %258 = vector.broadcast %257 : vector<1x1x128xf32> to vector<1x8x128xf32>
    %259 = arith.addf %256, %258 : vector<1x8x128xf32>
    %260 = vector.shape_cast %259 : vector<1x8x128xf32> to vector<8x128xf32>
    %261 = arith.truncf %260 : vector<8x128xf32> to vector<8x128xbf16>
    %cst_121 = arith.constant dense<0.000000e+00> : vector<8x384xf32>
    %262 = tpu.matmul %261, %217, %cst_121 {dimension_numbers = #tpu.dot_dimension_numbers<[1], [0], [0], [1], [0, 0, 1, 1], [], []>} : vector<8x128xbf16>, vector<128x384xbf16>, vector<8x384xf32> -> vector<8x384xf32>
    %263 = vector.broadcast %219 : vector<1x384xf32> to vector<8x384xf32>
    %264 = arith.addf %262, %263 : vector<8x384xf32>
    %265 = vector.shape_cast %264 : vector<8x384xf32> to vector<1x8x384xf32>
    %266 = vector.extract_strided_slice %265 {offsets = [0, 0, 0], sizes = [1, 8, 128], strides = [1, 1, 1]} : vector<1x8x384xf32> to vector<1x8x128xf32>
    %267 = vector.extract_strided_slice %266 {offsets = [0, 6, 0], sizes = [1, 2, 128], strides = [1, 1, 1]} : vector<1x8x128xf32> to vector<1x2x128xf32>
    %cst_122 = arith.constant 0.176776692 : f32
    %268 = vector.broadcast %cst_122 : f32 to vector<1x2x128xf32>
    %269 = arith.mulf %267, %268 : vector<1x2x128xf32>
    %270 = vector.extract_strided_slice %265 {offsets = [0, 0, 128], sizes = [1, 8, 128], strides = [1, 1, 1]} : vector<1x8x384xf32> to vector<1x8x128xf32>
    %271 = vector.extract_strided_slice %265 {offsets = [0, 0, 256], sizes = [1, 8, 128], strides = [1, 1, 1]} : vector<1x8x384xf32> to vector<1x8x128xf32>
    %272 = vector.extract_strided_slice %269 {offsets = [0, 0, 0], sizes = [1, 2, 32], strides = [1, 1, 1]} : vector<1x2x128xf32> to vector<1x2x32xf32>
    %273 = vector.extract_strided_slice %269 {offsets = [0, 0, 32], sizes = [1, 2, 32], strides = [1, 1, 1]} : vector<1x2x128xf32> to vector<1x2x32xf32>
    %274 = vector.extract_strided_slice %269 {offsets = [0, 0, 64], sizes = [1, 2, 32], strides = [1, 1, 1]} : vector<1x2x128xf32> to vector<1x2x32xf32>
    %275 = vector.extract_strided_slice %269 {offsets = [0, 0, 96], sizes = [1, 2, 32], strides = [1, 1, 1]} : vector<1x2x128xf32> to vector<1x2x32xf32>
    %276 = vector.shape_cast %272 : vector<1x2x32xf32> to vector<1x1x2x32xf32>
    %277 = vector.shape_cast %273 : vector<1x2x32xf32> to vector<1x1x2x32xf32>
    %278 = vector.shape_cast %274 : vector<1x2x32xf32> to vector<1x1x2x32xf32>
    %279 = vector.shape_cast %275 : vector<1x2x32xf32> to vector<1x1x2x32xf32>
    %280 = tpu.concatenate %276, %277, %278, %279 in 0 : vector<1x1x2x32xf32>, vector<1x1x2x32xf32>, vector<1x1x2x32xf32>, vector<1x1x2x32xf32> -> vector<4x1x2x32xf32>
    %281 = vector.shape_cast %280 : vector<4x1x2x32xf32> to vector<4x2x32xf32>
    %282 = arith.truncf %281 : vector<4x2x32xf32> to vector<4x2x32xbf16>
    %283 = vector.extract_strided_slice %270 {offsets = [0, 0, 0], sizes = [1, 8, 32], strides = [1, 1, 1]} : vector<1x8x128xf32> to vector<1x8x32xf32>
    %284 = vector.extract_strided_slice %270 {offsets = [0, 0, 32], sizes = [1, 8, 32], strides = [1, 1, 1]} : vector<1x8x128xf32> to vector<1x8x32xf32>
    %285 = vector.extract_strided_slice %270 {offsets = [0, 0, 64], sizes = [1, 8, 32], strides = [1, 1, 1]} : vector<1x8x128xf32> to vector<1x8x32xf32>
    %286 = vector.extract_strided_slice %270 {offsets = [0, 0, 96], sizes = [1, 8, 32], strides = [1, 1, 1]} : vector<1x8x128xf32> to vector<1x8x32xf32>
    %287 = vector.shape_cast %283 : vector<1x8x32xf32> to vector<1x1x8x32xf32>
    %288 = vector.shape_cast %284 : vector<1x8x32xf32> to vector<1x1x8x32xf32>
    %289 = vector.shape_cast %285 : vector<1x8x32xf32> to vector<1x1x8x32xf32>
    %290 = vector.shape_cast %286 : vector<1x8x32xf32> to vector<1x1x8x32xf32>
    %291 = tpu.concatenate %287, %288, %289, %290 in 0 : vector<1x1x8x32xf32>, vector<1x1x8x32xf32>, vector<1x1x8x32xf32>, vector<1x1x8x32xf32> -> vector<4x1x8x32xf32>
    %292 = vector.shape_cast %291 : vector<4x1x8x32xf32> to vector<4x8x32xf32>
    %293 = arith.truncf %292 : vector<4x8x32xf32> to vector<4x8x32xbf16>
    %294 = vector.extract_strided_slice %271 {offsets = [0, 0, 0], sizes = [1, 8, 32], strides = [1, 1, 1]} : vector<1x8x128xf32> to vector<1x8x32xf32>
    %295 = vector.extract_strided_slice %271 {offsets = [0, 0, 32], sizes = [1, 8, 32], strides = [1, 1, 1]} : vector<1x8x128xf32> to vector<1x8x32xf32>
    %296 = vector.extract_strided_slice %271 {offsets = [0, 0, 64], sizes = [1, 8, 32], strides = [1, 1, 1]} : vector<1x8x128xf32> to vector<1x8x32xf32>
    %297 = vector.extract_strided_slice %271 {offsets = [0, 0, 96], sizes = [1, 8, 32], strides = [1, 1, 1]} : vector<1x8x128xf32> to vector<1x8x32xf32>
    %298 = vector.shape_cast %294 : vector<1x8x32xf32> to vector<1x1x8x32xf32>
    %299 = vector.shape_cast %295 : vector<1x8x32xf32> to vector<1x1x8x32xf32>
    %300 = vector.shape_cast %296 : vector<1x8x32xf32> to vector<1x1x8x32xf32>
    %301 = vector.shape_cast %297 : vector<1x8x32xf32> to vector<1x1x8x32xf32>
    %302 = tpu.concatenate %298, %299, %300, %301 in 0 : vector<1x1x8x32xf32>, vector<1x1x8x32xf32>, vector<1x1x8x32xf32>, vector<1x1x8x32xf32> -> vector<4x1x8x32xf32>
    %303 = vector.shape_cast %302 : vector<4x1x8x32xf32> to vector<4x8x32xf32>
    %304 = arith.truncf %303 : vector<4x8x32xf32> to vector<4x8x32xbf16>
    "tpu.trace_start"() <{level = 10 : i32, message = "zqd,zkd->zqk"}> : () -> ()
    %cst_123 = arith.constant dense<0.000000e+00> : vector<4x2x8xf32>
    %305 = tpu.matmul %282, %293, %cst_123 {dimension_numbers = #tpu.dot_dimension_numbers<[2], [2], [1], [1], [0, 0, 0, 1, 1, 1], [0], [0]>} : vector<4x2x32xbf16>, vector<4x8x32xbf16>, vector<4x2x8xf32> -> vector<4x2x8xf32>
    "tpu.trace_stop"() : () -> ()
    %cst_124 = arith.constant dense<0xFF800000> : vector<4x2xf32>
    %306 = vector.multi_reduction <maximumf>, %305, %cst_124 [2] : vector<4x2x8xf32> to vector<4x2xf32>
    %307 = vector.shape_cast %306 : vector<4x2xf32> to vector<4x2x1xf32>
    %308 = vector.broadcast %307 : vector<4x2x1xf32> to vector<4x2x8xf32>
    %309 = arith.subf %305, %308 : vector<4x2x8xf32>
    %310 = math.exp %309 : vector<4x2x8xf32>
    %cst_125 = arith.constant dense<0.000000e+00> : vector<4x2xf32>
    %311 = vector.multi_reduction <add>, %310, %cst_125 [2] : vector<4x2x8xf32> to vector<4x2xf32>
    %312 = vector.shape_cast %311 : vector<4x2xf32> to vector<4x2x1xf32>
    %313 = tpu.reciprocal %312 {approx = true} : vector<4x2x1xf32> -> vector<4x2x1xf32>
    %314 = vector.broadcast %313 : vector<4x2x1xf32> to vector<4x2x8xf32>
    %315 = arith.mulf %310, %314 : vector<4x2x8xf32>
    %316 = arith.truncf %315 : vector<4x2x8xf32> to vector<4x2x8xbf16>
    "tpu.trace_start"() <{level = 10 : i32, message = "zqk,zkd->zqd"}> : () -> ()
    %cst_126 = arith.constant dense<0.000000e+00> : vector<4x2x32xf32>
    %317 = tpu.matmul %316, %304, %cst_126 {dimension_numbers = #tpu.dot_dimension_numbers<[2], [1], [1], [2], [0, 0, 0, 1, 1, 2], [0], [0]>} : vector<4x2x8xbf16>, vector<4x8x32xbf16>, vector<4x2x32xf32> -> vector<4x2x32xf32>
    "tpu.trace_stop"() : () -> ()
    %318 = vector.shape_cast %317 : vector<4x2x32xf32> to vector<4x1x2x32xf32>
    %319 = vector.extract_strided_slice %318 {offsets = [0, 0, 0, 0], sizes = [1, 1, 2, 32], strides = [1, 1, 1, 1]} : vector<4x1x2x32xf32> to vector<1x1x2x32xf32>
    %320 = vector.shape_cast %319 : vector<1x1x2x32xf32> to vector<1x2x32xf32>
    %321 = vector.extract_strided_slice %318 {offsets = [1, 0, 0, 0], sizes = [1, 1, 2, 32], strides = [1, 1, 1, 1]} : vector<4x1x2x32xf32> to vector<1x1x2x32xf32>
    %322 = vector.shape_cast %321 : vector<1x1x2x32xf32> to vector<1x2x32xf32>
    %323 = vector.extract_strided_slice %318 {offsets = [2, 0, 0, 0], sizes = [1, 1, 2, 32], strides = [1, 1, 1, 1]} : vector<4x1x2x32xf32> to vector<1x1x2x32xf32>
    %324 = vector.shape_cast %323 : vector<1x1x2x32xf32> to vector<1x2x32xf32>
    %325 = vector.extract_strided_slice %318 {offsets = [3, 0, 0, 0], sizes = [1, 1, 2, 32], strides = [1, 1, 1, 1]} : vector<4x1x2x32xf32> to vector<1x1x2x32xf32>
    %326 = vector.shape_cast %325 : vector<1x1x2x32xf32> to vector<1x2x32xf32>
    %327 = tpu.concatenate %320, %322, %324, %326 in 2 : vector<1x2x32xf32>, vector<1x2x32xf32>, vector<1x2x32xf32>, vector<1x2x32xf32> -> vector<1x2x128xf32>
    %328 = vector.shape_cast %327 : vector<1x2x128xf32> to vector<2x128xf32>
    %329 = arith.truncf %328 : vector<2x128xf32> to vector<2x128xbf16>
    %cst_127 = arith.constant dense<0.000000e+00> : vector<2x128xf32>
    %330 = tpu.matmul %329, %221, %cst_127 {dimension_numbers = #tpu.dot_dimension_numbers<[1], [0], [0], [1], [0, 0, 1, 1], [], []>} : vector<2x128xbf16>, vector<128x128xbf16>, vector<2x128xf32> -> vector<2x128xf32>
    %331 = vector.broadcast %223 : vector<1x128xf32> to vector<2x128xf32>
    %332 = arith.addf %330, %331 : vector<2x128xf32>
    %333 = vector.shape_cast %332 : vector<2x128xf32> to vector<1x2x128xf32>
    %334 = vector.extract_strided_slice %211 {offsets = [0, 6, 0], sizes = [1, 2, 128], strides = [1, 1, 1]} : vector<1x8x128xf32> to vector<1x2x128xf32>
    %335 = arith.addf %334, %333 : vector<1x2x128xf32>
    %cst_128 = arith.constant dense<0.000000e+00> : vector<1x2xf32>
    %336 = vector.multi_reduction <add>, %335, %cst_128 [2] : vector<1x2x128xf32> to vector<1x2xf32>
    %337 = vector.shape_cast %336 : vector<1x2xf32> to vector<1x2x1xf32>
    %cst_129 = arith.constant 1.280000e+02 : f32
    %338 = vector.broadcast %cst_129 : f32 to vector<1x2x1xf32>
    %339 = arith.divf %337, %338 : vector<1x2x1xf32>
    %340 = vector.broadcast %339 : vector<1x2x1xf32> to vector<1x2x128xf32>
    %341 = arith.subf %335, %340 : vector<1x2x128xf32>
    %342 = arith.mulf %341, %341 : vector<1x2x128xf32>
    %cst_130 = arith.constant dense<0.000000e+00> : vector<1x2xf32>
    %343 = vector.multi_reduction <add>, %342, %cst_130 [2] : vector<1x2x128xf32> to vector<1x2xf32>
    %344 = vector.shape_cast %343 : vector<1x2xf32> to vector<1x2x1xf32>
    %cst_131 = arith.constant 1.280000e+02 : f32
    %345 = vector.broadcast %cst_131 : f32 to vector<1x2x1xf32>
    %346 = arith.divf %344, %345 : vector<1x2x1xf32>
    %347 = vector.broadcast %339 : vector<1x2x1xf32> to vector<1x2x128xf32>
    %348 = arith.subf %335, %347 : vector<1x2x128xf32>
    %cst_132 = arith.constant 9.99999974E-6 : f32
    %349 = vector.broadcast %cst_132 : f32 to vector<1x2x1xf32>
    %350 = arith.addf %346, %349 : vector<1x2x1xf32>
    %351 = math.rsqrt %350 : vector<1x2x1xf32>
    %352 = vector.broadcast %351 : vector<1x2x1xf32> to vector<1x2x128xf32>
    %353 = arith.mulf %348, %352 : vector<1x2x128xf32>
    %354 = vector.shape_cast %225 : vector<1x128xf32> to vector<1x1x128xf32>
    %355 = vector.broadcast %354 : vector<1x1x128xf32> to vector<1x2x128xf32>
    %356 = arith.mulf %353, %355 : vector<1x2x128xf32>
    %357 = vector.shape_cast %227 : vector<1x128xf32> to vector<1x1x128xf32>
    %358 = vector.broadcast %357 : vector<1x1x128xf32> to vector<1x2x128xf32>
    %359 = arith.addf %356, %358 : vector<1x2x128xf32>
    %360 = vector.shape_cast %359 : vector<1x2x128xf32> to vector<2x128xf32>
    %361 = arith.truncf %360 : vector<2x128xf32> to vector<2x128xbf16>
    %cst_133 = arith.constant dense<0.000000e+00> : vector<2x512xf32>
    %362 = tpu.matmul %361, %229, %cst_133 {dimension_numbers = #tpu.dot_dimension_numbers<[1], [0], [0], [1], [0, 0, 1, 1], [], []>} : vector<2x128xbf16>, vector<128x512xbf16>, vector<2x512xf32> -> vector<2x512xf32>
    %363 = vector.broadcast %231 : vector<1x512xf32> to vector<2x512xf32>
    %364 = arith.addf %362, %363 : vector<2x512xf32>
    %cst_134 = arith.constant 1.702000e+00 : f32
    %365 = vector.broadcast %cst_134 : f32 to vector<2x512xf32>
    %366 = arith.mulf %365, %364 : vector<2x512xf32>
    %367 = arith.negf %366 : vector<2x512xf32>
    %368 = math.exp %367 : vector<2x512xf32>
    %cst_135 = arith.constant 1.000000e+00 : f32
    %369 = vector.broadcast %cst_135 : f32 to vector<2x512xf32>
    %370 = arith.addf %369, %368 : vector<2x512xf32>
    %371 = arith.divf %369, %370 : vector<2x512xf32>
    %372 = arith.mulf %364, %371 : vector<2x512xf32>
    %373 = arith.truncf %372 : vector<2x512xf32> to vector<2x512xbf16>
    %cst_136 = arith.constant dense<0.000000e+00> : vector<2x128xf32>
    %374 = tpu.matmul %373, %233, %cst_136 {dimension_numbers = #tpu.dot_dimension_numbers<[1], [0], [0], [1], [0, 0, 1, 1], [], []>} : vector<2x512xbf16>, vector<512x128xbf16>, vector<2x128xf32> -> vector<2x128xf32>
    %375 = vector.broadcast %235 : vector<1x128xf32> to vector<2x128xf32>
    %376 = arith.addf %374, %375 : vector<2x128xf32>
    %377 = vector.shape_cast %376 : vector<2x128xf32> to vector<1x2x128xf32>
    %378 = arith.addf %335, %377 : vector<1x2x128xf32>
    %c0_137 = arith.constant 0 : index
    %c0_138 = arith.constant 0 : index
    %c0_139 = arith.constant 0 : index
    %379 = vector.load %arg23[%c0_137, %c0_138, %c0_139] : memref<1x2x128xf32, #tpu.memory_space<vmem>>, vector<1x2x128xf32>
    tpu.vector_store %arg23[%c0_137, %c0_138, %c0_139], %378 {strides = array<i32>} : memref<1x2x128xf32, #tpu.memory_space<vmem>>, vector<1x2x128xf32>,
    %380 = vector.shape_cast %378 : vector<1x2x128xf32> to vector<1x1x2x128xf32>
    %c0_140 = arith.constant 0 : index
    %c0_141 = arith.constant 0 : index
    %c0_142 = arith.constant 0 : index
    %c0_143 = arith.constant 0 : index
    %381 = vector.load %arg21[%c0_140, %c0_141, %c0_142, %c0_143] : memref<1x1x2x128xf32, #tpu.memory_space<vmem>>, vector<1x1x2x128xf32>
    tpu.vector_store %arg21[%c0_140, %c0_141, %c0_142, %c0_143], %380 {strides = array<i32>} : memref<1x1x2x128xf32, #tpu.memory_space<vmem>>, vector<1x1x2x128xf32>,
    %c2_i32 = arith.constant 2 : i32
    %382 = arith.cmpi eq, %arg1, %c2_i32 : i32
    %383 = arith.extui %382 : i1 to i32
    %c0_i32_144 = arith.constant 0 : i32
    %384 = arith.cmpi ne, %383, %c0_i32_144 : i32
    scf.if %384 {
      %385 = vector.shape_cast %378 : vector<1x2x128xf32> to vector<1x1x2x128xf32>
      %c0_145 = arith.constant 0 : index
      %c0_146 = arith.constant 0 : index
      %c0_147 = arith.constant 0 : index
      %c0_148 = arith.constant 0 : index
      %386 = vector.load %arg22[%c0_145, %c0_146, %c0_147, %c0_148] : memref<1x1x2x128xf32, #tpu.memory_space<vmem>>, vector<1x1x2x128xf32>
      tpu.vector_store %arg22[%c0_145, %c0_146, %c0_147, %c0_148], %385 {strides = array<i32>} : memref<1x1x2x128xf32, #tpu.memory_space<vmem>>, vector<1x1x2x128xf32>,
    } else {
    }
    return
  }
  func.func @transform_0(%arg0: i32, %arg1: i32) -> (i32, i32, i32, i32) {
    %c0_i32 = arith.constant 0 : i32
    %c0_i32_0 = arith.constant 0 : i32
    %c0_i32_1 = arith.constant 0 : i32
    return %arg1, %arg0, %c0_i32, %c0_i32_0 : i32, i32, i32, i32
  }
  func.func @transform_1(%arg0: i32, %arg1: i32) -> (i32, i32, i32) {
    %c0_i32 = arith.constant 0 : i32
    %c0_i32_0 = arith.constant 0 : i32
    %c0_i32_1 = arith.constant 0 : i32
    return %arg0, %c0_i32, %c0_i32_0 : i32, i32, i32
  }
  func.func @transform_2(%arg0: i32, %arg1: i32) -> (i32, i32, i32, i32) {
    %c0_i32 = arith.constant 0 : i32
    %c0_i32_0 = arith.constant 0 : i32
    %c0_i32_1 = arith.constant 0 : i32
    return %arg1, %arg0, %c0_i32, %c0_i32_0 : i32, i32, i32, i32
  }
  func.func @transform_3(%arg0: i32, %arg1: i32) -> (i32, i32) {
    %c0_i32 = arith.constant 0 : i32
    %c0_i32_0 = arith.constant 0 : i32
    %c0_i32_1 = arith.constant 0 : i32
    return %c0_i32, %c0_i32_0 : i32, i32
  }
  func.func @transform_4(%arg0: i32, %arg1: i32) -> (i32, i32) {
    %c0_i32 = arith.constant 0 : i32
    %c0_i32_0 = arith.constant 0 : i32
    %c0_i32_1 = arith.constant 0 : i32
    return %c0_i32, %c0_i32_0 : i32, i32
  }
  func.func @transform_5(%arg0: i32, %arg1: i32) -> (i32, i32) {
    %c0_i32 = arith.constant 0 : i32
    %c0_i32_0 = arith.constant 0 : i32
    %c0_i32_1 = arith.constant 0 : i32
    return %c0_i32, %c0_i32_0 : i32, i32
  }
  func.func @transform_6(%arg0: i32, %arg1: i32) -> (i32, i32) {
    %c0_i32 = arith.constant 0 : i32
    %c0_i32_0 = arith.constant 0 : i32
    %c0_i32_1 = arith.constant 0 : i32
    return %c0_i32, %c0_i32_0 : i32, i32
  }
  func.func @transform_7(%arg0: i32, %arg1: i32) -> (i32, i32, i32) {
    %c0_i32 = arith.constant 0 : i32
    %c0_i32_0 = arith.constant 0 : i32
    %c0_i32_1 = arith.constant 0 : i32
    %c0_i32_2 = arith.constant 0 : i32
    return %c0_i32, %c0_i32_0, %c0_i32_1 : i32, i32, i32
  }
  func.func @transform_8(%arg0: i32, %arg1: i32) -> (i32, i32, i32) {
    %c0_i32 = arith.constant 0 : i32
    %c0_i32_0 = arith.constant 0 : i32
    %c0_i32_1 = arith.constant 0 : i32
    %c0_i32_2 = arith.constant 0 : i32
    return %c0_i32, %c0_i32_0, %c0_i32_1 : i32, i32, i32
  }
  func.func @transform_9(%arg0: i32, %arg1: i32) -> (i32, i32, i32) {
    %c0_i32 = arith.constant 0 : i32
    %c0_i32_0 = arith.constant 0 : i32
    %c0_i32_1 = arith.constant 0 : i32
    %c0_i32_2 = arith.constant 0 : i32
    return %c0_i32, %c0_i32_0, %c0_i32_1 : i32, i32, i32
  }
  func.func @transform_10(%arg0: i32, %arg1: i32) -> (i32, i32, i32) {
    %c0_i32 = arith.constant 0 : i32
    %c0_i32_0 = arith.constant 0 : i32
    %c0_i32_1 = arith.constant 0 : i32
    %c0_i32_2 = arith.constant 0 : i32
    return %c0_i32, %c0_i32_0, %c0_i32_1 : i32, i32, i32
  }
  func.func @transform_11(%arg0: i32, %arg1: i32) -> (i32, i32, i32) {
    %c0_i32 = arith.constant 0 : i32
    %c0_i32_0 = arith.constant 0 : i32
    %c0_i32_1 = arith.constant 0 : i32
    %c0_i32_2 = arith.constant 0 : i32
    return %c0_i32, %c0_i32_0, %c0_i32_1 : i32, i32, i32
  }
  func.func @transform_12(%arg0: i32, %arg1: i32) -> (i32, i32, i32) {
    %c0_i32 = arith.constant 0 : i32
    %c0_i32_0 = arith.constant 0 : i32
    %c0_i32_1 = arith.constant 0 : i32
    %c0_i32_2 = arith.constant 0 : i32
    return %c0_i32, %c0_i32_0, %c0_i32_1 : i32, i32, i32
  }
  func.func @transform_13(%arg0: i32, %arg1: i32) -> (i32, i32, i32) {
    %c0_i32 = arith.constant 0 : i32
    %c0_i32_0 = arith.constant 0 : i32
    %c0_i32_1 = arith.constant 0 : i32
    %c0_i32_2 = arith.constant 0 : i32
    return %c0_i32, %c0_i32_0, %c0_i32_1 : i32, i32, i32
  }
  func.func @transform_14(%arg0: i32, %arg1: i32) -> (i32, i32, i32) {
    %c0_i32 = arith.constant 0 : i32
    %c0_i32_0 = arith.constant 0 : i32
    %c0_i32_1 = arith.constant 0 : i32
    %c0_i32_2 = arith.constant 0 : i32
    return %c0_i32, %c0_i32_0, %c0_i32_1 : i32, i32, i32
  }
  func.func @transform_15(%arg0: i32, %arg1: i32) -> (i32, i32, i32) {
    %c0_i32 = arith.constant 0 : i32
    %c0_i32_0 = arith.constant 0 : i32
    %c0_i32_1 = arith.constant 0 : i32
    %c0_i32_2 = arith.constant 0 : i32
    return %c0_i32, %c0_i32_0, %c0_i32_1 : i32, i32, i32
  }
  func.func @transform_16(%arg0: i32, %arg1: i32) -> (i32, i32, i32) {
    %c0_i32 = arith.constant 0 : i32
    %c0_i32_0 = arith.constant 0 : i32
    %c0_i32_1 = arith.constant 0 : i32
    %c0_i32_2 = arith.constant 0 : i32
    return %c0_i32, %c0_i32_0, %c0_i32_1 : i32, i32, i32
  }
  func.func @transform_17(%arg0: i32, %arg1: i32) -> (i32, i32, i32) {
    %c0_i32 = arith.constant 0 : i32
    %c0_i32_0 = arith.constant 0 : i32
    %c0_i32_1 = arith.constant 0 : i32
    %c0_i32_2 = arith.constant 0 : i32
    return %c0_i32, %c0_i32_0, %c0_i32_1 : i32, i32, i32
  }
  func.func @transform_18(%arg0: i32, %arg1: i32) -> (i32, i32, i32) {
    %c0_i32 = arith.constant 0 : i32
    %c0_i32_0 = arith.constant 0 : i32
    %c0_i32_1 = arith.constant 0 : i32
    %c0_i32_2 = arith.constant 0 : i32
    return %c0_i32, %c0_i32_0, %c0_i32_1 : i32, i32, i32
  }
  func.func @transform_19(%arg0: i32, %arg1: i32) -> (i32, i32, i32, i32) {
    %c0_i32 = arith.constant 0 : i32
    %c0_i32_0 = arith.constant 0 : i32
    %c0_i32_1 = arith.constant 0 : i32
    return %arg1, %arg0, %c0_i32, %c0_i32_0 : i32, i32, i32, i32
  }
  func.func @transform_20(%arg0: i32, %arg1: i32) -> (i32, i32, i32, i32) {
    %c0_i32 = arith.constant 0 : i32
    %c0_i32_0 = arith.constant 0 : i32
    %c0_i32_1 = arith.constant 0 : i32
    %c0_i32_2 = arith.constant 0 : i32
    return %c0_i32, %arg0, %c0_i32_0, %c0_i32_1 : i32, i32, i32, i32
  }
}

</mosaic_0001>

<llo_original>
// kernel: tpu_custom_call.1
$region0: #{tpu_custom_call.1}
  #allocation0 [shape = 'u32[]', space=smem, size = 0x4, offset = 0x4, fixed_abs, tag = 'smem constant byte address 0x4 - core index']
  #allocation1 [shape = 'u32[144,128]{1,0:T(1,128)}', space=vmem, size = 0x12000, scoped, tag = 'internal scratch']
  #allocation2 [shape = 'f32[1,2,128]{2,1,0:T(2,128)}', space=vmem, size = 0x400, scoped, tag = 'scratch operand']
  %s0 = inlined_call_operand.vmem [shape: f32[3,2,6,128], index: 0, kind: input, shape index: {}]
  %s1 = inlined_call_operand.vmem [shape: f32[2,2,128], index: 1, kind: input, shape index: {}]
  %s2 = inlined_call_operand.vmem [shape: f32[3,2,1,128], index: 2, kind: input, shape index: {}]
  %s3 = inlined_call_operand.vmem [shape: f32[6,128], index: 3, kind: input, shape index: {}]
  %s4 = inlined_call_operand.vmem [shape: f32[2,128], index: 4, kind: input, shape index: {}]
  %s5 = inlined_call_operand.vmem [shape: f32[1,128], index: 5, kind: input, shape index: {}]
  %s6 = inlined_call_operand.vmem [shape: f32[1,128], index: 6, kind: input, shape index: {}]
  %s7 = inlined_call_operand.vmem [shape: f32[2,1,128], index: 7, kind: input, shape index: {}]
  %s8 = inlined_call_operand.vmem [shape: f32[2,1,128], index: 8, kind: input, shape index: {}]
  %s9 = inlined_call_operand.hbm [shape: bf16[2,128,384], index: 9, kind: input, shape index: {}]
  %s10 = inlined_call_operand.vmem [shape: f32[2,1,384], index: 10, kind: input, shape index: {}]
  %s11 = inlined_call_operand.hbm [shape: bf16[2,128,128], index: 11, kind: input, shape index: {}]
  %s12 = inlined_call_operand.vmem [shape: f32[2,1,128], index: 12, kind: input, shape index: {}]
  %s13 = inlined_call_operand.vmem [shape: f32[2,1,128], index: 13, kind: input, shape index: {}]
  %s14 = inlined_call_operand.vmem [shape: f32[2,1,128], index: 14, kind: input, shape index: {}]
  %s15 = inlined_call_operand.hbm [shape: bf16[2,128,512], index: 15, kind: input, shape index: {}]
  %s16 = inlined_call_operand.vmem [shape: f32[2,1,512], index: 16, kind: input, shape index: {}]
  %s17 = inlined_call_operand.hbm [shape: bf16[2,512,128], index: 17, kind: input, shape index: {}]
  %s18 = inlined_call_operand.vmem [shape: f32[2,1,128], index: 18, kind: input, shape index: {}]
  %s19 = inlined_call_operand.hbm [shape: f32[3,2,2,128], index: 19, kind: output, shape index: {0}]
  %s20 = inlined_call_operand.hbm [shape: f32[1,2,2,128], index: 20, kind: output, shape index: {1}]
  %21 = xla_tuple %s19, %s20
  %s22 = sld [smem:[#allocation0]]
  $region141: #{tpu_custom_call.1} parent=0
    _
  %s24 = ssub.s32 1, %s22
  %s25 = scalar_select 0, %s24, %s22
  $region1: #{tpu_custom_call.1} parent=0
    #allocation3 [shape = 'u8[196608]{0}', space=vmem, size = 0x30000, scoped, tag = 'input window, operand 9, single buffered']
    #allocation4 [shape = 's32[2]{0}', space=sflag, size = 0x8, scoped, tag = 'scoped memory for tpu_custom_call.1']
    #allocation5 [shape = 's32[2]{0}', space=sflag, size = 0x8, scoped, tag = 'scoped memory for tpu_custom_call.1']
    #allocation6 [shape = 'u8[65536]{0}', space=vmem, size = 0x10000, scoped, tag = 'input window, operand 11, single buffered']
    #allocation7 [shape = 's32[1]{0}', space=sflag, size = 0x4, scoped, tag = 'scoped memory for tpu_custom_call.1']
    #allocation8 [shape = 'u8[262144]{0}', space=vmem, size = 0x40000, scoped, tag = 'input window, operand 15, single buffered']
    #allocation9 [shape = 'u8[262144]{0}', space=vmem, size = 0x40000, scoped, tag = 'input window, operand 17, single buffered']
    #allocation10 [shape = 's32[1]{0}', space=sflag, size = 0x4, scoped, tag = 'scoped memory for tpu_custom_call.1']
    #allocation11 [shape = 'u8[2048]{0}', space=vmem, size = 0x800, scoped, tag = 'output window, operand 0']
    #allocation12 [shape = 'u8[2048]{0}', space=vmem, size = 0x800, scoped, tag = 'output window, operand 1']
    #allocation13 [shape = 's32[2]{0}', space=sflag, size = 0x8, scoped, tag = 'scoped memory for tpu_custom_call.1']
    %26 = vsyncpa [#allocation4], 0
    %27 = vsyncpa [#allocation7], 0
    %28 = vsyncpa [#allocation10], 0
    %29 = vsyncpa [#allocation5], 0
    %s30 = scalar_lea.sflag [#allocation5], 1
    %31 = vsyncpa %s30, 0
    %32 = vsyncpa [#allocation13], 0
    %s33 = scalar_lea.sflag [#allocation13], 1
    %34 = vsyncpa %s33, 0
    loop: start=0, step=1, limit=8
    $region2: #{tpu_custom_call.1} parent=1 // loop_pre_header
      _
    $region3: #{tpu_custom_call.1} parent=1 // loop_header
      %s36 = sphi 0, %s40
      %p37 = scmp.ge.s32.totalorder %s36, 8
      %s43 = sphi 0, %s55
      %s44 = sphi 0, %s51
      %s45 = sphi 0, %s43
      %s46 = sphi 0, %s44
      %s47 = sphi 0, %s45
      %s48 = sphi 0, %s46
      %s60 = sphi 0, %s62
      %s63 = sphi 0, %s60
      %s64 = sphi 0, %s63
      %s80 = sphi 0, %s64
      %s86 = sphi 0, %s88
      %s89 = sphi 0, %s86
      %s90 = sphi 0, %s89
      %s106 = sphi 0, %s90
      %s114 = sphi 0, %s116
      %s117 = sphi 0, %s114
      %s118 = sphi 0, %s117
      %s134 = sphi 0, %s118
      %s138 = sphi 0, %s138
      %s140 = sphi 0, %s138
      %s141 = sphi 0, %s140
      %s155 = sphi 0, %s141
      %s159 = sphi 0, %s159
      %s161 = sphi 0, %s159
      %s162 = sphi 0, %s161
      %s176 = sphi 0, %s162
      %s180 = sphi 0, %s180
      %s182 = sphi 0, %s180
      %s183 = sphi 0, %s182
      %s197 = sphi 0, %s183
      %s201 = sphi 0, %s201
      %s203 = sphi 0, %s201
      %s204 = sphi 0, %s203
      %s218 = sphi 0, %s204
      %s222 = sphi 0, %s222
      %s224 = sphi 0, %s222
      %s225 = sphi 0, %s224
      %s239 = sphi 0, %s225
      %s243 = sphi 0, %s243
      %s245 = sphi 0, %s243
      %s246 = sphi 0, %s245
      %s260 = sphi 0, %s246
      %s264 = sphi 0, %s264
      %s266 = sphi 0, %s264
      %s267 = sphi 0, %s266
      %s281 = sphi 0, %s267
      %s285 = sphi 0, %s285
      %s287 = sphi 0, %s285
      %s288 = sphi 0, %s287
      %s302 = sphi 0, %s288
      %s306 = sphi 0, %s306
      %s308 = sphi 0, %s306
      %s309 = sphi 0, %s308
      %s323 = sphi 0, %s309
      %s327 = sphi 0, %s327
      %s329 = sphi 0, %s327
      %s330 = sphi 0, %s329
      %s344 = sphi 0, %s330
      %s348 = sphi 0, %s348
      %s350 = sphi 0, %s348
      %s351 = sphi 0, %s350
      %s365 = sphi 0, %s351
      %s369 = sphi 0, %s369
      %s371 = sphi 0, %s369
      %s372 = sphi 0, %s371
      %s386 = sphi 0, %s372
      %s390 = sphi 0, %s390
      %s392 = sphi 0, %s390
      %s393 = sphi 0, %s392
      %s407 = sphi 0, %s393
      %s411 = sphi 0, %s411
      %s413 = sphi 0, %s411
      %s414 = sphi 0, %s413
      %s428 = sphi 0, %s414
      %s432 = sphi 0, %s432
      %s434 = sphi 0, %s432
      %s435 = sphi 0, %s434
      %s449 = sphi 0, %s435
      %s453 = sphi 0, %s453
      %s455 = sphi 0, %s453
      %s456 = sphi 0, %s455
      %s470 = sphi 0, %s456
      %s478 = sphi 0, %s480
      %s481 = sphi 0, %s478
      %s482 = sphi 0, %s481
      %s498 = sphi 0, %s482
      %s504 = sphi 0, %s506
      %s507 = sphi 0, %s504
      %s508 = sphi 0, %s507
      %s524 = sphi 0, %s508
    $region4: #{tpu_custom_call.1} parent=1 // loop_header_branch
      %39 = sbr.rel (%p37) target = $region8
    $region5: #{tpu_custom_call.1} parent=1 // loop_body
      %s41 = ssub.s32 %s36, 1
      %s42 = ssub.s32 %s36, 2
      %s49 = sadd.s32 1, %s44
      %p50 = scmp.ge.s32.totalorder %s49, 3
      %s51 = scalar_select %p50, 0, %s49
      %s52 = sadd.s32 1, %s43
      %s53 = scalar_select %p50, %s52, %s43
      %p54 = scmp.ge.s32.totalorder %s53, 2
      %s55 = scalar_select %p54, 0, %s53
      %s56 = ssub.s32 %s44, %s51
      %s57 = ssub.s32 %s43, %s55
      %s58 = sor.u32 %s56, %s57
      %p59 = scmp.eq.s32.totalorder %s58, 0
      %s61 = sadd.s32 %s60, 1
      %s62 = scalar_select %p59, %s60, %s61
      %p65 = pneg %p59
      %p66 = scmp.eq.s32.totalorder %s36, 5
      %p67 = por %p65, %p66
      %p68 = scmp.ne.s32.totalorder %s60, %s63
      %p69 = scmp.eq.s32.totalorder %s36, 0
      %p70 = por %p68, %p69
      %p71 = scmp.ne.s32.totalorder %s60, %s63
      %p72 = scmp.eq.s32.totalorder %s41, 5
      %p73 = por %p71, %p72
      %p74 = scmp.ne.s32.totalorder %s63, %s64
      %p75 = scmp.eq.s32.totalorder %s41, 0
      %p76 = por %p74, %p75
      %p77 = scmp.ne.s32.totalorder %s63, %s64
      %p78 = scmp.eq.s32.totalorder %s42, 5
      %p79 = por %p77, %p78
      %p81 = scmp.ne.s32.totalorder %s64, %s80
      %p82 = scmp.eq.s32.totalorder %s42, 0
      %p83 = por %p81, %p82
      %s84 = ssub.s32 %s43, %s55
      %p85 = scmp.eq.s32.totalorder %s84, 0
      %s87 = sadd.s32 %s86, 1
      %s88 = scalar_select %p85, %s86, %s87
      %p91 = pneg %p85
      %p92 = scmp.eq.s32.totalorder %s36, 5
      %p93 = por %p91, %p92
      %p94 = scmp.ne.s32.totalorder %s86, %s89
      %p95 = scmp.eq.s32.totalorder %s36, 0
      %p96 = por %p94, %p95
      %p97 = scmp.ne.s32.totalorder %s86, %s89
      %p98 = scmp.eq.s32.totalorder %s41, 5
      %p99 = por %p97, %p98
      %p100 = scmp.ne.s32.totalorder %s89, %s90
      %p101 = scmp.eq.s32.totalorder %s41, 0
      %p102 = por %p100, %p101
      %p103 = scmp.ne.s32.totalorder %s89, %s90
      %p104 = scmp.eq.s32.totalorder %s42, 5
      %p105 = por %p103, %p104
      %p107 = scmp.ne.s32.totalorder %s90, %s106
      %p108 = scmp.eq.s32.totalorder %s42, 0
      %p109 = por %p107, %p108
      %s110 = ssub.s32 %s44, %s51
      %s111 = ssub.s32 %s43, %s55
      %s112 = sor.u32 %s110, %s111
      %p113 = scmp.eq.s32.totalorder %s112, 0
      %s115 = sadd.s32 %s114, 1
      %s116 = scalar_select %p113, %s114, %s115
      %p119 = pneg %p113
      %p120 = scmp.eq.s32.totalorder %s36, 5
      %p121 = por %p119, %p120
      %p122 = scmp.ne.s32.totalorder %s114, %s117
      %p123 = scmp.eq.s32.totalorder %s36, 0
      %p124 = por %p122, %p123
      %p125 = scmp.ne.s32.totalorder %s114, %s117
      %p126 = scmp.eq.s32.totalorder %s41, 5
      %p127 = por %p125, %p126
      %p128 = scmp.ne.s32.totalorder %s117, %s118
      %p129 = scmp.eq.s32.totalorder %s41, 0
      %p130 = por %p128, %p129
      %p131 = scmp.ne.s32.totalorder %s117, %s118
      %p132 = scmp.eq.s32.totalorder %s42, 5
      %p133 = por %p131, %p132
      %p135 = scmp.ne.s32.totalorder %s118, %s134
      %p136 = scmp.eq.s32.totalorder %s42, 0
      %p137 = por %p135, %p136
      %s139 = sadd.s32 %s138, 1
      %p142 = scmp.eq.s32.totalorder %s36, 5
      %p143 = scmp.ne.s32.totalorder %s138, %s140
      %p144 = scmp.eq.s32.totalorder %s36, 0
      %p145 = por %p143, %p144
      %p146 = scmp.ne.s32.totalorder %s138, %s140
      %p147 = scmp.eq.s32.totalorder %s41, 5
      %p148 = por %p146, %p147
      %p149 = scmp.ne.s32.totalorder %s140, %s141
      %p150 = scmp.eq.s32.totalorder %s41, 0
      %p151 = por %p149, %p150
      %p152 = scmp.ne.s32.totalorder %s140, %s141
      %p153 = scmp.eq.s32.totalorder %s42, 5
      %p154 = por %p152, %p153
      %p156 = scmp.ne.s32.totalorder %s141, %s155
      %p157 = scmp.eq.s32.totalorder %s42, 0
      %p158 = por %p156, %p157
      %s160 = sadd.s32 %s159, 1
      %p163 = scmp.eq.s32.totalorder %s36, 5
      %p164 = scmp.ne.s32.totalorder %s159, %s161
      %p165 = scmp.eq.s32.totalorder %s36, 0
      %p166 = por %p164, %p165
      %p167 = scmp.ne.s32.totalorder %s159, %s161
      %p168 = scmp.eq.s32.totalorder %s41, 5
      %p169 = por %p167, %p168
      %p170 = scmp.ne.s32.totalorder %s161, %s162
      %p171 = scmp.eq.s32.totalorder %s41, 0
      %p172 = por %p170, %p171
      %p173 = scmp.ne.s32.totalorder %s161, %s162
      %p174 = scmp.eq.s32.totalorder %s42, 5
      %p175 = por %p173, %p174
      %p177 = scmp.ne.s32.totalorder %s162, %s176
      %p178 = scmp.eq.s32.totalorder %s42, 0
      %p179 = por %p177, %p178
      %s181 = sadd.s32 %s180, 1
      %p184 = scmp.eq.s32.totalorder %s36, 5
      %p185 = scmp.ne.s32.totalorder %s180, %s182
      %p186 = scmp.eq.s32.totalorder %s36, 0
      %p187 = por %p185, %p186
      %p188 = scmp.ne.s32.totalorder %s180, %s182
      %p189 = scmp.eq.s32.totalorder %s41, 5
      %p190 = por %p188, %p189
      %p191 = scmp.ne.s32.totalorder %s182, %s183
      %p192 = scmp.eq.s32.totalorder %s41, 0
      %p193 = por %p191, %p192
      %p194 = scmp.ne.s32.totalorder %s182, %s183
      %p195 = scmp.eq.s32.totalorder %s42, 5
      %p196 = por %p194, %p195
      %p198 = scmp.ne.s32.totalorder %s183, %s197
      %p199 = scmp.eq.s32.totalorder %s42, 0
      %p200 = por %p198, %p199
      %s202 = sadd.s32 %s201, 1
      %p205 = scmp.eq.s32.totalorder %s36, 5
      %p206 = scmp.ne.s32.totalorder %s201, %s203
      %p207 = scmp.eq.s32.totalorder %s36, 0
      %p208 = por %p206, %p207
      %p209 = scmp.ne.s32.totalorder %s201, %s203
      %p210 = scmp.eq.s32.totalorder %s41, 5
      %p211 = por %p209, %p210
      %p212 = scmp.ne.s32.totalorder %s203, %s204
      %p213 = scmp.eq.s32.totalorder %s41, 0
      %p214 = por %p212, %p213
      %p215 = scmp.ne.s32.totalorder %s203, %s204
      %p216 = scmp.eq.s32.totalorder %s42, 5
      %p217 = por %p215, %p216
      %p219 = scmp.ne.s32.totalorder %s204, %s218
      %p220 = scmp.eq.s32.totalorder %s42, 0
      %p221 = por %p219, %p220
      %s223 = sadd.s32 %s222, 1
      %p226 = scmp.eq.s32.totalorder %s36, 5
      %p227 = scmp.ne.s32.totalorder %s222, %s224
      %p228 = scmp.eq.s32.totalorder %s36, 0
      %p229 = por %p227, %p228
      %p230 = scmp.ne.s32.totalorder %s222, %s224
      %p231 = scmp.eq.s32.totalorder %s41, 5
      %p232 = por %p230, %p231
      %p233 = scmp.ne.s32.totalorder %s224, %s225
      %p234 = scmp.eq.s32.totalorder %s41, 0
      %p235 = por %p233, %p234
      %p236 = scmp.ne.s32.totalorder %s224, %s225
      %p237 = scmp.eq.s32.totalorder %s42, 5
      %p238 = por %p236, %p237
      %p240 = scmp.ne.s32.totalorder %s225, %s239
      %p241 = scmp.eq.s32.totalorder %s42, 0
      %p242 = por %p240, %p241
      %s244 = sadd.s32 %s243, 1
      %p247 = scmp.eq.s32.totalorder %s36, 5
      %p248 = scmp.ne.s32.totalorder %s243, %s245
      %p249 = scmp.eq.s32.totalorder %s36, 0
      %p250 = por %p248, %p249
      %p251 = scmp.ne.s32.totalorder %s243, %s245
      %p252 = scmp.eq.s32.totalorder %s41, 5
      %p253 = por %p251, %p252
      %p254 = scmp.ne.s32.totalorder %s245, %s246
      %p255 = scmp.eq.s32.totalorder %s41, 0
      %p256 = por %p254, %p255
      %p257 = scmp.ne.s32.totalorder %s245, %s246
      %p258 = scmp.eq.s32.totalorder %s42, 5
      %p259 = por %p257, %p258
      %p261 = scmp.ne.s32.totalorder %s246, %s260
      %p262 = scmp.eq.s32.totalorder %s42, 0
      %p263 = por %p261, %p262
      %s265 = sadd.s32 %s264, 1
      %p268 = scmp.eq.s32.totalorder %s36, 5
      %p269 = scmp.ne.s32.totalorder %s264, %s266
      %p270 = scmp.eq.s32.totalorder %s36, 0
      %p271 = por %p269, %p270
      %p272 = scmp.ne.s32.totalorder %s264, %s266
      %p273 = scmp.eq.s32.totalorder %s41, 5
      %p274 = por %p272, %p273
      %p275 = scmp.ne.s32.totalorder %s266, %s267
      %p276 = scmp.eq.s32.totalorder %s41, 0
      %p277 = por %p275, %p276
      %p278 = scmp.ne.s32.totalorder %s266, %s267
      %p279 = scmp.eq.s32.totalorder %s42, 5
      %p280 = por %p278, %p279
      %p282 = scmp.ne.s32.totalorder %s267, %s281
      %p283 = scmp.eq.s32.totalorder %s42, 0
      %p284 = por %p282, %p283
      %s286 = sadd.s32 %s285, 1
      %p289 = scmp.eq.s32.totalorder %s36, 5
      %p290 = scmp.ne.s32.totalorder %s285, %s287
      %p291 = scmp.eq.s32.totalorder %s36, 0
      %p292 = por %p290, %p291
      %p293 = scmp.ne.s32.totalorder %s285, %s287
      %p294 = scmp.eq.s32.totalorder %s41, 5
      %p295 = por %p293, %p294
      %p296 = scmp.ne.s32.totalorder %s287, %s288
      %p297 = scmp.eq.s32.totalorder %s41, 0
      %p298 = por %p296, %p297
      %p299 = scmp.ne.s32.totalorder %s287, %s288
      %p300 = scmp.eq.s32.totalorder %s42, 5
      %p301 = por %p299, %p300
      %p303 = scmp.ne.s32.totalorder %s288, %s302
      %p304 = scmp.eq.s32.totalorder %s42, 0
      %p305 = por %p303, %p304
      %s307 = sadd.s32 %s306, 1
      %p310 = scmp.eq.s32.totalorder %s36, 5
      %p311 = scmp.ne.s32.totalorder %s306, %s308
      %p312 = scmp.eq.s32.totalorder %s36, 0
      %p313 = por %p311, %p312
      %p314 = scmp.ne.s32.totalorder %s306, %s308
      %p315 = scmp.eq.s32.totalorder %s41, 5
      %p316 = por %p314, %p315
      %p317 = scmp.ne.s32.totalorder %s308, %s309
      %p318 = scmp.eq.s32.totalorder %s41, 0
      %p319 = por %p317, %p318
      %p320 = scmp.ne.s32.totalorder %s308, %s309
      %p321 = scmp.eq.s32.totalorder %s42, 5
      %p322 = por %p320, %p321
      %p324 = scmp.ne.s32.totalorder %s309, %s323
      %p325 = scmp.eq.s32.totalorder %s42, 0
      %p326 = por %p324, %p325
      %s328 = sadd.s32 %s327, 1
      %p331 = scmp.eq.s32.totalorder %s36, 5
      %p332 = scmp.ne.s32.totalorder %s327, %s329
      %p333 = scmp.eq.s32.totalorder %s36, 0
      %p334 = por %p332, %p333
      %p335 = scmp.ne.s32.totalorder %s327, %s329
      %p336 = scmp.eq.s32.totalorder %s41, 5
      %p337 = por %p335, %p336
      %p338 = scmp.ne.s32.totalorder %s329, %s330
      %p339 = scmp.eq.s32.totalorder %s41, 0
      %p340 = por %p338, %p339
      %p341 = scmp.ne.s32.totalorder %s329, %s330
      %p342 = scmp.eq.s32.totalorder %s42, 5
      %p343 = por %p341, %p342
      %p345 = scmp.ne.s32.totalorder %s330, %s344
      %p346 = scmp.eq.s32.totalorder %s42, 0
      %p347 = por %p345, %p346
      %s349 = sadd.s32 %s348, 1
      %p352 = scmp.eq.s32.totalorder %s36, 5
      %p353 = scmp.ne.s32.totalorder %s348, %s350
      %p354 = scmp.eq.s32.totalorder %s36, 0
      %p355 = por %p353, %p354
      %p356 = scmp.ne.s32.totalorder %s348, %s350
      %p357 = scmp.eq.s32.totalorder %s41, 5
      %p358 = por %p356, %p357
      %p359 = scmp.ne.s32.totalorder %s350, %s351
      %p360 = scmp.eq.s32.totalorder %s41, 0
      %p361 = por %p359, %p360
      %p362 = scmp.ne.s32.totalorder %s350, %s351
      %p363 = scmp.eq.s32.totalorder %s42, 5
      %p364 = por %p362, %p363
      %p366 = scmp.ne.s32.totalorder %s351, %s365
      %p367 = scmp.eq.s32.totalorder %s42, 0
      %p368 = por %p366, %p367
      %s370 = sadd.s32 %s369, 1
      %p373 = scmp.eq.s32.totalorder %s36, 5
      %p374 = scmp.ne.s32.totalorder %s369, %s371
      %p375 = scmp.eq.s32.totalorder %s36, 0
      %p376 = por %p374, %p375
      %p377 = scmp.ne.s32.totalorder %s369, %s371
      %p378 = scmp.eq.s32.totalorder %s41, 5
      %p379 = por %p377, %p378
      %p380 = scmp.ne.s32.totalorder %s371, %s372
      %p381 = scmp.eq.s32.totalorder %s41, 0
      %p382 = por %p380, %p381
      %p383 = scmp.ne.s32.totalorder %s371, %s372
      %p384 = scmp.eq.s32.totalorder %s42, 5
      %p385 = por %p383, %p384
      %p387 = scmp.ne.s32.totalorder %s372, %s386
      %p388 = scmp.eq.s32.totalorder %s42, 0
      %p389 = por %p387, %p388
      %s391 = sadd.s32 %s390, 1
      %p394 = scmp.eq.s32.totalorder %s36, 5
      %p395 = scmp.ne.s32.totalorder %s390, %s392
      %p396 = scmp.eq.s32.totalorder %s36, 0
      %p397 = por %p395, %p396
      %p398 = scmp.ne.s32.totalorder %s390, %s392
      %p399 = scmp.eq.s32.totalorder %s41, 5
      %p400 = por %p398, %p399
      %p401 = scmp.ne.s32.totalorder %s392, %s393
      %p402 = scmp.eq.s32.totalorder %s41, 0
      %p403 = por %p401, %p402
      %p404 = scmp.ne.s32.totalorder %s392, %s393
      %p405 = scmp.eq.s32.totalorder %s42, 5
      %p406 = por %p404, %p405
      %p408 = scmp.ne.s32.totalorder %s393, %s407
      %p409 = scmp.eq.s32.totalorder %s42, 0
      %p410 = por %p408, %p409
      %s412 = sadd.s32 %s411, 1
      %p415 = scmp.eq.s32.totalorder %s36, 5
      %p416 = scmp.ne.s32.totalorder %s411, %s413
      %p417 = scmp.eq.s32.totalorder %s36, 0
      %p418 = por %p416, %p417
      %p419 = scmp.ne.s32.totalorder %s411, %s413
      %p420 = scmp.eq.s32.totalorder %s41, 5
      %p421 = por %p419, %p420
      %p422 = scmp.ne.s32.totalorder %s413, %s414
      %p423 = scmp.eq.s32.totalorder %s41, 0
      %p424 = por %p422, %p423
      %p425 = scmp.ne.s32.totalorder %s413, %s414
      %p426 = scmp.eq.s32.totalorder %s42, 5
      %p427 = por %p425, %p426
      %p429 = scmp.ne.s32.totalorder %s414, %s428
      %p430 = scmp.eq.s32.totalorder %s42, 0
      %p431 = por %p429, %p430
      %s433 = sadd.s32 %s432, 1
      %p436 = scmp.eq.s32.totalorder %s36, 5
      %p437 = scmp.ne.s32.totalorder %s432, %s434
      %p438 = scmp.eq.s32.totalorder %s36, 0
      %p439 = por %p437, %p438
      %p440 = scmp.ne.s32.totalorder %s432, %s434
      %p441 = scmp.eq.s32.totalorder %s41, 5
      %p442 = por %p440, %p441
      %p443 = scmp.ne.s32.totalorder %s434, %s435
      %p444 = scmp.eq.s32.totalorder %s41, 0
      %p445 = por %p443, %p444
      %p446 = scmp.ne.s32.totalorder %s434, %s435
      %p447 = scmp.eq.s32.totalorder %s42, 5
      %p448 = por %p446, %p447
      %p450 = scmp.ne.s32.totalorder %s435, %s449
      %p451 = scmp.eq.s32.totalorder %s42, 0
      %p452 = por %p450, %p451
      %s454 = sadd.s32 %s453, 1
      %p457 = scmp.eq.s32.totalorder %s36, 5
      %p458 = scmp.ne.s32.totalorder %s453, %s455
      %p459 = scmp.eq.s32.totalorder %s36, 0
      %p460 = por %p458, %p459
      %p461 = scmp.ne.s32.totalorder %s453, %s455
      %p462 = scmp.eq.s32.totalorder %s41, 5
      %p463 = por %p461, %p462
      %p464 = scmp.ne.s32.totalorder %s455, %s456
      %p465 = scmp.eq.s32.totalorder %s41, 0
      %p466 = por %p464, %p465
      %p467 = scmp.ne.s32.totalorder %s455, %s456
      %p468 = scmp.eq.s32.totalorder %s42, 5
      %p469 = por %p467, %p468
      %p471 = scmp.ne.s32.totalorder %s456, %s470
      %p472 = scmp.eq.s32.totalorder %s42, 0
      %p473 = por %p471, %p472
      %s474 = ssub.s32 %s44, %s51
      %s475 = ssub.s32 %s43, %s55
      %s476 = sor.u32 %s474, %s475
      %p477 = scmp.eq.s32.totalorder %s476, 0
      %s479 = sadd.s32 %s478, 1
      %s480 = scalar_select %p477, %s478, %s479
      %p483 = pneg %p477
      %p484 = scmp.eq.s32.totalorder %s36, 5
      %p485 = por %p483, %p484
      %p486 = scmp.ne.s32.totalorder %s478, %s481
      %p487 = scmp.eq.s32.totalorder %s36, 0
      %p488 = por %p486, %p487
      %p489 = scmp.ne.s32.totalorder %s478, %s481
      %p490 = scmp.eq.s32.totalorder %s41, 5
      %p491 = por %p489, %p490
      %p492 = scmp.ne.s32.totalorder %s481, %s482
      %p493 = scmp.eq.s32.totalorder %s41, 0
      %p494 = por %p492, %p493
      %p495 = scmp.ne.s32.totalorder %s481, %s482
      %p496 = scmp.eq.s32.totalorder %s42, 5
      %p497 = por %p495, %p496
      %p499 = scmp.ne.s32.totalorder %s482, %s498
      %p500 = scmp.eq.s32.totalorder %s42, 0
      %p501 = por %p499, %p500
      %s502 = ssub.s32 %s43, %s55
      %p503 = scmp.eq.s32.totalorder %s502, 0
      %s505 = sadd.s32 %s504, 1
      %s506 = scalar_select %p503, %s504, %s505
      %p509 = pneg %p503
      %p510 = scmp.eq.s32.totalorder %s36, 5
      %p511 = por %p509, %p510
      %p512 = scmp.ne.s32.totalorder %s504, %s507
      %p513 = scmp.eq.s32.totalorder %s36, 0
      %p514 = por %p512, %p513
      %p515 = scmp.ne.s32.totalorder %s504, %s507
      %p516 = scmp.eq.s32.totalorder %s41, 5
      %p517 = por %p515, %p516
      %p518 = scmp.ne.s32.totalorder %s507, %s508
      %p519 = scmp.eq.s32.totalorder %s41, 0
      %p520 = por %p518, %p519
      %p521 = scmp.ne.s32.totalorder %s507, %s508
      %p522 = scmp.eq.s32.totalorder %s42, 5
      %p523 = por %p521, %p522
      %p525 = scmp.ne.s32.totalorder %s508, %s524
      %p526 = scmp.eq.s32.totalorder %s42, 0
      %p527 = por %p525, %p526
      %p528 = scmp.le.s32.totalorder 1, %s36
      %p529 = scmp.lt.s32.totalorder %s36, 7
      %p530 = pnand %p528, %p529
      %p531 = pneg %p530
      // Predicated region
      $region9: #{tpu_custom_call.1} parent=5 // pred_check
        _
      $region10: #{tpu_custom_call.1} parent=5 // pred_check_branch
        %533 = sbr.rel (%p530) target = $region12
      $region11: #{tpu_custom_call.1} parent=5 // pred_region
        %s534 = ssub.s32 %s36, 1
        // Predicated region
        $region13: #{tpu_custom_call.1} parent=11 // pred_check
          %p535 = pneg %p151
        $region14: #{tpu_custom_call.1} parent=11 // pred_check_branch
          %537 = sbr.rel (%p535) target = $region16
        $region15: #{tpu_custom_call.1} parent=11 // pred_region
          _
        $region16: #{tpu_custom_call.1} parent=11 // pred_fallthru
          _
        // Predicated region
        $region17: #{tpu_custom_call.1} parent=11 // pred_check
          %p538 = pneg %p172
        $region18: #{tpu_custom_call.1} parent=11 // pred_check_branch
          %540 = sbr.rel (%p538) target = $region20
        $region19: #{tpu_custom_call.1} parent=11 // pred_region
          _
        $region20: #{tpu_custom_call.1} parent=11 // pred_fallthru
          _
        // Predicated region
        $region21: #{tpu_custom_call.1} parent=11 // pred_check
          %p541 = pneg %p193
        $region22: #{tpu_custom_call.1} parent=11 // pred_check_branch
          %543 = sbr.rel (%p541) target = $region24
        $region23: #{tpu_custom_call.1} parent=11 // pred_region
          _
        $region24: #{tpu_custom_call.1} parent=11 // pred_fallthru
          _
        // Predicated region
        $region25: #{tpu_custom_call.1} parent=11 // pred_check
          %p544 = pneg %p214
        $region26: #{tpu_custom_call.1} parent=11 // pred_check_branch
          %546 = sbr.rel (%p544) target = $region28
        $region27: #{tpu_custom_call.1} parent=11 // pred_region
          _
        $region28: #{tpu_custom_call.1} parent=11 // pred_fallthru
          _
        // Predicated region
        $region29: #{tpu_custom_call.1} parent=11 // pred_check
          %p547 = pneg %p235
        $region30: #{tpu_custom_call.1} parent=11 // pred_check_branch
          %549 = sbr.rel (%p547) target = $region32
        $region31: #{tpu_custom_call.1} parent=11 // pred_region
          _
        $region32: #{tpu_custom_call.1} parent=11 // pred_fallthru
          _
        // Predicated region
        $region33: #{tpu_custom_call.1} parent=11 // pred_check
          %p550 = pneg %p256
        $region34: #{tpu_custom_call.1} parent=11 // pred_check_branch
          %552 = sbr.rel (%p550) target = $region36
        $region35: #{tpu_custom_call.1} parent=11 // pred_region
          _
        $region36: #{tpu_custom_call.1} parent=11 // pred_fallthru
          _
        // Predicated region
        $region37: #{tpu_custom_call.1} parent=11 // pred_check
          %p553 = pneg %p277
        $region38: #{tpu_custom_call.1} parent=11 // pred_check_branch
          %555 = sbr.rel (%p553) target = $region40
        $region39: #{tpu_custom_call.1} parent=11 // pred_region
          %s557 = ssub.s32 6144, 6144
          %558 = vsyncadd [#allocation4], %s557
          %s559 = sshll.u32 [#allocation3], 4
          %s560 = int_to_ptr.vmem [resolvable:$true] %s559
          %565 = dma.hbm_to_vmem [thread:$0]  %s9, 6144, %s560, [#allocation4], 192, 192, 12
        $region40: #{tpu_custom_call.1} parent=11 // pred_fallthru
          _
        // Predicated region
        $region41: #{tpu_custom_call.1} parent=11 // pred_check
          %p566 = pneg %p298
        $region42: #{tpu_custom_call.1} parent=11 // pred_check_branch
          %568 = sbr.rel (%p566) target = $region44
        $region43: #{tpu_custom_call.1} parent=11 // pred_region
          _
        $region44: #{tpu_custom_call.1} parent=11 // pred_fallthru
          _
        // Predicated region
        $region45: #{tpu_custom_call.1} parent=11 // pred_check
          %p569 = pneg %p319
        $region46: #{tpu_custom_call.1} parent=11 // pred_check_branch
          %571 = sbr.rel (%p569) target = $region48
        $region47: #{tpu_custom_call.1} parent=11 // pred_region
          %s573 = ssub.s32 2048, 2048
          %574 = vsyncadd [#allocation7], %s573
          %s575 = sshll.u32 [#allocation6], 4
          %s576 = int_to_ptr.vmem [resolvable:$true] %s575
          %581 = dma.hbm_to_vmem [thread:$0]  %s11, 2048, %s576, [#allocation7], 64, 64, 4
        $region48: #{tpu_custom_call.1} parent=11 // pred_fallthru
          _
        // Predicated region
        $region49: #{tpu_custom_call.1} parent=11 // pred_check
          %p582 = pneg %p340
        $region50: #{tpu_custom_call.1} parent=11 // pred_check_branch
          %584 = sbr.rel (%p582) target = $region52
        $region51: #{tpu_custom_call.1} parent=11 // pred_region
          _
        $region52: #{tpu_custom_call.1} parent=11 // pred_fallthru
          _
        // Predicated region
        $region53: #{tpu_custom_call.1} parent=11 // pred_check
          %p585 = pneg %p361
        $region54: #{tpu_custom_call.1} parent=11 // pred_check_branch
          %587 = sbr.rel (%p585) target = $region56
        $region55: #{tpu_custom_call.1} parent=11 // pred_region
          _
        $region56: #{tpu_custom_call.1} parent=11 // pred_fallthru
          _
        // Predicated region
        $region57: #{tpu_custom_call.1} parent=11 // pred_check
          %p588 = pneg %p382
        $region58: #{tpu_custom_call.1} parent=11 // pred_check_branch
          %590 = sbr.rel (%p588) target = $region60
        $region59: #{tpu_custom_call.1} parent=11 // pred_region
          _
        $region60: #{tpu_custom_call.1} parent=11 // pred_fallthru
          _
        // Predicated region
        $region61: #{tpu_custom_call.1} parent=11 // pred_check
          %p591 = pneg %p403
        $region62: #{tpu_custom_call.1} parent=11 // pred_check_branch
          %593 = sbr.rel (%p591) target = $region64
        $region63: #{tpu_custom_call.1} parent=11 // pred_region
          %s595 = ssub.s32 8192, 8192
          %596 = vsyncadd [#allocation7], %s595
          %s597 = sshll.u32 [#allocation8], 4
          %s598 = int_to_ptr.vmem [resolvable:$true] %s597
          %603 = dma.hbm_to_vmem [thread:$0]  %s15, 8192, %s598, [#allocation7], 256, 256, 16
        $region64: #{tpu_custom_call.1} parent=11 // pred_fallthru
          _
        // Predicated region
        $region65: #{tpu_custom_call.1} parent=11 // pred_check
          %p604 = pneg %p424
        $region66: #{tpu_custom_call.1} parent=11 // pred_check_branch
          %606 = sbr.rel (%p604) target = $region68
        $region67: #{tpu_custom_call.1} parent=11 // pred_region
          _
        $region68: #{tpu_custom_call.1} parent=11 // pred_fallthru
          _
        // Predicated region
        $region69: #{tpu_custom_call.1} parent=11 // pred_check
          %p607 = pneg %p445
        $region70: #{tpu_custom_call.1} parent=11 // pred_check_branch
          %609 = sbr.rel (%p607) target = $region72
        $region71: #{tpu_custom_call.1} parent=11 // pred_region
          %s611 = ssub.s32 8192, 8192
          %612 = vsyncadd [#allocation10], %s611
          %s613 = sshll.u32 [#allocation9], 4
          %s614 = int_to_ptr.vmem [resolvable:$true] %s613
          %619 = dma.hbm_to_vmem [thread:$0]  %s17, 8192, %s614, [#allocation10], 64, 64, 4
        $region72: #{tpu_custom_call.1} parent=11 // pred_fallthru
          _
        // Predicated region
        $region73: #{tpu_custom_call.1} parent=11 // pred_check
          %p620 = pneg %p466
        $region74: #{tpu_custom_call.1} parent=11 // pred_check_branch
          %622 = sbr.rel (%p620) target = $region76
        $region75: #{tpu_custom_call.1} parent=11 // pred_region
          _
        $region76: #{tpu_custom_call.1} parent=11 // pred_fallthru
          _
      $region12: #{tpu_custom_call.1} parent=5 // pred_fallthru
        _
      %p623 = scmp.lt.s32.totalorder %s36, 6
      // Predicated region
      $region77: #{tpu_custom_call.1} parent=5 // pred_check
        %p624 = pneg %p623
      $region78: #{tpu_custom_call.1} parent=5 // pred_check_branch
        %626 = sbr.rel (%p624) target = $region80
      $region79: #{tpu_custom_call.1} parent=5 // pred_region
        // Predicated region
        $region81: #{tpu_custom_call.1} parent=79 // pred_check
          %p627 = pneg %p70
        $region82: #{tpu_custom_call.1} parent=79 // pred_check_branch
          %629 = sbr.rel (%p627) target = $region84
        $region83: #{tpu_custom_call.1} parent=79 // pred_region
          %p630 = scmp.lt.s32.totalorder %s44, 2
          %s631 = scalar_select %p630, %s44, 2
          %p632 = scmp.lt.s32.totalorder %s43, 1
          %s633 = scalar_select %p632, %s43, 1
          %s634 = smul.addr %s631, 2
          %s635 = sadd.s32 %s633, %s634
          %s636 = smul.addr %s635, 8
          %s637 = scalar_lea.vmem %s0, %s636
        $region84: #{tpu_custom_call.1} parent=79 // pred_fallthru
          _
        // Predicated region
        $region85: #{tpu_custom_call.1} parent=79 // pred_check
          %p638 = pneg %p96
        $region86: #{tpu_custom_call.1} parent=79 // pred_check_branch
          %640 = sbr.rel (%p638) target = $region88
        $region87: #{tpu_custom_call.1} parent=79 // pred_region
          %p641 = scmp.lt.s32.totalorder %s43, 1
          %s642 = scalar_select %p641, %s43, 1
          %s643 = smul.addr %s642, 2
          %s644 = scalar_lea.vmem %s1, %s643
        $region88: #{tpu_custom_call.1} parent=79 // pred_fallthru
          _
        // Predicated region
        $region89: #{tpu_custom_call.1} parent=79 // pred_check
          %p645 = pneg %p124
        $region90: #{tpu_custom_call.1} parent=79 // pred_check_branch
          %647 = sbr.rel (%p645) target = $region92
        $region91: #{tpu_custom_call.1} parent=79 // pred_region
          %p648 = scmp.lt.s32.totalorder %s44, 2
          %s649 = scalar_select %p648, %s44, 2
          %p650 = scmp.lt.s32.totalorder %s43, 1
          %s651 = scalar_select %p650, %s43, 1
          %s652 = smul.addr %s649, 2
          %s653 = sadd.s32 %s651, %s652
          %s654 = scalar_lea.vmem %s2, %s653
        $region92: #{tpu_custom_call.1} parent=79 // pred_fallthru
          _
      $region80: #{tpu_custom_call.1} parent=5 // pred_fallthru
        _
      %p655 = scmp.le.s32.totalorder 1, %s36
      %p656 = scmp.lt.s32.totalorder %s36, 7
      %p657 = pnand %p655, %p656
      %p658 = pneg %p657
      // Predicated region
      $region93: #{tpu_custom_call.1} parent=5 // pred_check
        _
      $region94: #{tpu_custom_call.1} parent=5 // pred_check_branch
        %660 = sbr.rel (%p657) target = $region96
      $region95: #{tpu_custom_call.1} parent=5 // pred_region
        %s661 = ssub.s32 %s36, 1
        // Predicated region
        $region97: #{tpu_custom_call.1} parent=95 // pred_check
          %p662 = pneg %p277
        $region98: #{tpu_custom_call.1} parent=95 // pred_check_branch
          %664 = sbr.rel (%p662) target = $region100
        $region99: #{tpu_custom_call.1} parent=95 // pred_region
          %665 = dma.done [#allocation4], 6144
        $region100: #{tpu_custom_call.1} parent=95 // pred_fallthru
          _
        // Predicated region
        $region101: #{tpu_custom_call.1} parent=95 // pred_check
          %p666 = pneg %p319
        $region102: #{tpu_custom_call.1} parent=95 // pred_check_branch
          %668 = sbr.rel (%p666) target = $region104
        $region103: #{tpu_custom_call.1} parent=95 // pred_region
          %669 = dma.done [#allocation7], 2048
        $region104: #{tpu_custom_call.1} parent=95 // pred_fallthru
          _
        // Predicated region
        $region105: #{tpu_custom_call.1} parent=95 // pred_check
          %p670 = pneg %p403
        $region106: #{tpu_custom_call.1} parent=95 // pred_check_branch
          %672 = sbr.rel (%p670) target = $region108
        $region107: #{tpu_custom_call.1} parent=95 // pred_region
          %673 = dma.done [#allocation7], 8192
        $region108: #{tpu_custom_call.1} parent=95 // pred_fallthru
          _
        // Predicated region
        $region109: #{tpu_custom_call.1} parent=95 // pred_check
          %p674 = pneg %p445
        $region110: #{tpu_custom_call.1} parent=95 // pred_check_branch
          %676 = sbr.rel (%p674) target = $region112
        $region111: #{tpu_custom_call.1} parent=95 // pred_region
          %677 = dma.done [#allocation10], 8192
        $region112: #{tpu_custom_call.1} parent=95 // pred_fallthru
          _
        %p678 = scmp.lt.s32.totalorder %s46, 2
        %s679 = scalar_select %p678, %s46, 2
        %p680 = scmp.lt.s32.totalorder %s45, 1
        %s681 = scalar_select %p680, %s45, 1
        %s682 = smul.addr %s679, 2
        %s683 = sadd.s32 %s681, %s682
        %s684 = smul.addr %s683, 8
        %s685 = scalar_lea.vmem %s0, %s684
        %p686 = pneg %p76
        %p687 = pneg %p73
        %p688 = scmp.lt.s32.totalorder %s45, 1
        %s689 = scalar_select %p688, %s45, 1
        %s690 = smul.addr %s689, 2
        %s691 = scalar_lea.vmem %s1, %s690
        %p692 = pneg %p102
        %p693 = pneg %p99
        %p694 = scmp.lt.s32.totalorder %s46, 2
        %s695 = scalar_select %p694, %s46, 2
        %p696 = scmp.lt.s32.totalorder %s45, 1
        %s697 = scalar_select %p696, %s45, 1
        %s698 = smul.addr %s695, 2
        %s699 = sadd.s32 %s697, %s698
        %s700 = scalar_lea.vmem %s2, %s699
        %p701 = pneg %p130
        %p702 = pneg %p127
        %p703 = pneg %p151
        %p704 = pneg %p148
        %p705 = pneg %p172
        %p706 = pneg %p169
        %p707 = pneg %p193
        %p708 = pneg %p190
        %p709 = pneg %p214
        %p710 = pneg %p211
        %p711 = pneg %p235
        %p712 = pneg %p232
        %p713 = pneg %p256
        %p714 = pneg %p253
        %p715 = pneg %p277
        %p716 = pneg %p274
        %p717 = pneg %p298
        %p718 = pneg %p295
        %p719 = pneg %p319
        %p720 = pneg %p316
        %p721 = pneg %p340
        %p722 = pneg %p337
        %p723 = pneg %p361
        %p724 = pneg %p358
        %p725 = pneg %p382
        %p726 = pneg %p379
        %p727 = pneg %p403
        %p728 = pneg %p400
        %p729 = pneg %p424
        %p730 = pneg %p421
        %p731 = pneg %p445
        %p732 = pneg %p442
        %p733 = pneg %p466
        %p734 = pneg %p463
        %p735 = pneg %p494
        %p736 = pneg %p491
        %s737 = sand.u32 %s481, 1
        %s738 = scalar_lea.sflag [#allocation5], %s737
        %s739 = sand.u32 %s481, 1
        %s740 = smul.addr %s739, 2
        %s741 = scalar_lea.vmem [#allocation11], %s740
        %p742 = pneg %p520
        %p743 = pneg %p517
        %s744 = sand.u32 %s507, 1
        %s745 = scalar_lea.sflag [#allocation13], %s744
        %s746 = sand.u32 %s507, 1
        %s747 = smul.addr %s746, 2
        %s748 = scalar_lea.vmem [#allocation12], %s747
        %p749 = scmp.lt.s32.totalorder %s46, 2
        %s750 = scalar_select %p749, %s46, 2
        %p751 = scmp.lt.s32.totalorder %s45, 1
        %s752 = scalar_select %p751, %s45, 1
        %s753 = smul.addr %s750, 2
        %s754 = sadd.s32 %s752, %s753
        %s755 = smul.addr %s754, 8
        %s756 = scalar_lea.vmem %s0, %s755
        %p757 = scmp.lt.s32.totalorder %s45, 1
        %s758 = scalar_select %p757, %s45, 1
        %s759 = smul.addr %s758, 2
        %s760 = scalar_lea.vmem %s1, %s759
        %p761 = scmp.lt.s32.totalorder %s46, 2
        %s762 = scalar_select %p761, %s46, 2
        %p763 = scmp.lt.s32.totalorder %s45, 1
        %s764 = scalar_select %p763, %s45, 1
        %s765 = smul.addr %s762, 2
        %s766 = sadd.s32 %s764, %s765
        %s767 = scalar_lea.vmem %s2, %s766
        %p769 = scmp.eq.s32.totalorder %s46, 0
        // Predicated region
        $region113: #{tpu_custom_call.1} parent=95 // pred_check
          %p770 = pneg %p769
        $region114: #{tpu_custom_call.1} parent=95 // pred_check_branch
          %772 = sbr.rel (%p770) target = $region116
        $region115: #{tpu_custom_call.1} parent=95 // pred_region
          %v773 = vld [vmem:[%s760] sm:$0x3]
          %774 = vst [vmem:[#allocation2] sm:$0x3] %v773
        $region116: #{tpu_custom_call.1} parent=95 // pred_fallthru
          _
        %v775 = vld [vmem:[%s756] sm:$0x3f]
        %v776 = vld [vmem:[#allocation2] sm:$0x3]
        %v777 = vld [vmem:[%s767] sm:$0x1]
        %v778 = vld [vmem:[%s3] sm:$0x3f]
        %v779 = vld [vmem:[%s4] sm:$0x3]
        %v780 = vld [vmem:[%s5] sm:$0x1]
        %v781 = vld [vmem:[%s6] sm:$0x1]
        %v782 = vadd.f32 %v775, %v778
        %v784 = vlaneseq
        %v785 = vshrl.u32 %v784, 7
        %v786 = vsub.s32 0, %v785
        %v787 = vrot.slane %v777, %v786
        %v789 = vmul.f32 %v776, %v787
        %v790 = vsub.f32 1.0, %v777
        %v792 = vlaneseq
        %v793 = vshrl.u32 %v792, 7
        %v794 = vsub.s32 0, %v793
        %v795 = vrot.slane %v790, %v794
        %v797 = vmul.f32 %v795, %v779
        %v798 = vadd.f32 %v789, %v797
        %v800 = vrot.slane %v798, 2
        %vm802 = vcmask 1045504
        %v803 = vsel %vm802, %v782, %v800
        %804 = vadd.xlane.f32.xlu0 %v803
        %v805 = vpop.xlane.xlu0 %804
        %v806 = vrcp.pop 128.0
        %v807 = vmul.f32 %v805, %v806
        %v808 = vsub.f32 %v803, %v807
        %v809 = vmul.f32 %v808, %v808
        %810 = vadd.xlane.f32.xlu0 %v809
        %v811 = vpop.xlane.xlu0 %810
        %v812 = vmul.f32 %v811, %v806
        %v813 = vadd.f32 %v812, 1e-05
        %v814 = vrsqrt.pop %v813
        %v815 = vmul.f32 %v808, %v814
        %v817 = vlaneseq
        %v818 = vshrl.u32 %v817, 7
        %v819 = vsub.s32 0, %v818
        %v820 = vrot.slane %v780, %v819
        %v822 = vmul.f32 %v815, %v820
        %v824 = vlaneseq
        %v825 = vshrl.u32 %v824, 7
        %v826 = vsub.s32 0, %v825
        %v827 = vrot.slane %v781, %v826
        %v829 = vadd.f32 %v822, %v827
        %v830 = vld [vmem:[%s7] sm:$0x1]
        %v831 = vld [vmem:[%s8] sm:$0x1]
        %v832 = vld [vmem:[#allocation3] sm:$0xff]
        %v833 = vld [vmem:[#allocation3 + $0x8] sm:$0xf]
        %v834 = vld [vmem:[#allocation3 + $0xc] sm:$0xff]
        %v835 = vld [vmem:[#allocation3 + $0x14] sm:$0xf]
        %v836 = vld [vmem:[#allocation3 + $0x18] sm:$0xff]
        %v837 = vld [vmem:[#allocation3 + $0x20] sm:$0xf]
        %v838 = vld [vmem:[#allocation3 + $0x24] sm:$0xff]
        %v839 = vld [vmem:[#allocation3 + $0x2c] sm:$0xf]
        %v840 = vld [vmem:[#allocation3 + $0x30] sm:$0xff]
        %v841 = vld [vmem:[#allocation3 + $0x38] sm:$0xf]
        %v842 = vld [vmem:[#allocation3 + $0x3c] sm:$0xff]
        %v843 = vld [vmem:[#allocation3 + $0x44] sm:$0xf]
        %v844 = vld [vmem:[#allocation3 + $0x48] sm:$0xff]
        %v845 = vld [vmem:[#allocation3 + $0x50] sm:$0xf]
        %v846 = vld [vmem:[#allocation3 + $0x54] sm:$0xff]
        %v847 = vld [vmem:[#allocation3 + $0x5c] sm:$0xf]
        %v848 = vld [vmem:[#allocation3 + $0x60] sm:$0xff]
        %v849 = vld [vmem:[#allocation3 + $0x68] sm:$0xf]
        %v850 = vld [vmem:[#allocation3 + $0x6c] sm:$0xff]
        %v851 = vld [vmem:[#allocation3 + $0x74] sm:$0xf]
        %v852 = vld [vmem:[#allocation3 + $0x78] sm:$0xff]
        %v853 = vld [vmem:[#allocation3 + $0x80] sm:$0xf]
        %v854 = vld [vmem:[#allocation3 + $0x84] sm:$0xff]
        %v855 = vld [vmem:[#allocation3 + $0x8c] sm:$0xf]
        %v856 = vld [vmem:[#allocation3 + $0x90] sm:$0xff]
        %v857 = vld [vmem:[#allocation3 + $0x98] sm:$0xf]
        %v858 = vld [vmem:[#allocation3 + $0x9c] sm:$0xff]
        %v859 = vld [vmem:[#allocation3 + $0xa4] sm:$0xf]
        %v860 = vld [vmem:[#allocation3 + $0xa8] sm:$0xff]
        %v861 = vld [vmem:[#allocation3 + $0xb0] sm:$0xf]
        %v862 = vld [vmem:[#allocation3 + $0xb4] sm:$0xff]
        %v863 = vld [vmem:[#allocation3 + $0xbc] sm:$0xf]
        %v864 = vld [vmem:[%s10] sm:$0x7]
        %v865 = vld [vmem:[#allocation6] sm:$0xf]
        %v866 = vld [vmem:[#allocation6 + $0x4] sm:$0xf]
        %v867 = vld [vmem:[#allocation6 + $0x8] sm:$0xf]
        %v868 = vld [vmem:[#allocation6 + $0xc] sm:$0xf]
        %v869 = vld [vmem:[#allocation6 + $0x10] sm:$0xf]
        %v870 = vld [vmem:[#allocation6 + $0x14] sm:$0xf]
        %v871 = vld [vmem:[#allocation6 + $0x18] sm:$0xf]
        %v872 = vld [vmem:[#allocation6 + $0x1c] sm:$0xf]
        %v873 = vld [vmem:[#allocation6 + $0x20] sm:$0xf]
        %v874 = vld [vmem:[#allocation6 + $0x24] sm:$0xf]
        %v875 = vld [vmem:[#allocation6 + $0x28] sm:$0xf]
        %v876 = vld [vmem:[#allocation6 + $0x2c] sm:$0xf]
        %v877 = vld [vmem:[#allocation6 + $0x30] sm:$0xf]
        %v878 = vld [vmem:[#allocation6 + $0x34] sm:$0xf]
        %v879 = vld [vmem:[#allocation6 + $0x38] sm:$0xf]
        %v880 = vld [vmem:[#allocation6 + $0x3c] sm:$0xf]
        %v881 = vld [vmem:[%s12] sm:$0x1]
        %v882 = vld [vmem:[%s13] sm:$0x1]
        %v883 = vld [vmem:[%s14] sm:$0x1]
        %v884 = vld [vmem:[#allocation8] sm:$0xff]
        %v885 = vld [vmem:[#allocation8 + $0x8] sm:$0xff]
        %v886 = vld [vmem:[#allocation8 + $0x10] sm:$0xff]
        %v887 = vld [vmem:[#allocation8 + $0x18] sm:$0xff]
        %v888 = vld [vmem:[#allocation8 + $0x20] sm:$0xff]
        %v889 = vld [vmem:[#allocation8 + $0x28] sm:$0xff]
        %v890 = vld [vmem:[#allocation8 + $0x30] sm:$0xff]
        %v891 = vld [vmem:[#allocation8 + $0x38] sm:$0xff]
        %v892 = vld [vmem:[#allocation8 + $0x40] sm:$0xff]
        %v893 = vld [vmem:[#allocation8 + $0x48] sm:$0xff]
        %v894 = vld [vmem:[#allocation8 + $0x50] sm:$0xff]
        %v895 = vld [vmem:[#allocation8 + $0x58] sm:$0xff]
        %v896 = vld [vmem:[#allocation8 + $0x60] sm:$0xff]
        %v897 = vld [vmem:[#allocation8 + $0x68] sm:$0xff]
        %v898 = vld [vmem:[#allocation8 + $0x70] sm:$0xff]
        %v899 = vld [vmem:[#allocation8 + $0x78] sm:$0xff]
        %v900 = vld [vmem:[#allocation8 + $0x80] sm:$0xff]
        %v901 = vld [vmem:[#allocation8 + $0x88] sm:$0xff]
        %v902 = vld [vmem:[#allocation8 + $0x90] sm:$0xff]
        %v903 = vld [vmem:[#allocation8 + $0x98] sm:$0xff]
        %v904 = vld [vmem:[#allocation8 + $0xa0] sm:$0xff]
        %v905 = vld [vmem:[#allocation8 + $0xa8] sm:$0xff]
        %v906 = vld [vmem:[#allocation8 + $0xb0] sm:$0xff]
        %v907 = vld [vmem:[#allocation8 + $0xb8] sm:$0xff]
        %v908 = vld [vmem:[#allocation8 + $0xc0] sm:$0xff]
        %v909 = vld [vmem:[#allocation8 + $0xc8] sm:$0xff]
        %v910 = vld [vmem:[#allocation8 + $0xd0] sm:$0xff]
        %v911 = vld [vmem:[#allocation8 + $0xd8] sm:$0xff]
        %v912 = vld [vmem:[#allocation8 + $0xe0] sm:$0xff]
        %v913 = vld [vmem:[#allocation8 + $0xe8] sm:$0xff]
        %v914 = vld [vmem:[#allocation8 + $0xf0] sm:$0xff]
        %v915 = vld [vmem:[#allocation8 + $0xf8] sm:$0xff]
        %v916 = vld [vmem:[%s16] sm:$0xf]
        %v917 = vld [vmem:[#allocation9] sm:$0xf]
        %v918 = vld [vmem:[#allocation9 + $0x4] sm:$0xf]
        %v919 = vld [vmem:[#allocation9 + $0x8] sm:$0xf]
        %v920 = vld [vmem:[#allocation9 + $0xc] sm:$0xf]
        %v921 = vld [vmem:[#allocation9 + $0x10] sm:$0xf]
        %v922 = vld [vmem:[#allocation9 + $0x14] sm:$0xf]
        %v923 = vld [vmem:[#allocation9 + $0x18] sm:$0xf]
        %v924 = vld [vmem:[#allocation9 + $0x1c] sm:$0xf]
        %v925 = vld [vmem:[#allocation9 + $0x20] sm:$0xf]
        %v926 = vld [vmem:[#allocation9 + $0x24] sm:$0xf]
        %v927 = vld [vmem:[#allocation9 + $0x28] sm:$0xf]
        %v928 = vld [vmem:[#allocation9 + $0x2c] sm:$0xf]
        %v929 = vld [vmem:[#allocation9 + $0x30] sm:$0xf]
        %v930 = vld [vmem:[#allocation9 + $0x34] sm:$0xf]
        %v931 = vld [vmem:[#allocation9 + $0x38] sm:$0xf]
        %v932 = vld [vmem:[#allocation9 + $0x3c] sm:$0xf]
        %v933 = vld [vmem:[#allocation9 + $0x40] sm:$0xf]
        %v934 = vld [vmem:[#allocation9 + $0x44] sm:$0xf]
        %v935 = vld [vmem:[#allocation9 + $0x48] sm:$0xf]
        %v936 = vld [vmem:[#allocation9 + $0x4c] sm:$0xf]
        %v937 = vld [vmem:[#allocation9 + $0x50] sm:$0xf]
        %v938 = vld [vmem:[#allocation9 + $0x54] sm:$0xf]
        %v939 = vld [vmem:[#allocation9 + $0x58] sm:$0xf]
        %v940 = vld [vmem:[#allocation9 + $0x5c] sm:$0xf]
        %v941 = vld [vmem:[#allocation9 + $0x60] sm:$0xf]
        %v942 = vld [vmem:[#allocation9 + $0x64] sm:$0xf]
        %v943 = vld [vmem:[#allocation9 + $0x68] sm:$0xf]
        %v944 = vld [vmem:[#allocation9 + $0x6c] sm:$0xf]
        %v945 = vld [vmem:[#allocation9 + $0x70] sm:$0xf]
        %v946 = vld [vmem:[#allocation9 + $0x74] sm:$0xf]
        %v947 = vld [vmem:[#allocation9 + $0x78] sm:$0xf]
        %v948 = vld [vmem:[#allocation9 + $0x7c] sm:$0xf]
        %v949 = vld [vmem:[#allocation9 + $0x80] sm:$0xf]
        %v950 = vld [vmem:[#allocation9 + $0x84] sm:$0xf]
        %v951 = vld [vmem:[#allocation9 + $0x88] sm:$0xf]
        %v952 = vld [vmem:[#allocation9 + $0x8c] sm:$0xf]
        %v953 = vld [vmem:[#allocation9 + $0x90] sm:$0xf]
        %v954 = vld [vmem:[#allocation9 + $0x94] sm:$0xf]
        %v955 = vld [vmem:[#allocation9 + $0x98] sm:$0xf]
        %v956 = vld [vmem:[#allocation9 + $0x9c] sm:$0xf]
        %v957 = vld [vmem:[#allocation9 + $0xa0] sm:$0xf]
        %v958 = vld [vmem:[#allocation9 + $0xa4] sm:$0xf]
        %v959 = vld [vmem:[#allocation9 + $0xa8] sm:$0xf]
        %v960 = vld [vmem:[#allocation9 + $0xac] sm:$0xf]
        %v961 = vld [vmem:[#allocation9 + $0xb0] sm:$0xf]
        %v962 = vld [vmem:[#allocation9 + $0xb4] sm:$0xf]
        %v963 = vld [vmem:[#allocation9 + $0xb8] sm:$0xf]
        %v964 = vld [vmem:[#allocation9 + $0xbc] sm:$0xf]
        %v965 = vld [vmem:[#allocation9 + $0xc0] sm:$0xf]
        %v966 = vld [vmem:[#allocation9 + $0xc4] sm:$0xf]
        %v967 = vld [vmem:[#allocation9 + $0xc8] sm:$0xf]
        %v968 = vld [vmem:[#allocation9 + $0xcc] sm:$0xf]
        %v969 = vld [vmem:[#allocation9 + $0xd0] sm:$0xf]
        %v970 = vld [vmem:[#allocation9 + $0xd4] sm:$0xf]
        %v971 = vld [vmem:[#allocation9 + $0xd8] sm:$0xf]
        %v972 = vld [vmem:[#allocation9 + $0xdc] sm:$0xf]
        %v973 = vld [vmem:[#allocation9 + $0xe0] sm:$0xf]
        %v974 = vld [vmem:[#allocation9 + $0xe4] sm:$0xf]
        %v975 = vld [vmem:[#allocation9 + $0xe8] sm:$0xf]
        %v976 = vld [vmem:[#allocation9 + $0xec] sm:$0xf]
        %v977 = vld [vmem:[#allocation9 + $0xf0] sm:$0xf]
        %v978 = vld [vmem:[#allocation9 + $0xf4] sm:$0xf]
        %v979 = vld [vmem:[#allocation9 + $0xf8] sm:$0xf]
        %v980 = vld [vmem:[#allocation9 + $0xfc] sm:$0xf]
        %v981 = vld [vmem:[%s18] sm:$0x1]
        %982 = vadd.xlane.f32.xlu0 %v829
        %v983 = vpop.xlane.xlu0 %982
        %v984 = vmul.f32 %v983, %v806
        %v985 = vsub.f32 %v829, %v984
        %v986 = vmul.f32 %v985, %v985
        %987 = vadd.xlane.f32.xlu0 %v986
        %v988 = vpop.xlane.xlu0 %987
        %v989 = vmul.f32 %v988, %v806
        %v990 = vadd.f32 %v989, 1e-05
        %v991 = vrsqrt.pop %v990
        %v992 = vmul.f32 %v985, %v991
        %v994 = vlaneseq
        %v995 = vshrl.u32 %v994, 7
        %v996 = vsub.s32 0, %v995
        %v997 = vrot.slane %v830, %v996
        %v999 = vmul.f32 %v992, %v997
        %v1001 = vlaneseq
        %v1002 = vshrl.u32 %v1001, 7
        %v1003 = vsub.s32 0, %v1002
        %v1004 = vrot.slane %v831, %v1003
        %v1006 = vadd.f32 %v999, %v1004
        %v1007 = vpack.c.bf16 %v1006, %v1006
        %v1009 = vlaneseq
        %v1010 = vshrl.u32 %v1009, 7
        %v1011 = vsub.s32 0, %v1010
        %v1012 = vrot.slane %v864, %v1011
        %v1013 = vlaneseq
        %v1014 = vshrl.u32 %v1013, 7
        %v1015 = vsub.s32 1, %v1014
        %v1016 = vrot.slane %v864, %v1015
        %v1017 = vlaneseq
        %v1018 = vshrl.u32 %v1017, 7
        %v1019 = vsub.s32 2, %v1018
        %v1020 = vrot.slane %v864, %v1019
        %v1056 = vunpack.c.l.b16 %v832
        %v1057 = vunpack.c.h.b16 %v832
        %v1058 = vunpack.c.l.b16 %v833
        %v1059 = vunpack.c.l.b16 %v834
        %v1060 = vunpack.c.h.b16 %v834
        %v1061 = vunpack.c.l.b16 %v835
        %v1062 = vunpack.c.l.b16 %v836
        %v1063 = vunpack.c.h.b16 %v836
        %v1064 = vunpack.c.l.b16 %v837
        %v1065 = vunpack.c.l.b16 %v838
        %v1066 = vunpack.c.h.b16 %v838
        %v1067 = vunpack.c.l.b16 %v839
        %v1068 = vunpack.c.l.b16 %v840
        %v1069 = vunpack.c.h.b16 %v840
        %v1070 = vunpack.c.l.b16 %v841
        %v1071 = vunpack.c.l.b16 %v842
        %v1072 = vunpack.c.h.b16 %v842
        %v1073 = vunpack.c.l.b16 %v843
        %v1074 = vunpack.c.l.b16 %v844
        %v1075 = vunpack.c.h.b16 %v844
        %v1076 = vunpack.c.l.b16 %v845
        %v1077 = vunpack.c.l.b16 %v846
        %v1078 = vunpack.c.h.b16 %v846
        %v1079 = vunpack.c.l.b16 %v847
        %v1080 = vunpack.c.l.b16 %v848
        %v1081 = vunpack.c.h.b16 %v848
        %v1082 = vunpack.c.l.b16 %v849
        %v1083 = vunpack.c.l.b16 %v850
        %v1084 = vunpack.c.h.b16 %v850
        %v1085 = vunpack.c.l.b16 %v851
        %v1086 = vunpack.c.l.b16 %v852
        %v1087 = vunpack.c.h.b16 %v852
        %v1088 = vunpack.c.l.b16 %v853
        %v1089 = vunpack.c.l.b16 %v854
        %v1090 = vunpack.c.h.b16 %v854
        %v1091 = vunpack.c.l.b16 %v855
        %v1092 = vunpack.c.l.b16 %v856
        %v1093 = vunpack.c.h.b16 %v856
        %v1094 = vunpack.c.l.b16 %v857
        %v1095 = vunpack.c.l.b16 %v858
        %v1096 = vunpack.c.h.b16 %v858
        %v1097 = vunpack.c.l.b16 %v859
        %v1098 = vunpack.c.l.b16 %v860
        %v1099 = vunpack.c.h.b16 %v860
        %v1100 = vunpack.c.l.b16 %v861
        %v1101 = vunpack.c.l.b16 %v862
        %v1102 = vunpack.c.h.b16 %v862
        %v1103 = vunpack.c.l.b16 %v863
        %v1104 = vpack.c.b16 %v1059, %v1056
        %v1105 = vpack.c.b16 %v1060, %v1057
        %v1106 = vpack.c.b16 %v1061, %v1058
        %v1107 = vpack.c.b16 %v1065, %v1062
        %v1108 = vpack.c.b16 %v1066, %v1063
        %v1109 = vpack.c.b16 %v1067, %v1064
        %v1110 = vpack.c.b16 %v1071, %v1068
        %v1111 = vpack.c.b16 %v1072, %v1069
        %v1112 = vpack.c.b16 %v1073, %v1070
        %v1113 = vpack.c.b16 %v1077, %v1074
        %v1114 = vpack.c.b16 %v1078, %v1075
        %v1115 = vpack.c.b16 %v1079, %v1076
        %v1116 = vpack.c.b16 %v1083, %v1080
        %v1117 = vpack.c.b16 %v1084, %v1081
        %v1118 = vpack.c.b16 %v1085, %v1082
        %v1119 = vpack.c.b16 %v1089, %v1086
        %v1120 = vpack.c.b16 %v1090, %v1087
        %v1121 = vpack.c.b16 %v1091, %v1088
        %v1122 = vpack.c.b16 %v1095, %v1092
        %v1123 = vpack.c.b16 %v1096, %v1093
        %v1124 = vpack.c.b16 %v1097, %v1094
        %v1125 = vpack.c.b16 %v1101, %v1098
        %v1126 = vpack.c.b16 %v1102, %v1099
        %v1127 = vpack.c.b16 %v1103, %v1100
        %1152 = vmatprep.subr.bf16.mxu0 %v1105
        %1153 = vmatpush1.bf16.msra.mxu0 %v1104
        %1154 = vmatprep.subr.bf16.mxu0 %v1108
        %1155 = vmatpush1.bf16.msra.mxu0 %v1107
        %1156 = vmatprep.subr.bf16.mxu0 %v1111
        %1157 = vmatpush1.bf16.msra.mxu0 %v1110
        %1158 = vmatprep.subr.bf16.mxu0 %v1114
        %1159 = vmatpush1.bf16.msra.mxu0 %v1113
        %1160 = vmatprep.subr.bf16.mxu0 %v1117
        %1161 = vmatpush1.bf16.msra.mxu0 %v1116
        %1162 = vmatprep.subr.bf16.mxu0 %v1120
        %1163 = vmatpush1.bf16.msra.mxu0 %v1119
        %1164 = vmatprep.subr.bf16.mxu0 %v1123
        %1165 = vmatpush1.bf16.msra.mxu0 %v1122
        %1166 = vmatprep.subr.bf16.mxu0 %v1126
        %1167 = vmatpush1.bf16.msra.mxu0 %v1125
        %1168 = vmatprep.subr.bf16.mxu0 0
        %1169 = vmatpush1.bf16.msra.mxu0 0
        %1170 = vmatprep.subr.bf16.mxu0 0
        %1171 = vmatpush1.bf16.msra.mxu0 0
        %1172 = vmatprep.subr.bf16.mxu0 0
        %1173 = vmatpush1.bf16.msra.mxu0 0
        %1174 = vmatprep.subr.bf16.mxu0 0
        %1175 = vmatpush1.bf16.msra.mxu0 0
        %1176 = vmatprep.subr.bf16.mxu0 0
        %1177 = vmatpush1.bf16.msra.mxu0 0
        %1178 = vmatprep.subr.bf16.mxu0 0
        %1179 = vmatpush1.bf16.msra.mxu0 0
        %1180 = vmatprep.subr.bf16.mxu0 0
        %1181 = vmatpush1.bf16.msra.mxu0 0
        %1182 = vmatprep.subr.bf16.mxu0 0
        %1183 = vmatpush1.bf16.msra.mxu0 0
        %1184 = vmatprep.mubr.bf16.mxu0 0
        %1185 = vmatmul.mubr.bf16.gmra.mrb[0].mxu0 %v1007
        %v1186 = vpop.f32.mrb[0].mxu0
        %v1187 = vadd.f32 %v1012, %v1186
        %v1188 = vpop.f32.mrb[0].mxu0
        %v1189 = vadd.f32 %v1016, %v1188
        %v1190 = vpop.f32.mrb[0].mxu0
        %v1191 = vpop.f32.mrb[0].mxu0
        %1192 = vdwg.mxu0
        %1193 = vmatprep.subr.bf16.mxu0 0
        %1194 = vmatpush1.bf16.msra.mxu0 %v1106
        %1195 = vmatprep.subr.bf16.mxu0 0
        %1196 = vmatpush1.bf16.msra.mxu0 %v1109
        %1197 = vmatprep.subr.bf16.mxu0 0
        %1198 = vmatpush1.bf16.msra.mxu0 %v1112
        %1199 = vmatprep.subr.bf16.mxu0 0
        %1200 = vmatpush1.bf16.msra.mxu0 %v1115
        %1201 = vmatprep.subr.bf16.mxu0 0
        %1202 = vmatpush1.bf16.msra.mxu0 %v1118
        %1203 = vmatprep.subr.bf16.mxu0 0
        %1204 = vmatpush1.bf16.msra.mxu0 %v1121
        %1205 = vmatprep.subr.bf16.mxu0 0
        %1206 = vmatpush1.bf16.msra.mxu0 %v1124
        %1207 = vmatprep.subr.bf16.mxu0 0
        %1208 = vmatpush1.bf16.msra.mxu0 %v1127
        %1209 = vmatprep.subr.bf16.mxu0 0
        %1210 = vmatpush1.bf16.msra.mxu0 0
        %1211 = vmatprep.subr.bf16.mxu0 0
        %1212 = vmatpush1.bf16.msra.mxu0 0
        %1213 = vmatprep.subr.bf16.mxu0 0
        %1214 = vmatpush1.bf16.msra.mxu0 0
        %1215 = vmatprep.subr.bf16.mxu0 0
        %1216 = vmatpush1.bf16.msra.mxu0 0
        %1217 = vmatprep.subr.bf16.mxu0 0
        %1218 = vmatpush1.bf16.msra.mxu0 0
        %1219 = vmatprep.subr.bf16.mxu0 0
        %1220 = vmatpush1.bf16.msra.mxu0 0
        %1221 = vmatprep.subr.bf16.mxu0 0
        %1222 = vmatpush1.bf16.msra.mxu0 0
        %1223 = vmatprep.subr.bf16.mxu0 0
        %1224 = vmatpush1.bf16.msra.mxu0 0
        %1225 = vmatprep.mubr.bf16.mxu0 0
        %1226 = vmatmul.mubr.bf16.gmra.mrb[0].mxu0 %v1007
        %v1227 = vpop.f32.mrb[0].mxu0
        %v1228 = vadd.f32 %v1020, %v1227
        %v1229 = vpop.f32.mrb[0].mxu0
        %v1230 = vpop.f32.mrb[0].mxu0
        %v1231 = vpop.f32.mrb[0].mxu0
        %1232 = vdwg.mxu0
        %v1233 = vmul.f32 %v1187, 0.17677669
        %1235 = vrot.lane.b32.xlu0 %v1233, 96
        %v1236 = vpop.permute.xlu0 %1235
        %1238 = vrot.lane.b32.xlu0 %v1233, 64
        %v1239 = vpop.permute.xlu0 %1238
        %1241 = vrot.lane.b32.xlu0 %v1233, 32
        %v1242 = vpop.permute.xlu0 %1241
        %v1244 = vpack.c.bf16 %v1233, %v1233
        %v1245 = vpack.c.bf16 %v1236, %v1236
        %v1246 = vpack.c.bf16 %v1239, %v1239
        %v1247 = vpack.c.bf16 %v1242, %v1242
        %1249 = vrot.lane.b32.xlu0 %v1189, 96
        %v1250 = vpop.permute.xlu0 %1249
        %1252 = vrot.lane.b32.xlu0 %v1189, 64
        %v1253 = vpop.permute.xlu0 %1252
        %1255 = vrot.lane.b32.xlu0 %v1189, 32
        %v1256 = vpop.permute.xlu0 %1255
        %v1258 = vpack.c.bf16 %v1189, %v1189
        %v1259 = vpack.c.bf16 %v1250, %v1250
        %v1260 = vpack.c.bf16 %v1253, %v1253
        %v1261 = vpack.c.bf16 %v1256, %v1256
        %1263 = vrot.lane.b32.xlu0 %v1228, 96
        %v1264 = vpop.permute.xlu0 %1263
        %1266 = vrot.lane.b32.xlu0 %v1228, 64
        %v1267 = vpop.permute.xlu0 %1266
        %1269 = vrot.lane.b32.xlu0 %v1228, 32
        %v1270 = vpop.permute.xlu0 %1269
        %v1272 = vpack.c.bf16 %v1228, %v1228
        %v1273 = vpack.c.bf16 %v1264, %v1264
        %v1274 = vpack.c.bf16 %v1267, %v1267
        %v1275 = vpack.c.bf16 %v1270, %v1270
        %vm1276 = vcmask 261120
        %v1278 = vsel %vm1276, %v1244, 0
        %v1281 = vsel %vm1276, %v1258, 0
        %1283 = vmatprep.subr.bf16.mxu0 0
        %1284 = vmatpush1.bf16.xpose.msra.mxu0 %v1281
        %1285 = vmatprep.subr.bf16.mxu0 0
        %1286 = vmatpush1.bf16.xpose.msra.mxu0 0
        %1287 = vmatprep.subr.bf16.mxu0 0
        %1288 = vmatpush1.bf16.xpose.msra.mxu0 0
        %1289 = vmatprep.subr.bf16.mxu0 0
        %1290 = vmatpush1.bf16.xpose.msra.mxu0 0
        %1291 = vmatprep.subr.bf16.mxu0 0
        %1292 = vmatpush1.bf16.xpose.msra.mxu0 0
        %1293 = vmatprep.subr.bf16.mxu0 0
        %1294 = vmatpush1.bf16.xpose.msra.mxu0 0
        %1295 = vmatprep.subr.bf16.mxu0 0
        %1296 = vmatpush1.bf16.xpose.msra.mxu0 0
        %1297 = vmatprep.subr.bf16.mxu0 0
        %1298 = vmatpush1.bf16.xpose.msra.mxu0 0
        %1299 = vmatprep.subr.bf16.mxu0 0
        %1300 = vmatpush1.bf16.xpose.msra.mxu0 0
        %1301 = vmatprep.subr.bf16.mxu0 0
        %1302 = vmatpush1.bf16.xpose.msra.mxu0 0
        %1303 = vmatprep.subr.bf16.mxu0 0
        %1304 = vmatpush1.bf16.xpose.msra.mxu0 0
        %1305 = vmatprep.subr.bf16.mxu0 0
        %1306 = vmatpush1.bf16.xpose.msra.mxu0 0
        %1307 = vmatprep.subr.bf16.mxu0 0
        %1308 = vmatpush1.bf16.xpose.msra.mxu0 0
        %1309 = vmatprep.subr.bf16.mxu0 0
        %1310 = vmatpush1.bf16.xpose.msra.mxu0 0
        %1311 = vmatprep.subr.bf16.mxu0 0
        %1312 = vmatpush1.bf16.xpose.msra.mxu0 0
        %1313 = vmatprep.subr.bf16.mxu0 0
        %1314 = vmatpush1.bf16.xpose.msra.mxu0 0
        %1315 = vmatprep.mubr.bf16.mxu0 0
        %1316 = vmatmul.mubr.bf16.gmra.mrb[0].mxu0 %v1278
        %v1317 = vpop.f32.mrb[0].mxu0
        %v1318 = vadd.f32 0.0, %v1317
        %v1319 = vpop.f32.mrb[0].mxu0
        %v1320 = vpop.f32.mrb[0].mxu0
        %v1321 = vpop.f32.mrb[0].mxu0
        %1322 = vdwg.mxu0
        %v1324 = vsel %vm1276, %v1245, 0
        %v1327 = vsel %vm1276, %v1259, 0
        %1329 = vmatprep.subr.bf16.mxu0 0
        %1330 = vmatpush1.bf16.xpose.msra.mxu0 %v1327
        %1331 = vmatprep.subr.bf16.mxu0 0
        %1332 = vmatpush1.bf16.xpose.msra.mxu0 0
        %1333 = vmatprep.subr.bf16.mxu0 0
        %1334 = vmatpush1.bf16.xpose.msra.mxu0 0
        %1335 = vmatprep.subr.bf16.mxu0 0
        %1336 = vmatpush1.bf16.xpose.msra.mxu0 0
        %1337 = vmatprep.subr.bf16.mxu0 0
        %1338 = vmatpush1.bf16.xpose.msra.mxu0 0
        %1339 = vmatprep.subr.bf16.mxu0 0
        %1340 = vmatpush1.bf16.xpose.msra.mxu0 0
        %1341 = vmatprep.subr.bf16.mxu0 0
        %1342 = vmatpush1.bf16.xpose.msra.mxu0 0
        %1343 = vmatprep.subr.bf16.mxu0 0
        %1344 = vmatpush1.bf16.xpose.msra.mxu0 0
        %1345 = vmatprep.subr.bf16.mxu0 0
        %1346 = vmatpush1.bf16.xpose.msra.mxu0 0
        %1347 = vmatprep.subr.bf16.mxu0 0
        %1348 = vmatpush1.bf16.xpose.msra.mxu0 0
        %1349 = vmatprep.subr.bf16.mxu0 0
        %1350 = vmatpush1.bf16.xpose.msra.mxu0 0
        %1351 = vmatprep.subr.bf16.mxu0 0
        %1352 = vmatpush1.bf16.xpose.msra.mxu0 0
        %1353 = vmatprep.subr.bf16.mxu0 0
        %1354 = vmatpush1.bf16.xpose.msra.mxu0 0
        %1355 = vmatprep.subr.bf16.mxu0 0
        %1356 = vmatpush1.bf16.xpose.msra.mxu0 0
        %1357 = vmatprep.subr.bf16.mxu0 0
        %1358 = vmatpush1.bf16.xpose.msra.mxu0 0
        %1359 = vmatprep.subr.bf16.mxu0 0
        %1360 = vmatpush1.bf16.xpose.msra.mxu0 0
        %1361 = vmatprep.mubr.bf16.mxu0 0
        %1362 = vmatmul.mubr.bf16.gmra.mrb[0].mxu0 %v1324
        %v1363 = vpop.f32.mrb[0].mxu0
        %v1364 = vadd.f32 0.0, %v1363
        %v1365 = vpop.f32.mrb[0].mxu0
        %v1366 = vpop.f32.mrb[0].mxu0
        %v1367 = vpop.f32.mrb[0].mxu0
        %1368 = vdwg.mxu0
        %v1370 = vsel %vm1276, %v1246, 0
        %v1373 = vsel %vm1276, %v1260, 0
        %1375 = vmatprep.subr.bf16.mxu0 0
        %1376 = vmatpush1.bf16.xpose.msra.mxu0 %v1373
        %1377 = vmatprep.subr.bf16.mxu0 0
        %1378 = vmatpush1.bf16.xpose.msra.mxu0 0
        %1379 = vmatprep.subr.bf16.mxu0 0
        %1380 = vmatpush1.bf16.xpose.msra.mxu0 0
        %1381 = vmatprep.subr.bf16.mxu0 0
        %1382 = vmatpush1.bf16.xpose.msra.mxu0 0
        %1383 = vmatprep.subr.bf16.mxu0 0
        %1384 = vmatpush1.bf16.xpose.msra.mxu0 0
        %1385 = vmatprep.subr.bf16.mxu0 0
        %1386 = vmatpush1.bf16.xpose.msra.mxu0 0
        %1387 = vmatprep.subr.bf16.mxu0 0
        %1388 = vmatpush1.bf16.xpose.msra.mxu0 0
        %1389 = vmatprep.subr.bf16.mxu0 0
        %1390 = vmatpush1.bf16.xpose.msra.mxu0 0
        %1391 = vmatprep.subr.bf16.mxu0 0
        %1392 = vmatpush1.bf16.xpose.msra.mxu0 0
        %1393 = vmatprep.subr.bf16.mxu0 0
        %1394 = vmatpush1.bf16.xpose.msra.mxu0 0
        %1395 = vmatprep.subr.bf16.mxu0 0
        %1396 = vmatpush1.bf16.xpose.msra.mxu0 0
        %1397 = vmatprep.subr.bf16.mxu0 0
        %1398 = vmatpush1.bf16.xpose.msra.mxu0 0
        %1399 = vmatprep.subr.bf16.mxu0 0
        %1400 = vmatpush1.bf16.xpose.msra.mxu0 0
        %1401 = vmatprep.subr.bf16.mxu0 0
        %1402 = vmatpush1.bf16.xpose.msra.mxu0 0
        %1403 = vmatprep.subr.bf16.mxu0 0
        %1404 = vmatpush1.bf16.xpose.msra.mxu0 0
        %1405 = vmatprep.subr.bf16.mxu0 0
        %1406 = vmatpush1.bf16.xpose.msra.mxu0 0
        %1407 = vmatprep.mubr.bf16.mxu0 0
        %1408 = vmatmul.mubr.bf16.gmra.mrb[0].mxu0 %v1370
        %v1409 = vpop.f32.mrb[0].mxu0
        %v1410 = vadd.f32 0.0, %v1409
        %v1411 = vpop.f32.mrb[0].mxu0
        %v1412 = vpop.f32.mrb[0].mxu0
        %v1413 = vpop.f32.mrb[0].mxu0
        %1414 = vdwg.mxu0
        %v1416 = vsel %vm1276, %v1247, 0
        %v1419 = vsel %vm1276, %v1261, 0
        %1421 = vmatprep.subr.bf16.mxu0 0
        %1422 = vmatpush1.bf16.xpose.msra.mxu0 %v1419
        %1423 = vmatprep.subr.bf16.mxu0 0
        %1424 = vmatpush1.bf16.xpose.msra.mxu0 0
        %1425 = vmatprep.subr.bf16.mxu0 0
        %1426 = vmatpush1.bf16.xpose.msra.mxu0 0
        %1427 = vmatprep.subr.bf16.mxu0 0
        %1428 = vmatpush1.bf16.xpose.msra.mxu0 0
        %1429 = vmatprep.subr.bf16.mxu0 0
        %1430 = vmatpush1.bf16.xpose.msra.mxu0 0
        %1431 = vmatprep.subr.bf16.mxu0 0
        %1432 = vmatpush1.bf16.xpose.msra.mxu0 0
        %1433 = vmatprep.subr.bf16.mxu0 0
        %1434 = vmatpush1.bf16.xpose.msra.mxu0 0
        %1435 = vmatprep.subr.bf16.mxu0 0
        %1436 = vmatpush1.bf16.xpose.msra.mxu0 0
        %1437 = vmatprep.subr.bf16.mxu0 0
        %1438 = vmatpush1.bf16.xpose.msra.mxu0 0
        %1439 = vmatprep.subr.bf16.mxu0 0
        %1440 = vmatpush1.bf16.xpose.msra.mxu0 0
        %1441 = vmatprep.subr.bf16.mxu0 0
        %1442 = vmatpush1.bf16.xpose.msra.mxu0 0
        %1443 = vmatprep.subr.bf16.mxu0 0
        %1444 = vmatpush1.bf16.xpose.msra.mxu0 0
        %1445 = vmatprep.subr.bf16.mxu0 0
        %1446 = vmatpush1.bf16.xpose.msra.mxu0 0
        %1447 = vmatprep.subr.bf16.mxu0 0
        %1448 = vmatpush1.bf16.xpose.msra.mxu0 0
        %1449 = vmatprep.subr.bf16.mxu0 0
        %1450 = vmatpush1.bf16.xpose.msra.mxu0 0
        %1451 = vmatprep.subr.bf16.mxu0 0
        %1452 = vmatpush1.bf16.xpose.msra.mxu0 0
        %1453 = vmatprep.mubr.bf16.mxu0 0
        %1454 = vmatmul.mubr.bf16.gmra.mrb[0].mxu0 %v1416
        %v1455 = vpop.f32.mrb[0].mxu0
        %v1456 = vadd.f32 0.0, %v1455
        %v1457 = vpop.f32.mrb[0].mxu0
        %v1458 = vpop.f32.mrb[0].mxu0
        %v1459 = vpop.f32.mrb[0].mxu0
        %1460 = vdwg.mxu0
        %vm1461 = vcmask 64512
        %v1462 = vsel %vm1461, %v1318, -inf
        %1463 = vmax.xlane.f32.xlu0 %v1462
        %v1464 = vpop.xlane.xlu0 %1463
        %v1465 = vsel %vm1461, %v1364, -inf
        %1466 = vmax.xlane.f32.xlu0 %v1465
        %v1467 = vpop.xlane.xlu0 %1466
        %v1468 = vsel %vm1461, %v1410, -inf
        %1469 = vmax.xlane.f32.xlu0 %v1468
        %v1470 = vpop.xlane.xlu0 %1469
        %v1471 = vsel %vm1461, %v1456, -inf
        %1472 = vmax.xlane.f32.xlu0 %v1471
        %v1473 = vpop.xlane.xlu0 %1472
        %v1474 = vsub.f32 %v1318, %v1464
        %v1475 = vsub.f32 %v1364, %v1467
        %v1476 = vsub.f32 %v1410, %v1470
        %v1477 = vsub.f32 %v1456, %v1473
        %v1478 = vmul.f32 %v1474, 1.442695
        %v1479 = vpow.pop %v1478
        %v1480 = vmul.f32 %v1475, 1.442695
        %v1481 = vpow.pop %v1480
        %v1482 = vmul.f32 %v1476, 1.442695
        %v1483 = vpow.pop %v1482
        %v1484 = vmul.f32 %v1477, 1.442695
        %v1485 = vpow.pop %v1484
        %v1486 = vsel %vm1461, %v1479, 0.0
        %1487 = vadd.xlane.f32.xlu0 %v1486
        %v1488 = vpop.xlane.xlu0 %1487
        %v1489 = vsel %vm1461, %v1481, 0.0
        %1490 = vadd.xlane.f32.xlu0 %v1489
        %v1491 = vpop.xlane.xlu0 %1490
        %v1492 = vsel %vm1461, %v1483, 0.0
        %1493 = vadd.xlane.f32.xlu0 %v1492
        %v1494 = vpop.xlane.xlu0 %1493
        %v1495 = vsel %vm1461, %v1485, 0.0
        %1496 = vadd.xlane.f32.xlu0 %v1495
        %v1497 = vpop.xlane.xlu0 %1496
        %v1498 = vrcp.pop %v1488
        %v1499 = vrcp.pop %v1491
        %v1500 = vrcp.pop %v1494
        %v1501 = vrcp.pop %v1497
        %v1502 = vmul.f32 %v1479, %v1498
        %v1503 = vmul.f32 %v1481, %v1499
        %v1504 = vmul.f32 %v1483, %v1500
        %v1505 = vmul.f32 %v1485, %v1501
        %v1506 = vpack.c.bf16 %v1502, %v1502
        %v1507 = vpack.c.bf16 %v1503, %v1503
        %v1508 = vpack.c.bf16 %v1504, %v1504
        %v1509 = vpack.c.bf16 %v1505, %v1505
        %v1511 = vsel %vm1461, %v1506, 0
        %vm1513 = vcmask 1043456
        %v1515 = vsel %vm1513, %v1272, 0
        %1517 = vmatprep.subr.bf16.mxu0 0
        %1518 = vmatpush1.bf16.msra.mxu0 %v1515
        %1519 = vmatprep.subr.bf16.mxu0 0
        %1520 = vmatpush1.bf16.msra.mxu0 0
        %1521 = vmatprep.subr.bf16.mxu0 0
        %1522 = vmatpush1.bf16.msra.mxu0 0
        %1523 = vmatprep.subr.bf16.mxu0 0
        %1524 = vmatpush1.bf16.msra.mxu0 0
        %1525 = vmatprep.subr.bf16.mxu0 0
        %1526 = vmatpush1.bf16.msra.mxu0 0
        %1527 = vmatprep.subr.bf16.mxu0 0
        %1528 = vmatpush1.bf16.msra.mxu0 0
        %1529 = vmatprep.subr.bf16.mxu0 0
        %1530 = vmatpush1.bf16.msra.mxu0 0
        %1531 = vmatprep.subr.bf16.mxu0 0
        %1532 = vmatpush1.bf16.msra.mxu0 0
        %1533 = vmatprep.subr.bf16.mxu0 0
        %1534 = vmatpush1.bf16.msra.mxu0 0
        %1535 = vmatprep.subr.bf16.mxu0 0
        %1536 = vmatpush1.bf16.msra.mxu0 0
        %1537 = vmatprep.subr.bf16.mxu0 0
        %1538 = vmatpush1.bf16.msra.mxu0 0
        %1539 = vmatprep.subr.bf16.mxu0 0
        %1540 = vmatpush1.bf16.msra.mxu0 0
        %1541 = vmatprep.subr.bf16.mxu0 0
        %1542 = vmatpush1.bf16.msra.mxu0 0
        %1543 = vmatprep.subr.bf16.mxu0 0
        %1544 = vmatpush1.bf16.msra.mxu0 0
        %1545 = vmatprep.subr.bf16.mxu0 0
        %1546 = vmatpush1.bf16.msra.mxu0 0
        %1547 = vmatprep.subr.bf16.mxu0 0
        %1548 = vmatpush1.bf16.msra.mxu0 0
        %1549 = vmatprep.mubr.bf16.mxu0 0
        %1550 = vmatmul.mubr.bf16.gmra.mrb[0].mxu0 %v1511
        %v1551 = vpop.f32.mrb[0].mxu0
        %v1552 = vadd.f32 0.0, %v1551
        %v1553 = vpop.f32.mrb[0].mxu0
        %v1554 = vpop.f32.mrb[0].mxu0
        %v1555 = vpop.f32.mrb[0].mxu0
        %1556 = vdwg.mxu0
        %v1558 = vsel %vm1461, %v1507, 0
        %v1561 = vsel %vm1513, %v1273, 0
        %1563 = vmatprep.subr.bf16.mxu0 0
        %1564 = vmatpush1.bf16.msra.mxu0 %v1561
        %1565 = vmatprep.subr.bf16.mxu0 0
        %1566 = vmatpush1.bf16.msra.mxu0 0
        %1567 = vmatprep.subr.bf16.mxu0 0
        %1568 = vmatpush1.bf16.msra.mxu0 0
        %1569 = vmatprep.subr.bf16.mxu0 0
        %1570 = vmatpush1.bf16.msra.mxu0 0
        %1571 = vmatprep.subr.bf16.mxu0 0
        %1572 = vmatpush1.bf16.msra.mxu0 0
        %1573 = vmatprep.subr.bf16.mxu0 0
        %1574 = vmatpush1.bf16.msra.mxu0 0
        %1575 = vmatprep.subr.bf16.mxu0 0
        %1576 = vmatpush1.bf16.msra.mxu0 0
        %1577 = vmatprep.subr.bf16.mxu0 0
        %1578 = vmatpush1.bf16.msra.mxu0 0
        %1579 = vmatprep.subr.bf16.mxu0 0
        %1580 = vmatpush1.bf16.msra.mxu0 0
        %1581 = vmatprep.subr.bf16.mxu0 0
        %1582 = vmatpush1.bf16.msra.mxu0 0
        %1583 = vmatprep.subr.bf16.mxu0 0
        %1584 = vmatpush1.bf16.msra.mxu0 0
        %1585 = vmatprep.subr.bf16.mxu0 0
        %1586 = vmatpush1.bf16.msra.mxu0 0
        %1587 = vmatprep.subr.bf16.mxu0 0
        %1588 = vmatpush1.bf16.msra.mxu0 0
        %1589 = vmatprep.subr.bf16.mxu0 0
        %1590 = vmatpush1.bf16.msra.mxu0 0
        %1591 = vmatprep.subr.bf16.mxu0 0
        %1592 = vmatpush1.bf16.msra.mxu0 0
        %1593 = vmatprep.subr.bf16.mxu0 0
        %1594 = vmatpush1.bf16.msra.mxu0 0
        %1595 = vmatprep.mubr.bf16.mxu0 0
        %1596 = vmatmul.mubr.bf16.gmra.mrb[0].mxu0 %v1558
        %v1597 = vpop.f32.mrb[0].mxu0
        %v1598 = vadd.f32 0.0, %v1597
        %v1599 = vpop.f32.mrb[0].mxu0
        %v1600 = vpop.f32.mrb[0].mxu0
        %v1601 = vpop.f32.mrb[0].mxu0
        %1602 = vdwg.mxu0
        %v1604 = vsel %vm1461, %v1508, 0
        %v1607 = vsel %vm1513, %v1274, 0
        %1609 = vmatprep.subr.bf16.mxu0 0
        %1610 = vmatpush1.bf16.msra.mxu0 %v1607
        %1611 = vmatprep.subr.bf16.mxu0 0
        %1612 = vmatpush1.bf16.msra.mxu0 0
        %1613 = vmatprep.subr.bf16.mxu0 0
        %1614 = vmatpush1.bf16.msra.mxu0 0
        %1615 = vmatprep.subr.bf16.mxu0 0
        %1616 = vmatpush1.bf16.msra.mxu0 0
        %1617 = vmatprep.subr.bf16.mxu0 0
        %1618 = vmatpush1.bf16.msra.mxu0 0
        %1619 = vmatprep.subr.bf16.mxu0 0
        %1620 = vmatpush1.bf16.msra.mxu0 0
        %1621 = vmatprep.subr.bf16.mxu0 0
        %1622 = vmatpush1.bf16.msra.mxu0 0
        %1623 = vmatprep.subr.bf16.mxu0 0
        %1624 = vmatpush1.bf16.msra.mxu0 0
        %1625 = vmatprep.subr.bf16.mxu0 0
        %1626 = vmatpush1.bf16.msra.mxu0 0
        %1627 = vmatprep.subr.bf16.mxu0 0
        %1628 = vmatpush1.bf16.msra.mxu0 0
        %1629 = vmatprep.subr.bf16.mxu0 0
        %1630 = vmatpush1.bf16.msra.mxu0 0
        %1631 = vmatprep.subr.bf16.mxu0 0
        %1632 = vmatpush1.bf16.msra.mxu0 0
        %1633 = vmatprep.subr.bf16.mxu0 0
        %1634 = vmatpush1.bf16.msra.mxu0 0
        %1635 = vmatprep.subr.bf16.mxu0 0
        %1636 = vmatpush1.bf16.msra.mxu0 0
        %1637 = vmatprep.subr.bf16.mxu0 0
        %1638 = vmatpush1.bf16.msra.mxu0 0
        %1639 = vmatprep.subr.bf16.mxu0 0
        %1640 = vmatpush1.bf16.msra.mxu0 0
        %1641 = vmatprep.mubr.bf16.mxu0 0
        %1642 = vmatmul.mubr.bf16.gmra.mrb[0].mxu0 %v1604
        %v1643 = vpop.f32.mrb[0].mxu0
        %v1644 = vadd.f32 0.0, %v1643
        %v1645 = vpop.f32.mrb[0].mxu0
        %v1646 = vpop.f32.mrb[0].mxu0
        %v1647 = vpop.f32.mrb[0].mxu0
        %1648 = vdwg.mxu0
        %v1650 = vsel %vm1461, %v1509, 0
        %v1653 = vsel %vm1513, %v1275, 0
        %1655 = vmatprep.subr.bf16.mxu0 0
        %1656 = vmatpush1.bf16.msra.mxu0 %v1653
        %1657 = vmatprep.subr.bf16.mxu0 0
        %1658 = vmatpush1.bf16.msra.mxu0 0
        %1659 = vmatprep.subr.bf16.mxu0 0
        %1660 = vmatpush1.bf16.msra.mxu0 0
        %1661 = vmatprep.subr.bf16.mxu0 0
        %1662 = vmatpush1.bf16.msra.mxu0 0
        %1663 = vmatprep.subr.bf16.mxu0 0
        %1664 = vmatpush1.bf16.msra.mxu0 0
        %1665 = vmatprep.subr.bf16.mxu0 0
        %1666 = vmatpush1.bf16.msra.mxu0 0
        %1667 = vmatprep.subr.bf16.mxu0 0
        %1668 = vmatpush1.bf16.msra.mxu0 0
        %1669 = vmatprep.subr.bf16.mxu0 0
        %1670 = vmatpush1.bf16.msra.mxu0 0
        %1671 = vmatprep.subr.bf16.mxu0 0
        %1672 = vmatpush1.bf16.msra.mxu0 0
        %1673 = vmatprep.subr.bf16.mxu0 0
        %1674 = vmatpush1.bf16.msra.mxu0 0
        %1675 = vmatprep.subr.bf16.mxu0 0
        %1676 = vmatpush1.bf16.msra.mxu0 0
        %1677 = vmatprep.subr.bf16.mxu0 0
        %1678 = vmatpush1.bf16.msra.mxu0 0
        %1679 = vmatprep.subr.bf16.mxu0 0
        %1680 = vmatpush1.bf16.msra.mxu0 0
        %1681 = vmatprep.subr.bf16.mxu0 0
        %1682 = vmatpush1.bf16.msra.mxu0 0
        %1683 = vmatprep.subr.bf16.mxu0 0
        %1684 = vmatpush1.bf16.msra.mxu0 0
        %1685 = vmatprep.subr.bf16.mxu0 0
        %1686 = vmatpush1.bf16.msra.mxu0 0
        %1687 = vmatprep.mubr.bf16.mxu0 0
        %1688 = vmatmul.mubr.bf16.gmra.mrb[0].mxu0 %v1650
        %v1689 = vpop.f32.mrb[0].mxu0
        %v1690 = vadd.f32 0.0, %v1689
        %v1691 = vpop.f32.mrb[0].mxu0
        %v1692 = vpop.f32.mrb[0].mxu0
        %v1693 = vpop.f32.mrb[0].mxu0
        %1694 = vdwg.mxu0
        %1696 = vrot.lane.b32.xlu0 %v1598, 32
        %v1697 = vpop.permute.xlu0 %1696
        %1700 = vrot.lane.b32.xlu0 %v1644, 64
        %v1701 = vpop.permute.xlu0 %1700
        %1704 = vrot.lane.b32.xlu0 %v1690, 96
        %v1705 = vpop.permute.xlu0 %1704
        %v1707 = vsel %vm1276, %v1552, %v1697
        %vm1708 = vcmask 523264
        %v1709 = vsel %vm1708, %v1707, %v1701
        %vm1710 = vcmask 785408
        %v1711 = vsel %vm1710, %v1709, %v1705
        %v1712 = vpack.c.bf16 %v1711, %v1711
        %v1714 = vlaneseq
        %v1715 = vshrl.u32 %v1714, 7
        %v1716 = vsub.s32 0, %v1715
        %v1717 = vrot.slane %v881, %v1716
        %v1735 = vunpack.c.l.b16 %v865
        %v1736 = vunpack.c.l.b16 %v866
        %v1737 = vunpack.c.l.b16 %v867
        %v1738 = vunpack.c.l.b16 %v868
        %v1739 = vunpack.c.l.b16 %v869
        %v1740 = vunpack.c.l.b16 %v870
        %v1741 = vunpack.c.l.b16 %v871
        %v1742 = vunpack.c.l.b16 %v872
        %v1743 = vunpack.c.l.b16 %v873
        %v1744 = vunpack.c.l.b16 %v874
        %v1745 = vunpack.c.l.b16 %v875
        %v1746 = vunpack.c.l.b16 %v876
        %v1747 = vunpack.c.l.b16 %v877
        %v1748 = vunpack.c.l.b16 %v878
        %v1749 = vunpack.c.l.b16 %v879
        %v1750 = vunpack.c.l.b16 %v880
        %v1751 = vpack.c.b16 %v1736, %v1735
        %v1752 = vpack.c.b16 %v1738, %v1737
        %v1753 = vpack.c.b16 %v1740, %v1739
        %v1754 = vpack.c.b16 %v1742, %v1741
        %v1755 = vpack.c.b16 %v1744, %v1743
        %v1756 = vpack.c.b16 %v1746, %v1745
        %v1757 = vpack.c.b16 %v1748, %v1747
        %v1758 = vpack.c.b16 %v1750, %v1749
        %1767 = vmatprep.subr.bf16.mxu0 0
        %1768 = vmatpush1.bf16.msra.mxu0 %v1751
        %1769 = vmatprep.subr.bf16.mxu0 0
        %1770 = vmatpush1.bf16.msra.mxu0 %v1752
        %1771 = vmatprep.subr.bf16.mxu0 0
        %1772 = vmatpush1.bf16.msra.mxu0 %v1753
        %1773 = vmatprep.subr.bf16.mxu0 0
        %1774 = vmatpush1.bf16.msra.mxu0 %v1754
        %1775 = vmatprep.subr.bf16.mxu0 0
        %1776 = vmatpush1.bf16.msra.mxu0 %v1755
        %1777 = vmatprep.subr.bf16.mxu0 0
        %1778 = vmatpush1.bf16.msra.mxu0 %v1756
        %1779 = vmatprep.subr.bf16.mxu0 0
        %1780 = vmatpush1.bf16.msra.mxu0 %v1757
        %1781 = vmatprep.subr.bf16.mxu0 0
        %1782 = vmatpush1.bf16.msra.mxu0 %v1758
        %1783 = vmatprep.subr.bf16.mxu0 0
        %1784 = vmatpush1.bf16.msra.mxu0 0
        %1785 = vmatprep.subr.bf16.mxu0 0
        %1786 = vmatpush1.bf16.msra.mxu0 0
        %1787 = vmatprep.subr.bf16.mxu0 0
        %1788 = vmatpush1.bf16.msra.mxu0 0
        %1789 = vmatprep.subr.bf16.mxu0 0
        %1790 = vmatpush1.bf16.msra.mxu0 0
        %1791 = vmatprep.subr.bf16.mxu0 0
        %1792 = vmatpush1.bf16.msra.mxu0 0
        %1793 = vmatprep.subr.bf16.mxu0 0
        %1794 = vmatpush1.bf16.msra.mxu0 0
        %1795 = vmatprep.subr.bf16.mxu0 0
        %1796 = vmatpush1.bf16.msra.mxu0 0
        %1797 = vmatprep.subr.bf16.mxu0 0
        %1798 = vmatpush1.bf16.msra.mxu0 0
        %1799 = vmatprep.mubr.bf16.mxu0 0
        %1800 = vmatmul.mubr.bf16.gmra.mrb[0].mxu0 %v1712
        %v1801 = vpop.f32.mrb[0].mxu0
        %v1802 = vadd.f32 %v1717, %v1801
        %v1803 = vpop.f32.mrb[0].mxu0
        %v1804 = vpop.f32.mrb[0].mxu0
        %v1805 = vpop.f32.mrb[0].mxu0
        %1806 = vdwg.mxu0
        %v1807 = vadd.f32 %v829, %v1802
        %1808 = vadd.xlane.f32.xlu0 %v1807
        %v1809 = vpop.xlane.xlu0 %1808
        %v1810 = vmul.f32 %v1809, %v806
        %v1811 = vsub.f32 %v1807, %v1810
        %v1812 = vmul.f32 %v1811, %v1811
        %1813 = vadd.xlane.f32.xlu0 %v1812
        %v1814 = vpop.xlane.xlu0 %1813
        %v1815 = vmul.f32 %v1814, %v806
        %v1816 = vadd.f32 %v1815, 1e-05
        %v1817 = vrsqrt.pop %v1816
        %v1818 = vmul.f32 %v1811, %v1817
        %v1820 = vlaneseq
        %v1821 = vshrl.u32 %v1820, 7
        %v1822 = vsub.s32 0, %v1821
        %v1823 = vrot.slane %v882, %v1822
        %v1825 = vmul.f32 %v1818, %v1823
        %v1827 = vlaneseq
        %v1828 = vshrl.u32 %v1827, 7
        %v1829 = vsub.s32 0, %v1828
        %v1830 = vrot.slane %v883, %v1829
        %v1832 = vadd.f32 %v1825, %v1830
        %v1833 = vpack.c.bf16 %v1832, %v1832
        %v1835 = vlaneseq
        %v1836 = vshrl.u32 %v1835, 7
        %v1837 = vsub.s32 0, %v1836
        %v1838 = vrot.slane %v916, %v1837
        %v1839 = vlaneseq
        %v1840 = vshrl.u32 %v1839, 7
        %v1841 = vsub.s32 1, %v1840
        %v1842 = vrot.slane %v916, %v1841
        %v1843 = vlaneseq
        %v1844 = vshrl.u32 %v1843, 7
        %v1845 = vsub.s32 2, %v1844
        %v1846 = vrot.slane %v916, %v1845
        %v1847 = vlaneseq
        %v1848 = vshrl.u32 %v1847, 7
        %v1849 = vsub.s32 3, %v1848
        %v1850 = vrot.slane %v916, %v1849
        %v1887 = vunpack.c.l.b16 %v884
        %v1888 = vunpack.c.h.b16 %v884
        %v1889 = vunpack.c.l.b16 %v885
        %v1890 = vunpack.c.h.b16 %v885
        %v1891 = vunpack.c.l.b16 %v886
        %v1892 = vunpack.c.h.b16 %v886
        %v1893 = vunpack.c.l.b16 %v887
        %v1894 = vunpack.c.h.b16 %v887
        %v1895 = vunpack.c.l.b16 %v888
        %v1896 = vunpack.c.h.b16 %v888
        %v1897 = vunpack.c.l.b16 %v889
        %v1898 = vunpack.c.h.b16 %v889
        %v1899 = vunpack.c.l.b16 %v890
        %v1900 = vunpack.c.h.b16 %v890
        %v1901 = vunpack.c.l.b16 %v891
        %v1902 = vunpack.c.h.b16 %v891
        %v1903 = vunpack.c.l.b16 %v892
        %v1904 = vunpack.c.h.b16 %v892
        %v1905 = vunpack.c.l.b16 %v893
        %v1906 = vunpack.c.h.b16 %v893
        %v1907 = vunpack.c.l.b16 %v894
        %v1908 = vunpack.c.h.b16 %v894
        %v1909 = vunpack.c.l.b16 %v895
        %v1910 = vunpack.c.h.b16 %v895
        %v1911 = vunpack.c.l.b16 %v896
        %v1912 = vunpack.c.h.b16 %v896
        %v1913 = vunpack.c.l.b16 %v897
        %v1914 = vunpack.c.h.b16 %v897
        %v1915 = vunpack.c.l.b16 %v898
        %v1916 = vunpack.c.h.b16 %v898
        %v1917 = vunpack.c.l.b16 %v899
        %v1918 = vunpack.c.h.b16 %v899
        %v1919 = vunpack.c.l.b16 %v900
        %v1920 = vunpack.c.h.b16 %v900
        %v1921 = vunpack.c.l.b16 %v901
        %v1922 = vunpack.c.h.b16 %v901
        %v1923 = vunpack.c.l.b16 %v902
        %v1924 = vunpack.c.h.b16 %v902
        %v1925 = vunpack.c.l.b16 %v903
        %v1926 = vunpack.c.h.b16 %v903
        %v1927 = vunpack.c.l.b16 %v904
        %v1928 = vunpack.c.h.b16 %v904
        %v1929 = vunpack.c.l.b16 %v905
        %v1930 = vunpack.c.h.b16 %v905
        %v1931 = vunpack.c.l.b16 %v906
        %v1932 = vunpack.c.h.b16 %v906
        %v1933 = vunpack.c.l.b16 %v907
        %v1934 = vunpack.c.h.b16 %v907
        %v1935 = vunpack.c.l.b16 %v908
        %v1936 = vunpack.c.h.b16 %v908
        %v1937 = vunpack.c.l.b16 %v909
        %v1938 = vunpack.c.h.b16 %v909
        %v1939 = vunpack.c.l.b16 %v910
        %v1940 = vunpack.c.h.b16 %v910
        %v1941 = vunpack.c.l.b16 %v911
        %v1942 = vunpack.c.h.b16 %v911
        %v1943 = vunpack.c.l.b16 %v912
        %v1944 = vunpack.c.h.b16 %v912
        %v1945 = vunpack.c.l.b16 %v913
        %v1946 = vunpack.c.h.b16 %v913
        %v1947 = vunpack.c.l.b16 %v914
        %v1948 = vunpack.c.h.b16 %v914
        %v1949 = vunpack.c.l.b16 %v915
        %v1950 = vunpack.c.h.b16 %v915
        %v1951 = vpack.c.b16 %v1891, %v1887
        %v1952 = vpack.c.b16 %v1892, %v1888
        %v1953 = vpack.c.b16 %v1893, %v1889
        %v1954 = vpack.c.b16 %v1894, %v1890
        %v1955 = vpack.c.b16 %v1899, %v1895
        %v1956 = vpack.c.b16 %v1900, %v1896
        %v1957 = vpack.c.b16 %v1901, %v1897
        %v1958 = vpack.c.b16 %v1902, %v1898
        %v1959 = vpack.c.b16 %v1907, %v1903
        %v1960 = vpack.c.b16 %v1908, %v1904
        %v1961 = vpack.c.b16 %v1909, %v1905
        %v1962 = vpack.c.b16 %v1910, %v1906
        %v1963 = vpack.c.b16 %v1915, %v1911
        %v1964 = vpack.c.b16 %v1916, %v1912
        %v1965 = vpack.c.b16 %v1917, %v1913
        %v1966 = vpack.c.b16 %v1918, %v1914
        %v1967 = vpack.c.b16 %v1923, %v1919
        %v1968 = vpack.c.b16 %v1924, %v1920
        %v1969 = vpack.c.b16 %v1925, %v1921
        %v1970 = vpack.c.b16 %v1926, %v1922
        %v1971 = vpack.c.b16 %v1931, %v1927
        %v1972 = vpack.c.b16 %v1932, %v1928
        %v1973 = vpack.c.b16 %v1933, %v1929
        %v1974 = vpack.c.b16 %v1934, %v1930
        %v1975 = vpack.c.b16 %v1939, %v1935
        %v1976 = vpack.c.b16 %v1940, %v1936
        %v1977 = vpack.c.b16 %v1941, %v1937
        %v1978 = vpack.c.b16 %v1942, %v1938
        %v1979 = vpack.c.b16 %v1947, %v1943
        %v1980 = vpack.c.b16 %v1948, %v1944
        %v1981 = vpack.c.b16 %v1949, %v1945
        %v1982 = vpack.c.b16 %v1950, %v1946
        %2015 = vmatprep.subr.bf16.mxu0 %v1952
        %2016 = vmatpush1.bf16.msra.mxu0 %v1951
        %2017 = vmatprep.subr.bf16.mxu0 %v1956
        %2018 = vmatpush1.bf16.msra.mxu0 %v1955
        %2019 = vmatprep.subr.bf16.mxu0 %v1960
        %2020 = vmatpush1.bf16.msra.mxu0 %v1959
        %2021 = vmatprep.subr.bf16.mxu0 %v1964
        %2022 = vmatpush1.bf16.msra.mxu0 %v1963
        %2023 = vmatprep.subr.bf16.mxu0 %v1968
        %2024 = vmatpush1.bf16.msra.mxu0 %v1967
        %2025 = vmatprep.subr.bf16.mxu0 %v1972
        %2026 = vmatpush1.bf16.msra.mxu0 %v1971
        %2027 = vmatprep.subr.bf16.mxu0 %v1976
        %2028 = vmatpush1.bf16.msra.mxu0 %v1975
        %2029 = vmatprep.subr.bf16.mxu0 %v1980
        %2030 = vmatpush1.bf16.msra.mxu0 %v1979
        %2031 = vmatprep.subr.bf16.mxu0 0
        %2032 = vmatpush1.bf16.msra.mxu0 0
        %2033 = vmatprep.subr.bf16.mxu0 0
        %2034 = vmatpush1.bf16.msra.mxu0 0
        %2035 = vmatprep.subr.bf16.mxu0 0
        %2036 = vmatpush1.bf16.msra.mxu0 0
        %2037 = vmatprep.subr.bf16.mxu0 0
        %2038 = vmatpush1.bf16.msra.mxu0 0
        %2039 = vmatprep.subr.bf16.mxu0 0
        %2040 = vmatpush1.bf16.msra.mxu0 0
        %2041 = vmatprep.subr.bf16.mxu0 0
        %2042 = vmatpush1.bf16.msra.mxu0 0
        %2043 = vmatprep.subr.bf16.mxu0 0
        %2044 = vmatpush1.bf16.msra.mxu0 0
        %2045 = vmatprep.subr.bf16.mxu0 0
        %2046 = vmatpush1.bf16.msra.mxu0 0
        %2047 = vmatprep.mubr.bf16.mxu0 0
        %2048 = vmatmul.mubr.bf16.gmra.mrb[0].mxu0 %v1833
        %v2049 = vpop.f32.mrb[0].mxu0
        %v2050 = vadd.f32 %v1838, %v2049
        %v2051 = vpop.f32.mrb[0].mxu0
        %v2052 = vadd.f32 %v1842, %v2051
        %v2053 = vpop.f32.mrb[0].mxu0
        %v2054 = vpop.f32.mrb[0].mxu0
        %2055 = vdwg.mxu0
        %2056 = vmatprep.subr.bf16.mxu0 %v1954
        %2057 = vmatpush1.bf16.msra.mxu0 %v1953
        %2058 = vmatprep.subr.bf16.mxu0 %v1958
        %2059 = vmatpush1.bf16.msra.mxu0 %v1957
        %2060 = vmatprep.subr.bf16.mxu0 %v1962
        %2061 = vmatpush1.bf16.msra.mxu0 %v1961
        %2062 = vmatprep.subr.bf16.mxu0 %v1966
        %2063 = vmatpush1.bf16.msra.mxu0 %v1965
        %2064 = vmatprep.subr.bf16.mxu0 %v1970
        %2065 = vmatpush1.bf16.msra.mxu0 %v1969
        %2066 = vmatprep.subr.bf16.mxu0 %v1974
        %2067 = vmatpush1.bf16.msra.mxu0 %v1973
        %2068 = vmatprep.subr.bf16.mxu0 %v1978
        %2069 = vmatpush1.bf16.msra.mxu0 %v1977
        %2070 = vmatprep.subr.bf16.mxu0 %v1982
        %2071 = vmatpush1.bf16.msra.mxu0 %v1981
        %2072 = vmatprep.subr.bf16.mxu0 0
        %2073 = vmatpush1.bf16.msra.mxu0 0
        %2074 = vmatprep.subr.bf16.mxu0 0
        %2075 = vmatpush1.bf16.msra.mxu0 0
        %2076 = vmatprep.subr.bf16.mxu0 0
        %2077 = vmatpush1.bf16.msra.mxu0 0
        %2078 = vmatprep.subr.bf16.mxu0 0
        %2079 = vmatpush1.bf16.msra.mxu0 0
        %2080 = vmatprep.subr.bf16.mxu0 0
        %2081 = vmatpush1.bf16.msra.mxu0 0
        %2082 = vmatprep.subr.bf16.mxu0 0
        %2083 = vmatpush1.bf16.msra.mxu0 0
        %2084 = vmatprep.subr.bf16.mxu0 0
        %2085 = vmatpush1.bf16.msra.mxu0 0
        %2086 = vmatprep.subr.bf16.mxu0 0
        %2087 = vmatpush1.bf16.msra.mxu0 0
        %2088 = vmatprep.mubr.bf16.mxu0 0
        %2089 = vmatmul.mubr.bf16.gmra.mrb[0].mxu0 %v1833
        %v2090 = vpop.f32.mrb[0].mxu0
        %v2091 = vadd.f32 %v1846, %v2090
        %v2092 = vpop.f32.mrb[0].mxu0
        %v2093 = vadd.f32 %v1850, %v2092
        %v2094 = vpop.f32.mrb[0].mxu0
        %v2095 = vpop.f32.mrb[0].mxu0
        %2096 = vdwg.mxu0
        %v2097 = vmul.f32 %v2050, 1.702
        %v2098 = vmul.f32 %v2052, 1.702
        %v2099 = vmul.f32 %v2091, 1.702
        %v2100 = vmul.f32 %v2093, 1.702
        %v2101 = vxor.u32 %v2097, 2147483648
        %v2102 = vxor.u32 %v2098, 2147483648
        %v2103 = vxor.u32 %v2099, 2147483648
        %v2104 = vxor.u32 %v2100, 2147483648
        %v2105 = vmul.f32 %v2101, 1.442695
        %v2106 = vpow.pop %v2105
        %v2107 = vmul.f32 %v2102, 1.442695
        %v2108 = vpow.pop %v2107
        %v2109 = vmul.f32 %v2103, 1.442695
        %v2110 = vpow.pop %v2109
        %v2111 = vmul.f32 %v2104, 1.442695
        %v2112 = vpow.pop %v2111
        %v2113 = vadd.f32 %v2106, 1.0
        %v2114 = vadd.f32 %v2108, 1.0
        %v2115 = vadd.f32 %v2110, 1.0
        %v2116 = vadd.f32 %v2112, 1.0
        %v2117 = vrcp.pop %v2113
        %v2118 = vmul.f32 1.0, %v2117
        %v2119 = vrcp.pop %v2114
        %v2120 = vmul.f32 1.0, %v2119
        %v2121 = vrcp.pop %v2115
        %v2122 = vmul.f32 1.0, %v2121
        %v2123 = vrcp.pop %v2116
        %v2124 = vmul.f32 1.0, %v2123
        %v2125 = vmul.f32 %v2050, %v2118
        %v2126 = vmul.f32 %v2052, %v2120
        %v2127 = vmul.f32 %v2091, %v2122
        %v2128 = vmul.f32 %v2093, %v2124
        %v2129 = vpack.c.bf16 %v2125, %v2125
        %v2130 = vpack.c.bf16 %v2126, %v2126
        %v2131 = vpack.c.bf16 %v2127, %v2127
        %v2132 = vpack.c.bf16 %v2128, %v2128
        %v2134 = vlaneseq
        %v2135 = vshrl.u32 %v2134, 7
        %v2136 = vsub.s32 0, %v2135
        %v2137 = vrot.slane %v981, %v2136
        %v2203 = vunpack.c.l.b16 %v917
        %v2204 = vunpack.c.l.b16 %v918
        %v2205 = vunpack.c.l.b16 %v919
        %v2206 = vunpack.c.l.b16 %v920
        %v2207 = vunpack.c.l.b16 %v921
        %v2208 = vunpack.c.l.b16 %v922
        %v2209 = vunpack.c.l.b16 %v923
        %v2210 = vunpack.c.l.b16 %v924
        %v2211 = vunpack.c.l.b16 %v925
        %v2212 = vunpack.c.l.b16 %v926
        %v2213 = vunpack.c.l.b16 %v927
        %v2214 = vunpack.c.l.b16 %v928
        %v2215 = vunpack.c.l.b16 %v929
        %v2216 = vunpack.c.l.b16 %v930
        %v2217 = vunpack.c.l.b16 %v931
        %v2218 = vunpack.c.l.b16 %v932
        %v2219 = vunpack.c.l.b16 %v933
        %v2220 = vunpack.c.l.b16 %v934
        %v2221 = vunpack.c.l.b16 %v935
        %v2222 = vunpack.c.l.b16 %v936
        %v2223 = vunpack.c.l.b16 %v937
        %v2224 = vunpack.c.l.b16 %v938
        %v2225 = vunpack.c.l.b16 %v939
        %v2226 = vunpack.c.l.b16 %v940
        %v2227 = vunpack.c.l.b16 %v941
        %v2228 = vunpack.c.l.b16 %v942
        %v2229 = vunpack.c.l.b16 %v943
        %v2230 = vunpack.c.l.b16 %v944
        %v2231 = vunpack.c.l.b16 %v945
        %v2232 = vunpack.c.l.b16 %v946
        %v2233 = vunpack.c.l.b16 %v947
        %v2234 = vunpack.c.l.b16 %v948
        %v2235 = vunpack.c.l.b16 %v949
        %v2236 = vunpack.c.l.b16 %v950
        %v2237 = vunpack.c.l.b16 %v951
        %v2238 = vunpack.c.l.b16 %v952
        %v2239 = vunpack.c.l.b16 %v953
        %v2240 = vunpack.c.l.b16 %v954
        %v2241 = vunpack.c.l.b16 %v955
        %v2242 = vunpack.c.l.b16 %v956
        %v2243 = vunpack.c.l.b16 %v957
        %v2244 = vunpack.c.l.b16 %v958
        %v2245 = vunpack.c.l.b16 %v959
        %v2246 = vunpack.c.l.b16 %v960
        %v2247 = vunpack.c.l.b16 %v961
        %v2248 = vunpack.c.l.b16 %v962
        %v2249 = vunpack.c.l.b16 %v963
        %v2250 = vunpack.c.l.b16 %v964
        %v2251 = vunpack.c.l.b16 %v965
        %v2252 = vunpack.c.l.b16 %v966
        %v2253 = vunpack.c.l.b16 %v967
        %v2254 = vunpack.c.l.b16 %v968
        %v2255 = vunpack.c.l.b16 %v969
        %v2256 = vunpack.c.l.b16 %v970
        %v2257 = vunpack.c.l.b16 %v971
        %v2258 = vunpack.c.l.b16 %v972
        %v2259 = vunpack.c.l.b16 %v973
        %v2260 = vunpack.c.l.b16 %v974
        %v2261 = vunpack.c.l.b16 %v975
        %v2262 = vunpack.c.l.b16 %v976
        %v2263 = vunpack.c.l.b16 %v977
        %v2264 = vunpack.c.l.b16 %v978
        %v2265 = vunpack.c.l.b16 %v979
        %v2266 = vunpack.c.l.b16 %v980
        %v2267 = vpack.c.b16 %v2204, %v2203
        %v2268 = vpack.c.b16 %v2206, %v2205
        %v2269 = vpack.c.b16 %v2208, %v2207
        %v2270 = vpack.c.b16 %v2210, %v2209
        %v2271 = vpack.c.b16 %v2212, %v2211
        %v2272 = vpack.c.b16 %v2214, %v2213
        %v2273 = vpack.c.b16 %v2216, %v2215
        %v2274 = vpack.c.b16 %v2218, %v2217
        %v2275 = vpack.c.b16 %v2220, %v2219
        %v2276 = vpack.c.b16 %v2222, %v2221
        %v2277 = vpack.c.b16 %v2224, %v2223
        %v2278 = vpack.c.b16 %v2226, %v2225
        %v2279 = vpack.c.b16 %v2228, %v2227
        %v2280 = vpack.c.b16 %v2230, %v2229
        %v2281 = vpack.c.b16 %v2232, %v2231
        %v2282 = vpack.c.b16 %v2234, %v2233
        %v2283 = vpack.c.b16 %v2236, %v2235
        %v2284 = vpack.c.b16 %v2238, %v2237
        %v2285 = vpack.c.b16 %v2240, %v2239
        %v2286 = vpack.c.b16 %v2242, %v2241
        %v2287 = vpack.c.b16 %v2244, %v2243
        %v2288 = vpack.c.b16 %v2246, %v2245
        %v2289 = vpack.c.b16 %v2248, %v2247
        %v2290 = vpack.c.b16 %v2250, %v2249
        %v2291 = vpack.c.b16 %v2252, %v2251
        %v2292 = vpack.c.b16 %v2254, %v2253
        %v2293 = vpack.c.b16 %v2256, %v2255
        %v2294 = vpack.c.b16 %v2258, %v2257
        %v2295 = vpack.c.b16 %v2260, %v2259
        %v2296 = vpack.c.b16 %v2262, %v2261
        %v2297 = vpack.c.b16 %v2264, %v2263
        %v2298 = vpack.c.b16 %v2266, %v2265
        %2331 = vmatprep.subr.bf16.mxu0 0
        %2332 = vmatpush1.bf16.msra.mxu0 %v2267
        %2333 = vmatprep.subr.bf16.mxu0 0
        %2334 = vmatpush1.bf16.msra.mxu0 %v2268
        %2335 = vmatprep.subr.bf16.mxu0 0
        %2336 = vmatpush1.bf16.msra.mxu0 %v2269
        %2337 = vmatprep.subr.bf16.mxu0 0
        %2338 = vmatpush1.bf16.msra.mxu0 %v2270
        %2339 = vmatprep.subr.bf16.mxu0 0
        %2340 = vmatpush1.bf16.msra.mxu0 %v2271
        %2341 = vmatprep.subr.bf16.mxu0 0
        %2342 = vmatpush1.bf16.msra.mxu0 %v2272
        %2343 = vmatprep.subr.bf16.mxu0 0
        %2344 = vmatpush1.bf16.msra.mxu0 %v2273
        %2345 = vmatprep.subr.bf16.mxu0 0
        %2346 = vmatpush1.bf16.msra.mxu0 %v2274
        %2347 = vmatprep.subr.bf16.mxu0 0
        %2348 = vmatpush1.bf16.msra.mxu0 %v2275
        %2349 = vmatprep.subr.bf16.mxu0 0
        %2350 = vmatpush1.bf16.msra.mxu0 %v2276
        %2351 = vmatprep.subr.bf16.mxu0 0
        %2352 = vmatpush1.bf16.msra.mxu0 %v2277
        %2353 = vmatprep.subr.bf16.mxu0 0
        %2354 = vmatpush1.bf16.msra.mxu0 %v2278
        %2355 = vmatprep.subr.bf16.mxu0 0
        %2356 = vmatpush1.bf16.msra.mxu0 %v2279
        %2357 = vmatprep.subr.bf16.mxu0 0
        %2358 = vmatpush1.bf16.msra.mxu0 %v2280
        %2359 = vmatprep.subr.bf16.mxu0 0
        %2360 = vmatpush1.bf16.msra.mxu0 %v2281
        %2361 = vmatprep.subr.bf16.mxu0 0
        %2362 = vmatpush1.bf16.msra.mxu0 %v2282
        %2363 = vmatprep.mubr.bf16.mxu0 %v2130
        %2364 = vmatmul.mubr.bf16.gmra.mrb[0].mxu0 %v2129
        %v2365 = vpop.f32.mrb[0].mxu0
        %v2366 = vadd.f32 %v2137, %v2365
        %v2367 = vpop.f32.mrb[0].mxu0
        %v2368 = vpop.f32.mrb[0].mxu0
        %v2369 = vpop.f32.mrb[0].mxu0
        %2370 = vdwg.mxu0
        %2371 = vmatprep.subr.bf16.mxu0 0
        %2372 = vmatpush1.bf16.msra.mxu0 %v2283
        %2373 = vmatprep.subr.bf16.mxu0 0
        %2374 = vmatpush1.bf16.msra.mxu0 %v2284
        %2375 = vmatprep.subr.bf16.mxu0 0
        %2376 = vmatpush1.bf16.msra.mxu0 %v2285
        %2377 = vmatprep.subr.bf16.mxu0 0
        %2378 = vmatpush1.bf16.msra.mxu0 %v2286
        %2379 = vmatprep.subr.bf16.mxu0 0
        %2380 = vmatpush1.bf16.msra.mxu0 %v2287
        %2381 = vmatprep.subr.bf16.mxu0 0
        %2382 = vmatpush1.bf16.msra.mxu0 %v2288
        %2383 = vmatprep.subr.bf16.mxu0 0
        %2384 = vmatpush1.bf16.msra.mxu0 %v2289
        %2385 = vmatprep.subr.bf16.mxu0 0
        %2386 = vmatpush1.bf16.msra.mxu0 %v2290
        %2387 = vmatprep.subr.bf16.mxu0 0
        %2388 = vmatpush1.bf16.msra.mxu0 %v2291
        %2389 = vmatprep.subr.bf16.mxu0 0
        %2390 = vmatpush1.bf16.msra.mxu0 %v2292
        %2391 = vmatprep.subr.bf16.mxu0 0
        %2392 = vmatpush1.bf16.msra.mxu0 %v2293
        %2393 = vmatprep.subr.bf16.mxu0 0
        %2394 = vmatpush1.bf16.msra.mxu0 %v2294
        %2395 = vmatprep.subr.bf16.mxu0 0
        %2396 = vmatpush1.bf16.msra.mxu0 %v2295
        %2397 = vmatprep.subr.bf16.mxu0 0
        %2398 = vmatpush1.bf16.msra.mxu0 %v2296
        %2399 = vmatprep.subr.bf16.mxu0 0
        %2400 = vmatpush1.bf16.msra.mxu0 %v2297
        %2401 = vmatprep.subr.bf16.mxu0 0
        %2402 = vmatpush1.bf16.msra.mxu0 %v2298
        %2403 = vmatprep.mubr.bf16.mxu0 %v2132
        %2404 = vmatmul.mubr.bf16.gmra.mrb[0].mxu0 %v2131
        %v2405 = vpop.f32.mrb[0].mxu0
        %v2406 = vadd.f32 %v2366, %v2405
        %v2407 = vpop.f32.mrb[0].mxu0
        %v2408 = vpop.f32.mrb[0].mxu0
        %v2409 = vpop.f32.mrb[0].mxu0
        %2410 = vdwg.mxu0
        %v2411 = vadd.f32 %v1807, %v2406
        %s2412 = scalar_lea.vmem %s7, 1
        %v2413 = vld [vmem:[%s2412] sm:$0x1]
        %s2414 = scalar_lea.vmem %s8, 1
        %v2415 = vld [vmem:[%s2414] sm:$0x1]
        %s2416 = scalar_lea.vmem [#allocation3], 192
        %v2417 = vld [vmem:[%s2416] sm:$0xff]
        %v2418 = vld [vmem:[%s2416 + $0x8] sm:$0xf]
        %v2419 = vld [vmem:[%s2416 + $0xc] sm:$0xff]
        %v2420 = vld [vmem:[%s2416 + $0x14] sm:$0xf]
        %v2421 = vld [vmem:[%s2416 + $0x18] sm:$0xff]
        %v2422 = vld [vmem:[%s2416 + $0x20] sm:$0xf]
        %v2423 = vld [vmem:[%s2416 + $0x24] sm:$0xff]
        %v2424 = vld [vmem:[%s2416 + $0x2c] sm:$0xf]
        %v2425 = vld [vmem:[%s2416 + $0x30] sm:$0xff]
        %v2426 = vld [vmem:[%s2416 + $0x38] sm:$0xf]
        %v2427 = vld [vmem:[%s2416 + $0x3c] sm:$0xff]
        %v2428 = vld [vmem:[%s2416 + $0x44] sm:$0xf]
        %v2429 = vld [vmem:[%s2416 + $0x48] sm:$0xff]
        %v2430 = vld [vmem:[%s2416 + $0x50] sm:$0xf]
        %v2431 = vld [vmem:[%s2416 + $0x54] sm:$0xff]
        %v2432 = vld [vmem:[%s2416 + $0x5c] sm:$0xf]
        %v2433 = vld [vmem:[%s2416 + $0x60] sm:$0xff]
        %v2434 = vld [vmem:[%s2416 + $0x68] sm:$0xf]
        %v2435 = vld [vmem:[%s2416 + $0x6c] sm:$0xff]
        %v2436 = vld [vmem:[%s2416 + $0x74] sm:$0xf]
        %v2437 = vld [vmem:[%s2416 + $0x78] sm:$0xff]
        %v2438 = vld [vmem:[%s2416 + $0x80] sm:$0xf]
        %v2439 = vld [vmem:[%s2416 + $0x84] sm:$0xff]
        %v2440 = vld [vmem:[%s2416 + $0x8c] sm:$0xf]
        %v2441 = vld [vmem:[%s2416 + $0x90] sm:$0xff]
        %v2442 = vld [vmem:[%s2416 + $0x98] sm:$0xf]
        %v2443 = vld [vmem:[%s2416 + $0x9c] sm:$0xff]
        %v2444 = vld [vmem:[%s2416 + $0xa4] sm:$0xf]
        %v2445 = vld [vmem:[%s2416 + $0xa8] sm:$0xff]
        %v2446 = vld [vmem:[%s2416 + $0xb0] sm:$0xf]
        %v2447 = vld [vmem:[%s2416 + $0xb4] sm:$0xff]
        %v2448 = vld [vmem:[%s2416 + $0xbc] sm:$0xf]
        %s2449 = scalar_lea.vmem %s10, 3
        %v2450 = vld [vmem:[%s2449] sm:$0x7]
        %s2451 = scalar_lea.vmem [#allocation6], 64
        %v2452 = vld [vmem:[%s2451] sm:$0xf]
        %v2453 = vld [vmem:[%s2451 + $0x4] sm:$0xf]
        %v2454 = vld [vmem:[%s2451 + $0x8] sm:$0xf]
        %v2455 = vld [vmem:[%s2451 + $0xc] sm:$0xf]
        %v2456 = vld [vmem:[%s2451 + $0x10] sm:$0xf]
        %v2457 = vld [vmem:[%s2451 + $0x14] sm:$0xf]
        %v2458 = vld [vmem:[%s2451 + $0x18] sm:$0xf]
        %v2459 = vld [vmem:[%s2451 + $0x1c] sm:$0xf]
        %v2460 = vld [vmem:[%s2451 + $0x20] sm:$0xf]
        %v2461 = vld [vmem:[%s2451 + $0x24] sm:$0xf]
        %v2462 = vld [vmem:[%s2451 + $0x28] sm:$0xf]
        %v2463 = vld [vmem:[%s2451 + $0x2c] sm:$0xf]
        %v2464 = vld [vmem:[%s2451 + $0x30] sm:$0xf]
        %v2465 = vld [vmem:[%s2451 + $0x34] sm:$0xf]
        %v2466 = vld [vmem:[%s2451 + $0x38] sm:$0xf]
        %v2467 = vld [vmem:[%s2451 + $0x3c] sm:$0xf]
        %s2468 = scalar_lea.vmem %s12, 1
        %v2469 = vld [vmem:[%s2468] sm:$0x1]
        %s2470 = scalar_lea.vmem %s13, 1
        %v2471 = vld [vmem:[%s2470] sm:$0x1]
        %s2472 = scalar_lea.vmem %s14, 1
        %v2473 = vld [vmem:[%s2472] sm:$0x1]
        %s2474 = scalar_lea.vmem [#allocation8], 256
        %v2475 = vld [vmem:[%s2474] sm:$0xff]
        %v2476 = vld [vmem:[%s2474 + $0x8] sm:$0xff]
        %v2477 = vld [vmem:[%s2474 + $0x10] sm:$0xff]
        %v2478 = vld [vmem:[%s2474 + $0x18] sm:$0xff]
        %v2479 = vld [vmem:[%s2474 + $0x20] sm:$0xff]
        %v2480 = vld [vmem:[%s2474 + $0x28] sm:$0xff]
        %v2481 = vld [vmem:[%s2474 + $0x30] sm:$0xff]
        %v2482 = vld [vmem:[%s2474 + $0x38] sm:$0xff]
        %v2483 = vld [vmem:[%s2474 + $0x40] sm:$0xff]
        %v2484 = vld [vmem:[%s2474 + $0x48] sm:$0xff]
        %v2485 = vld [vmem:[%s2474 + $0x50] sm:$0xff]
        %v2486 = vld [vmem:[%s2474 + $0x58] sm:$0xff]
        %v2487 = vld [vmem:[%s2474 + $0x60] sm:$0xff]
        %v2488 = vld [vmem:[%s2474 + $0x68] sm:$0xff]
        %v2489 = vld [vmem:[%s2474 + $0x70] sm:$0xff]
        %v2490 = vld [vmem:[%s2474 + $0x78] sm:$0xff]
        %v2491 = vld [vmem:[%s2474 + $0x80] sm:$0xff]
        %v2492 = vld [vmem:[%s2474 + $0x88] sm:$0xff]
        %v2493 = vld [vmem:[%s2474 + $0x90] sm:$0xff]
        %v2494 = vld [vmem:[%s2474 + $0x98] sm:$0xff]
        %v2495 = vld [vmem:[%s2474 + $0xa0] sm:$0xff]
        %v2496 = vld [vmem:[%s2474 + $0xa8] sm:$0xff]
        %v2497 = vld [vmem:[%s2474 + $0xb0] sm:$0xff]
        %v2498 = vld [vmem:[%s2474 + $0xb8] sm:$0xff]
        %v2499 = vld [vmem:[%s2474 + $0xc0] sm:$0xff]
        %v2500 = vld [vmem:[%s2474 + $0xc8] sm:$0xff]
        %v2501 = vld [vmem:[%s2474 + $0xd0] sm:$0xff]
        %v2502 = vld [vmem:[%s2474 + $0xd8] sm:$0xff]
        %v2503 = vld [vmem:[%s2474 + $0xe0] sm:$0xff]
        %v2504 = vld [vmem:[%s2474 + $0xe8] sm:$0xff]
        %v2505 = vld [vmem:[%s2474 + $0xf0] sm:$0xff]
        %v2506 = vld [vmem:[%s2474 + $0xf8] sm:$0xff]
        %s2507 = scalar_lea.vmem %s16, 4
        %v2508 = vld [vmem:[%s2507] sm:$0xf]
        %s2509 = scalar_lea.vmem [#allocation9], 256
        %v2510 = vld [vmem:[%s2509] sm:$0xf]
        %v2511 = vld [vmem:[%s2509 + $0x4] sm:$0xf]
        %v2512 = vld [vmem:[%s2509 + $0x8] sm:$0xf]
        %v2513 = vld [vmem:[%s2509 + $0xc] sm:$0xf]
        %v2514 = vld [vmem:[%s2509 + $0x10] sm:$0xf]
        %v2515 = vld [vmem:[%s2509 + $0x14] sm:$0xf]
        %v2516 = vld [vmem:[%s2509 + $0x18] sm:$0xf]
        %v2517 = vld [vmem:[%s2509 + $0x1c] sm:$0xf]
        %v2518 = vld [vmem:[%s2509 + $0x20] sm:$0xf]
        %v2519 = vld [vmem:[%s2509 + $0x24] sm:$0xf]
        %v2520 = vld [vmem:[%s2509 + $0x28] sm:$0xf]
        %v2521 = vld [vmem:[%s2509 + $0x2c] sm:$0xf]
        %v2522 = vld [vmem:[%s2509 + $0x30] sm:$0xf]
        %v2523 = vld [vmem:[%s2509 + $0x34] sm:$0xf]
        %v2524 = vld [vmem:[%s2509 + $0x38] sm:$0xf]
        %v2525 = vld [vmem:[%s2509 + $0x3c] sm:$0xf]
        %v2526 = vld [vmem:[%s2509 + $0x40] sm:$0xf]
        %v2527 = vld [vmem:[%s2509 + $0x44] sm:$0xf]
        %v2528 = vld [vmem:[%s2509 + $0x48] sm:$0xf]
        %v2529 = vld [vmem:[%s2509 + $0x4c] sm:$0xf]
        %v2530 = vld [vmem:[%s2509 + $0x50] sm:$0xf]
        %v2531 = vld [vmem:[%s2509 + $0x54] sm:$0xf]
        %v2532 = vld [vmem:[%s2509 + $0x58] sm:$0xf]
        %v2533 = vld [vmem:[%s2509 + $0x5c] sm:$0xf]
        %v2534 = vld [vmem:[%s2509 + $0x60] sm:$0xf]
        %v2535 = vld [vmem:[%s2509 + $0x64] sm:$0xf]
        %v2536 = vld [vmem:[%s2509 + $0x68] sm:$0xf]
        %v2537 = vld [vmem:[%s2509 + $0x6c] sm:$0xf]
        %v2538 = vld [vmem:[%s2509 + $0x70] sm:$0xf]
        %v2539 = vld [vmem:[%s2509 + $0x74] sm:$0xf]
        %v2540 = vld [vmem:[%s2509 + $0x78] sm:$0xf]
        %v2541 = vld [vmem:[%s2509 + $0x7c] sm:$0xf]
        %v2542 = vld [vmem:[%s2509 + $0x80] sm:$0xf]
        %v2543 = vld [vmem:[%s2509 + $0x84] sm:$0xf]
        %v2544 = vld [vmem:[%s2509 + $0x88] sm:$0xf]
        %v2545 = vld [vmem:[%s2509 + $0x8c] sm:$0xf]
        %v2546 = vld [vmem:[%s2509 + $0x90] sm:$0xf]
        %v2547 = vld [vmem:[%s2509 + $0x94] sm:$0xf]
        %v2548 = vld [vmem:[%s2509 + $0x98] sm:$0xf]
        %v2549 = vld [vmem:[%s2509 + $0x9c] sm:$0xf]
        %v2550 = vld [vmem:[%s2509 + $0xa0] sm:$0xf]
        %v2551 = vld [vmem:[%s2509 + $0xa4] sm:$0xf]
        %v2552 = vld [vmem:[%s2509 + $0xa8] sm:$0xf]
        %v2553 = vld [vmem:[%s2509 + $0xac] sm:$0xf]
        %v2554 = vld [vmem:[%s2509 + $0xb0] sm:$0xf]
        %v2555 = vld [vmem:[%s2509 + $0xb4] sm:$0xf]
        %v2556 = vld [vmem:[%s2509 + $0xb8] sm:$0xf]
        %v2557 = vld [vmem:[%s2509 + $0xbc] sm:$0xf]
        %v2558 = vld [vmem:[%s2509 + $0xc0] sm:$0xf]
        %v2559 = vld [vmem:[%s2509 + $0xc4] sm:$0xf]
        %v2560 = vld [vmem:[%s2509 + $0xc8] sm:$0xf]
        %v2561 = vld [vmem:[%s2509 + $0xcc] sm:$0xf]
        %v2562 = vld [vmem:[%s2509 + $0xd0] sm:$0xf]
        %v2563 = vld [vmem:[%s2509 + $0xd4] sm:$0xf]
        %v2564 = vld [vmem:[%s2509 + $0xd8] sm:$0xf]
        %v2565 = vld [vmem:[%s2509 + $0xdc] sm:$0xf]
        %v2566 = vld [vmem:[%s2509 + $0xe0] sm:$0xf]
        %v2567 = vld [vmem:[%s2509 + $0xe4] sm:$0xf]
        %v2568 = vld [vmem:[%s2509 + $0xe8] sm:$0xf]
        %v2569 = vld [vmem:[%s2509 + $0xec] sm:$0xf]
        %v2570 = vld [vmem:[%s2509 + $0xf0] sm:$0xf]
        %v2571 = vld [vmem:[%s2509 + $0xf4] sm:$0xf]
        %v2572 = vld [vmem:[%s2509 + $0xf8] sm:$0xf]
        %v2573 = vld [vmem:[%s2509 + $0xfc] sm:$0xf]
        %s2574 = scalar_lea.vmem %s18, 1
        %v2575 = vld [vmem:[%s2574] sm:$0x1]
        %2576 = vadd.xlane.f32.xlu0 %v2411
        %v2577 = vpop.xlane.xlu0 %2576
        %v2578 = vmul.f32 %v2577, %v806
        %v2579 = vsub.f32 %v2411, %v2578
        %v2580 = vmul.f32 %v2579, %v2579
        %2581 = vadd.xlane.f32.xlu0 %v2580
        %v2582 = vpop.xlane.xlu0 %2581
        %v2583 = vmul.f32 %v2582, %v806
        %v2584 = vadd.f32 %v2583, 1e-05
        %v2585 = vrsqrt.pop %v2584
        %v2586 = vmul.f32 %v2579, %v2585
        %v2588 = vlaneseq
        %v2589 = vshrl.u32 %v2588, 7
        %v2590 = vsub.s32 0, %v2589
        %v2591 = vrot.slane %v2413, %v2590
        %v2593 = vmul.f32 %v2586, %v2591
        %v2595 = vlaneseq
        %v2596 = vshrl.u32 %v2595, 7
        %v2597 = vsub.s32 0, %v2596
        %v2598 = vrot.slane %v2415, %v2597
        %v2600 = vadd.f32 %v2593, %v2598
        %v2601 = vpack.c.bf16 %v2600, %v2600
        %v2603 = vlaneseq
        %v2604 = vshrl.u32 %v2603, 7
        %v2605 = vsub.s32 0, %v2604
        %v2606 = vrot.slane %v2450, %v2605
        %v2607 = vlaneseq
        %v2608 = vshrl.u32 %v2607, 7
        %v2609 = vsub.s32 1, %v2608
        %v2610 = vrot.slane %v2450, %v2609
        %v2611 = vlaneseq
        %v2612 = vshrl.u32 %v2611, 7
        %v2613 = vsub.s32 2, %v2612
        %v2614 = vrot.slane %v2450, %v2613
        %v2650 = vunpack.c.l.b16 %v2417
        %v2651 = vunpack.c.h.b16 %v2417
        %v2652 = vunpack.c.l.b16 %v2418
        %v2653 = vunpack.c.l.b16 %v2419
        %v2654 = vunpack.c.h.b16 %v2419
        %v2655 = vunpack.c.l.b16 %v2420
        %v2656 = vunpack.c.l.b16 %v2421
        %v2657 = vunpack.c.h.b16 %v2421
        %v2658 = vunpack.c.l.b16 %v2422
        %v2659 = vunpack.c.l.b16 %v2423
        %v2660 = vunpack.c.h.b16 %v2423
        %v2661 = vunpack.c.l.b16 %v2424
        %v2662 = vunpack.c.l.b16 %v2425
        %v2663 = vunpack.c.h.b16 %v2425
        %v2664 = vunpack.c.l.b16 %v2426
        %v2665 = vunpack.c.l.b16 %v2427
        %v2666 = vunpack.c.h.b16 %v2427
        %v2667 = vunpack.c.l.b16 %v2428
        %v2668 = vunpack.c.l.b16 %v2429
        %v2669 = vunpack.c.h.b16 %v2429
        %v2670 = vunpack.c.l.b16 %v2430
        %v2671 = vunpack.c.l.b16 %v2431
        %v2672 = vunpack.c.h.b16 %v2431
        %v2673 = vunpack.c.l.b16 %v2432
        %v2674 = vunpack.c.l.b16 %v2433
        %v2675 = vunpack.c.h.b16 %v2433
        %v2676 = vunpack.c.l.b16 %v2434
        %v2677 = vunpack.c.l.b16 %v2435
        %v2678 = vunpack.c.h.b16 %v2435
        %v2679 = vunpack.c.l.b16 %v2436
        %v2680 = vunpack.c.l.b16 %v2437
        %v2681 = vunpack.c.h.b16 %v2437
        %v2682 = vunpack.c.l.b16 %v2438
        %v2683 = vunpack.c.l.b16 %v2439
        %v2684 = vunpack.c.h.b16 %v2439
        %v2685 = vunpack.c.l.b16 %v2440
        %v2686 = vunpack.c.l.b16 %v2441
        %v2687 = vunpack.c.h.b16 %v2441
        %v2688 = vunpack.c.l.b16 %v2442
        %v2689 = vunpack.c.l.b16 %v2443
        %v2690 = vunpack.c.h.b16 %v2443
        %v2691 = vunpack.c.l.b16 %v2444
        %v2692 = vunpack.c.l.b16 %v2445
        %v2693 = vunpack.c.h.b16 %v2445
        %v2694 = vunpack.c.l.b16 %v2446
        %v2695 = vunpack.c.l.b16 %v2447
        %v2696 = vunpack.c.h.b16 %v2447
        %v2697 = vunpack.c.l.b16 %v2448
        %v2698 = vpack.c.b16 %v2653, %v2650
        %v2699 = vpack.c.b16 %v2654, %v2651
        %v2700 = vpack.c.b16 %v2655, %v2652
        %v2701 = vpack.c.b16 %v2659, %v2656
        %v2702 = vpack.c.b16 %v2660, %v2657
        %v2703 = vpack.c.b16 %v2661, %v2658
        %v2704 = vpack.c.b16 %v2665, %v2662
        %v2705 = vpack.c.b16 %v2666, %v2663
        %v2706 = vpack.c.b16 %v2667, %v2664
        %v2707 = vpack.c.b16 %v2671, %v2668
        %v2708 = vpack.c.b16 %v2672, %v2669
        %v2709 = vpack.c.b16 %v2673, %v2670
        %v2710 = vpack.c.b16 %v2677, %v2674
        %v2711 = vpack.c.b16 %v2678, %v2675
        %v2712 = vpack.c.b16 %v2679, %v2676
        %v2713 = vpack.c.b16 %v2683, %v2680
        %v2714 = vpack.c.b16 %v2684, %v2681
        %v2715 = vpack.c.b16 %v2685, %v2682
        %v2716 = vpack.c.b16 %v2689, %v2686
        %v2717 = vpack.c.b16 %v2690, %v2687
        %v2718 = vpack.c.b16 %v2691, %v2688
        %v2719 = vpack.c.b16 %v2695, %v2692
        %v2720 = vpack.c.b16 %v2696, %v2693
        %v2721 = vpack.c.b16 %v2697, %v2694
        %2746 = vmatprep.subr.bf16.mxu0 %v2699
        %2747 = vmatpush1.bf16.msra.mxu0 %v2698
        %2748 = vmatprep.subr.bf16.mxu0 %v2702
        %2749 = vmatpush1.bf16.msra.mxu0 %v2701
        %2750 = vmatprep.subr.bf16.mxu0 %v2705
        %2751 = vmatpush1.bf16.msra.mxu0 %v2704
        %2752 = vmatprep.subr.bf16.mxu0 %v2708
        %2753 = vmatpush1.bf16.msra.mxu0 %v2707
        %2754 = vmatprep.subr.bf16.mxu0 %v2711
        %2755 = vmatpush1.bf16.msra.mxu0 %v2710
        %2756 = vmatprep.subr.bf16.mxu0 %v2714
        %2757 = vmatpush1.bf16.msra.mxu0 %v2713
        %2758 = vmatprep.subr.bf16.mxu0 %v2717
        %2759 = vmatpush1.bf16.msra.mxu0 %v2716
        %2760 = vmatprep.subr.bf16.mxu0 %v2720
        %2761 = vmatpush1.bf16.msra.mxu0 %v2719
        %2762 = vmatprep.subr.bf16.mxu0 0
        %2763 = vmatpush1.bf16.msra.mxu0 0
        %2764 = vmatprep.subr.bf16.mxu0 0
        %2765 = vmatpush1.bf16.msra.mxu0 0
        %2766 = vmatprep.subr.bf16.mxu0 0
        %2767 = vmatpush1.bf16.msra.mxu0 0
        %2768 = vmatprep.subr.bf16.mxu0 0
        %2769 = vmatpush1.bf16.msra.mxu0 0
        %2770 = vmatprep.subr.bf16.mxu0 0
        %2771 = vmatpush1.bf16.msra.mxu0 0
        %2772 = vmatprep.subr.bf16.mxu0 0
        %2773 = vmatpush1.bf16.msra.mxu0 0
        %2774 = vmatprep.subr.bf16.mxu0 0
        %2775 = vmatpush1.bf16.msra.mxu0 0
        %2776 = vmatprep.subr.bf16.mxu0 0
        %2777 = vmatpush1.bf16.msra.mxu0 0
        %2778 = vmatprep.mubr.bf16.mxu0 0
        %2779 = vmatmul.mubr.bf16.gmra.mrb[0].mxu0 %v2601
        %v2780 = vpop.f32.mrb[0].mxu0
        %v2781 = vadd.f32 %v2606, %v2780
        %v2782 = vpop.f32.mrb[0].mxu0
        %v2783 = vadd.f32 %v2610, %v2782
        %v2784 = vpop.f32.mrb[0].mxu0
        %v2785 = vpop.f32.mrb[0].mxu0
        %2786 = vdwg.mxu0
        %2787 = vmatprep.subr.bf16.mxu0 0
        %2788 = vmatpush1.bf16.msra.mxu0 %v2700
        %2789 = vmatprep.subr.bf16.mxu0 0
        %2790 = vmatpush1.bf16.msra.mxu0 %v2703
        %2791 = vmatprep.subr.bf16.mxu0 0
        %2792 = vmatpush1.bf16.msra.mxu0 %v2706
        %2793 = vmatprep.subr.bf16.mxu0 0
        %2794 = vmatpush1.bf16.msra.mxu0 %v2709
        %2795 = vmatprep.subr.bf16.mxu0 0
        %2796 = vmatpush1.bf16.msra.mxu0 %v2712
        %2797 = vmatprep.subr.bf16.mxu0 0
        %2798 = vmatpush1.bf16.msra.mxu0 %v2715
        %2799 = vmatprep.subr.bf16.mxu0 0
        %2800 = vmatpush1.bf16.msra.mxu0 %v2718
        %2801 = vmatprep.subr.bf16.mxu0 0
        %2802 = vmatpush1.bf16.msra.mxu0 %v2721
        %2803 = vmatprep.subr.bf16.mxu0 0
        %2804 = vmatpush1.bf16.msra.mxu0 0
        %2805 = vmatprep.subr.bf16.mxu0 0
        %2806 = vmatpush1.bf16.msra.mxu0 0
        %2807 = vmatprep.subr.bf16.mxu0 0
        %2808 = vmatpush1.bf16.msra.mxu0 0
        %2809 = vmatprep.subr.bf16.mxu0 0
        %2810 = vmatpush1.bf16.msra.mxu0 0
        %2811 = vmatprep.subr.bf16.mxu0 0
        %2812 = vmatpush1.bf16.msra.mxu0 0
        %2813 = vmatprep.subr.bf16.mxu0 0
        %2814 = vmatpush1.bf16.msra.mxu0 0
        %2815 = vmatprep.subr.bf16.mxu0 0
        %2816 = vmatpush1.bf16.msra.mxu0 0
        %2817 = vmatprep.subr.bf16.mxu0 0
        %2818 = vmatpush1.bf16.msra.mxu0 0
        %2819 = vmatprep.mubr.bf16.mxu0 0
        %2820 = vmatmul.mubr.bf16.gmra.mrb[0].mxu0 %v2601
        %v2821 = vpop.f32.mrb[0].mxu0
        %v2822 = vadd.f32 %v2614, %v2821
        %v2823 = vpop.f32.mrb[0].mxu0
        %v2824 = vpop.f32.mrb[0].mxu0
        %v2825 = vpop.f32.mrb[0].mxu0
        %2826 = vdwg.mxu0
        %v2827 = vmul.f32 %v2781, 0.17677669
        %2829 = vrot.lane.b32.xlu0 %v2827, 96
        %v2830 = vpop.permute.xlu0 %2829
        %2832 = vrot.lane.b32.xlu0 %v2827, 64
        %v2833 = vpop.permute.xlu0 %2832
        %2835 = vrot.lane.b32.xlu0 %v2827, 32
        %v2836 = vpop.permute.xlu0 %2835
        %v2838 = vpack.c.bf16 %v2827, %v2827
        %v2839 = vpack.c.bf16 %v2830, %v2830
        %v2840 = vpack.c.bf16 %v2833, %v2833
        %v2841 = vpack.c.bf16 %v2836, %v2836
        %2843 = vrot.lane.b32.xlu0 %v2783, 96
        %v2844 = vpop.permute.xlu0 %2843
        %2846 = vrot.lane.b32.xlu0 %v2783, 64
        %v2847 = vpop.permute.xlu0 %2846
        %2849 = vrot.lane.b32.xlu0 %v2783, 32
        %v2850 = vpop.permute.xlu0 %2849
        %v2852 = vpack.c.bf16 %v2783, %v2783
        %v2853 = vpack.c.bf16 %v2844, %v2844
        %v2854 = vpack.c.bf16 %v2847, %v2847
        %v2855 = vpack.c.bf16 %v2850, %v2850
        %2857 = vrot.lane.b32.xlu0 %v2822, 96
        %v2858 = vpop.permute.xlu0 %2857
        %2860 = vrot.lane.b32.xlu0 %v2822, 64
        %v2861 = vpop.permute.xlu0 %2860
        %2863 = vrot.lane.b32.xlu0 %v2822, 32
        %v2864 = vpop.permute.xlu0 %2863
        %v2866 = vpack.c.bf16 %v2822, %v2822
        %v2867 = vpack.c.bf16 %v2858, %v2858
        %v2868 = vpack.c.bf16 %v2861, %v2861
        %v2869 = vpack.c.bf16 %v2864, %v2864
        %v2871 = vrot.slane %v2838, 3
        %v2873 = vsel %vm1276, %v2871, 0
        %v2876 = vsel %vm1276, %v2852, 0
        %2878 = vmatprep.subr.bf16.mxu0 0
        %2879 = vmatpush1.bf16.xpose.msra.mxu0 %v2876
        %2880 = vmatprep.subr.bf16.mxu0 0
        %2881 = vmatpush1.bf16.xpose.msra.mxu0 0
        %2882 = vmatprep.subr.bf16.mxu0 0
        %2883 = vmatpush1.bf16.xpose.msra.mxu0 0
        %2884 = vmatprep.subr.bf16.mxu0 0
        %2885 = vmatpush1.bf16.xpose.msra.mxu0 0
        %2886 = vmatprep.subr.bf16.mxu0 0
        %2887 = vmatpush1.bf16.xpose.msra.mxu0 0
        %2888 = vmatprep.subr.bf16.mxu0 0
        %2889 = vmatpush1.bf16.xpose.msra.mxu0 0
        %2890 = vmatprep.subr.bf16.mxu0 0
        %2891 = vmatpush1.bf16.xpose.msra.mxu0 0
        %2892 = vmatprep.subr.bf16.mxu0 0
        %2893 = vmatpush1.bf16.xpose.msra.mxu0 0
        %2894 = vmatprep.subr.bf16.mxu0 0
        %2895 = vmatpush1.bf16.xpose.msra.mxu0 0
        %2896 = vmatprep.subr.bf16.mxu0 0
        %2897 = vmatpush1.bf16.xpose.msra.mxu0 0
        %2898 = vmatprep.subr.bf16.mxu0 0
        %2899 = vmatpush1.bf16.xpose.msra.mxu0 0
        %2900 = vmatprep.subr.bf16.mxu0 0
        %2901 = vmatpush1.bf16.xpose.msra.mxu0 0
        %2902 = vmatprep.subr.bf16.mxu0 0
        %2903 = vmatpush1.bf16.xpose.msra.mxu0 0
        %2904 = vmatprep.subr.bf16.mxu0 0
        %2905 = vmatpush1.bf16.xpose.msra.mxu0 0
        %2906 = vmatprep.subr.bf16.mxu0 0
        %2907 = vmatpush1.bf16.xpose.msra.mxu0 0
        %2908 = vmatprep.subr.bf16.mxu0 0
        %2909 = vmatpush1.bf16.xpose.msra.mxu0 0
        %2910 = vmatprep.mubr.bf16.mxu0 0
        %2911 = vmatmul.mubr.bf16.gmra.mrb[0].mxu0 %v2873
        %v2912 = vpop.f32.mrb[0].mxu0
        %v2913 = vadd.f32 0.0, %v2912
        %v2914 = vpop.f32.mrb[0].mxu0
        %v2915 = vpop.f32.mrb[0].mxu0
        %v2916 = vpop.f32.mrb[0].mxu0
        %2917 = vdwg.mxu0
        %v2919 = vrot.slane %v2839, 3
        %v2921 = vsel %vm1276, %v2919, 0
        %v2924 = vsel %vm1276, %v2853, 0
        %2926 = vmatprep.subr.bf16.mxu0 0
        %2927 = vmatpush1.bf16.xpose.msra.mxu0 %v2924
        %2928 = vmatprep.subr.bf16.mxu0 0
        %2929 = vmatpush1.bf16.xpose.msra.mxu0 0
        %2930 = vmatprep.subr.bf16.mxu0 0
        %2931 = vmatpush1.bf16.xpose.msra.mxu0 0
        %2932 = vmatprep.subr.bf16.mxu0 0
        %2933 = vmatpush1.bf16.xpose.msra.mxu0 0
        %2934 = vmatprep.subr.bf16.mxu0 0
        %2935 = vmatpush1.bf16.xpose.msra.mxu0 0
        %2936 = vmatprep.subr.bf16.mxu0 0
        %2937 = vmatpush1.bf16.xpose.msra.mxu0 0
        %2938 = vmatprep.subr.bf16.mxu0 0
        %2939 = vmatpush1.bf16.xpose.msra.mxu0 0
        %2940 = vmatprep.subr.bf16.mxu0 0
        %2941 = vmatpush1.bf16.xpose.msra.mxu0 0
        %2942 = vmatprep.subr.bf16.mxu0 0
        %2943 = vmatpush1.bf16.xpose.msra.mxu0 0
        %2944 = vmatprep.subr.bf16.mxu0 0
        %2945 = vmatpush1.bf16.xpose.msra.mxu0 0
        %2946 = vmatprep.subr.bf16.mxu0 0
        %2947 = vmatpush1.bf16.xpose.msra.mxu0 0
        %2948 = vmatprep.subr.bf16.mxu0 0
        %2949 = vmatpush1.bf16.xpose.msra.mxu0 0
        %2950 = vmatprep.subr.bf16.mxu0 0
        %2951 = vmatpush1.bf16.xpose.msra.mxu0 0
        %2952 = vmatprep.subr.bf16.mxu0 0
        %2953 = vmatpush1.bf16.xpose.msra.mxu0 0
        %2954 = vmatprep.subr.bf16.mxu0 0
        %2955 = vmatpush1.bf16.xpose.msra.mxu0 0
        %2956 = vmatprep.subr.bf16.mxu0 0
        %2957 = vmatpush1.bf16.xpose.msra.mxu0 0
        %2958 = vmatprep.mubr.bf16.mxu0 0
        %2959 = vmatmul.mubr.bf16.gmra.mrb[0].mxu0 %v2921
        %v2960 = vpop.f32.mrb[0].mxu0
        %v2961 = vadd.f32 0.0, %v2960
        %v2962 = vpop.f32.mrb[0].mxu0
        %v2963 = vpop.f32.mrb[0].mxu0
        %v2964 = vpop.f32.mrb[0].mxu0
        %2965 = vdwg.mxu0
        %v2967 = vrot.slane %v2840, 3
        %v2969 = vsel %vm1276, %v2967, 0
        %v2972 = vsel %vm1276, %v2854, 0
        %2974 = vmatprep.subr.bf16.mxu0 0
        %2975 = vmatpush1.bf16.xpose.msra.mxu0 %v2972
        %2976 = vmatprep.subr.bf16.mxu0 0
        %2977 = vmatpush1.bf16.xpose.msra.mxu0 0
        %2978 = vmatprep.subr.bf16.mxu0 0
        %2979 = vmatpush1.bf16.xpose.msra.mxu0 0
        %2980 = vmatprep.subr.bf16.mxu0 0
        %2981 = vmatpush1.bf16.xpose.msra.mxu0 0
        %2982 = vmatprep.subr.bf16.mxu0 0
        %2983 = vmatpush1.bf16.xpose.msra.mxu0 0
        %2984 = vmatprep.subr.bf16.mxu0 0
        %2985 = vmatpush1.bf16.xpose.msra.mxu0 0
        %2986 = vmatprep.subr.bf16.mxu0 0
        %2987 = vmatpush1.bf16.xpose.msra.mxu0 0
        %2988 = vmatprep.subr.bf16.mxu0 0
        %2989 = vmatpush1.bf16.xpose.msra.mxu0 0
        %2990 = vmatprep.subr.bf16.mxu0 0
        %2991 = vmatpush1.bf16.xpose.msra.mxu0 0
        %2992 = vmatprep.subr.bf16.mxu0 0
        %2993 = vmatpush1.bf16.xpose.msra.mxu0 0
        %2994 = vmatprep.subr.bf16.mxu0 0
        %2995 = vmatpush1.bf16.xpose.msra.mxu0 0
        %2996 = vmatprep.subr.bf16.mxu0 0
        %2997 = vmatpush1.bf16.xpose.msra.mxu0 0
        %2998 = vmatprep.subr.bf16.mxu0 0
        %2999 = vmatpush1.bf16.xpose.msra.mxu0 0
        %3000 = vmatprep.subr.bf16.mxu0 0
        %3001 = vmatpush1.bf16.xpose.msra.mxu0 0
        %3002 = vmatprep.subr.bf16.mxu0 0
        %3003 = vmatpush1.bf16.xpose.msra.mxu0 0
        %3004 = vmatprep.subr.bf16.mxu0 0
        %3005 = vmatpush1.bf16.xpose.msra.mxu0 0
        %3006 = vmatprep.mubr.bf16.mxu0 0
        %3007 = vmatmul.mubr.bf16.gmra.mrb[0].mxu0 %v2969
        %v3008 = vpop.f32.mrb[0].mxu0
        %v3009 = vadd.f32 0.0, %v3008
        %v3010 = vpop.f32.mrb[0].mxu0
        %v3011 = vpop.f32.mrb[0].mxu0
        %v3012 = vpop.f32.mrb[0].mxu0
        %3013 = vdwg.mxu0
        %v3015 = vrot.slane %v2841, 3
        %v3017 = vsel %vm1276, %v3015, 0
        %v3020 = vsel %vm1276, %v2855, 0
        %3022 = vmatprep.subr.bf16.mxu0 0
        %3023 = vmatpush1.bf16.xpose.msra.mxu0 %v3020
        %3024 = vmatprep.subr.bf16.mxu0 0
        %3025 = vmatpush1.bf16.xpose.msra.mxu0 0
        %3026 = vmatprep.subr.bf16.mxu0 0
        %3027 = vmatpush1.bf16.xpose.msra.mxu0 0
        %3028 = vmatprep.subr.bf16.mxu0 0
        %3029 = vmatpush1.bf16.xpose.msra.mxu0 0
        %3030 = vmatprep.subr.bf16.mxu0 0
        %3031 = vmatpush1.bf16.xpose.msra.mxu0 0
        %3032 = vmatprep.subr.bf16.mxu0 0
        %3033 = vmatpush1.bf16.xpose.msra.mxu0 0
        %3034 = vmatprep.subr.bf16.mxu0 0
        %3035 = vmatpush1.bf16.xpose.msra.mxu0 0
        %3036 = vmatprep.subr.bf16.mxu0 0
        %3037 = vmatpush1.bf16.xpose.msra.mxu0 0
        %3038 = vmatprep.subr.bf16.mxu0 0
        %3039 = vmatpush1.bf16.xpose.msra.mxu0 0
        %3040 = vmatprep.subr.bf16.mxu0 0
        %3041 = vmatpush1.bf16.xpose.msra.mxu0 0
        %3042 = vmatprep.subr.bf16.mxu0 0
        %3043 = vmatpush1.bf16.xpose.msra.mxu0 0
        %3044 = vmatprep.subr.bf16.mxu0 0
        %3045 = vmatpush1.bf16.xpose.msra.mxu0 0
        %3046 = vmatprep.subr.bf16.mxu0 0
        %3047 = vmatpush1.bf16.xpose.msra.mxu0 0
        %3048 = vmatprep.subr.bf16.mxu0 0
        %3049 = vmatpush1.bf16.xpose.msra.mxu0 0
        %3050 = vmatprep.subr.bf16.mxu0 0
        %3051 = vmatpush1.bf16.xpose.msra.mxu0 0
        %3052 = vmatprep.subr.bf16.mxu0 0
        %3053 = vmatpush1.bf16.xpose.msra.mxu0 0
        %3054 = vmatprep.mubr.bf16.mxu0 0
        %3055 = vmatmul.mubr.bf16.gmra.mrb[0].mxu0 %v3017
        %v3056 = vpop.f32.mrb[0].mxu0
        %v3057 = vadd.f32 0.0, %v3056
        %v3058 = vpop.f32.mrb[0].mxu0
        %v3059 = vpop.f32.mrb[0].mxu0
        %v3060 = vpop.f32.mrb[0].mxu0
        %3061 = vdwg.mxu0
        %vm3062 = vcmask 58368
        %v3063 = vsel %vm3062, %v2913, -inf
        %3064 = vmax.xlane.f32.xlu0 %v3063
        %v3065 = vpop.xlane.xlu0 %3064
        %v3066 = vsel %vm3062, %v2961, -inf
        %3067 = vmax.xlane.f32.xlu0 %v3066
        %v3068 = vpop.xlane.xlu0 %3067
        %v3069 = vsel %vm3062, %v3009, -inf
        %3070 = vmax.xlane.f32.xlu0 %v3069
        %v3071 = vpop.xlane.xlu0 %3070
        %v3072 = vsel %vm3062, %v3057, -inf
        %3073 = vmax.xlane.f32.xlu0 %v3072
        %v3074 = vpop.xlane.xlu0 %3073
        %v3075 = vsub.f32 %v2913, %v3065
        %v3076 = vsub.f32 %v2961, %v3068
        %v3077 = vsub.f32 %v3009, %v3071
        %v3078 = vsub.f32 %v3057, %v3074
        %v3079 = vmul.f32 %v3075, 1.442695
        %v3080 = vpow.pop %v3079
        %v3081 = vmul.f32 %v3076, 1.442695
        %v3082 = vpow.pop %v3081
        %v3083 = vmul.f32 %v3077, 1.442695
        %v3084 = vpow.pop %v3083
        %v3085 = vmul.f32 %v3078, 1.442695
        %v3086 = vpow.pop %v3085
        %v3087 = vsel %vm3062, %v3080, 0.0
        %3088 = vadd.xlane.f32.xlu0 %v3087
        %v3089 = vpop.xlane.xlu0 %3088
        %v3090 = vsel %vm3062, %v3082, 0.0
        %3091 = vadd.xlane.f32.xlu0 %v3090
        %v3092 = vpop.xlane.xlu0 %3091
        %v3093 = vsel %vm3062, %v3084, 0.0
        %3094 = vadd.xlane.f32.xlu0 %v3093
        %v3095 = vpop.xlane.xlu0 %3094
        %v3096 = vsel %vm3062, %v3086, 0.0
        %3097 = vadd.xlane.f32.xlu0 %v3096
        %v3098 = vpop.xlane.xlu0 %3097
        %v3099 = vrcp.pop %v3089
        %v3100 = vrcp.pop %v3092
        %v3101 = vrcp.pop %v3095
        %v3102 = vrcp.pop %v3098
        %v3103 = vmul.f32 %v3080, %v3099
        %v3104 = vmul.f32 %v3082, %v3100
        %v3105 = vmul.f32 %v3084, %v3101
        %v3106 = vmul.f32 %v3086, %v3102
        %v3107 = vpack.c.bf16 %v3103, %v3103
        %v3108 = vpack.c.bf16 %v3104, %v3104
        %v3109 = vpack.c.bf16 %v3105, %v3105
        %v3110 = vpack.c.bf16 %v3106, %v3106
        %v3112 = vsel %vm1461, %v3107, 0
        %v3115 = vsel %vm1513, %v2866, 0
        %3117 = vmatprep.subr.bf16.mxu0 0
        %3118 = vmatpush1.bf16.msra.mxu0 %v3115
        %3119 = vmatprep.subr.bf16.mxu0 0
        %3120 = vmatpush1.bf16.msra.mxu0 0
        %3121 = vmatprep.subr.bf16.mxu0 0
        %3122 = vmatpush1.bf16.msra.mxu0 0
        %3123 = vmatprep.subr.bf16.mxu0 0
        %3124 = vmatpush1.bf16.msra.mxu0 0
        %3125 = vmatprep.subr.bf16.mxu0 0
        %3126 = vmatpush1.bf16.msra.mxu0 0
        %3127 = vmatprep.subr.bf16.mxu0 0
        %3128 = vmatpush1.bf16.msra.mxu0 0
        %3129 = vmatprep.subr.bf16.mxu0 0
        %3130 = vmatpush1.bf16.msra.mxu0 0
        %3131 = vmatprep.subr.bf16.mxu0 0
        %3132 = vmatpush1.bf16.msra.mxu0 0
        %3133 = vmatprep.subr.bf16.mxu0 0
        %3134 = vmatpush1.bf16.msra.mxu0 0
        %3135 = vmatprep.subr.bf16.mxu0 0
        %3136 = vmatpush1.bf16.msra.mxu0 0
        %3137 = vmatprep.subr.bf16.mxu0 0
        %3138 = vmatpush1.bf16.msra.mxu0 0
        %3139 = vmatprep.subr.bf16.mxu0 0
        %3140 = vmatpush1.bf16.msra.mxu0 0
        %3141 = vmatprep.subr.bf16.mxu0 0
        %3142 = vmatpush1.bf16.msra.mxu0 0
        %3143 = vmatprep.subr.bf16.mxu0 0
        %3144 = vmatpush1.bf16.msra.mxu0 0
        %3145 = vmatprep.subr.bf16.mxu0 0
        %3146 = vmatpush1.bf16.msra.mxu0 0
        %3147 = vmatprep.subr.bf16.mxu0 0
        %3148 = vmatpush1.bf16.msra.mxu0 0
        %3149 = vmatprep.mubr.bf16.mxu0 0
        %3150 = vmatmul.mubr.bf16.gmra.mrb[0].mxu0 %v3112
        %v3151 = vpop.f32.mrb[0].mxu0
        %v3152 = vadd.f32 0.0, %v3151
        %v3153 = vpop.f32.mrb[0].mxu0
        %v3154 = vpop.f32.mrb[0].mxu0
        %v3155 = vpop.f32.mrb[0].mxu0
        %3156 = vdwg.mxu0
        %v3158 = vsel %vm1461, %v3108, 0
        %v3161 = vsel %vm1513, %v2867, 0
        %3163 = vmatprep.subr.bf16.mxu0 0
        %3164 = vmatpush1.bf16.msra.mxu0 %v3161
        %3165 = vmatprep.subr.bf16.mxu0 0
        %3166 = vmatpush1.bf16.msra.mxu0 0
        %3167 = vmatprep.subr.bf16.mxu0 0
        %3168 = vmatpush1.bf16.msra.mxu0 0
        %3169 = vmatprep.subr.bf16.mxu0 0
        %3170 = vmatpush1.bf16.msra.mxu0 0
        %3171 = vmatprep.subr.bf16.mxu0 0
        %3172 = vmatpush1.bf16.msra.mxu0 0
        %3173 = vmatprep.subr.bf16.mxu0 0
        %3174 = vmatpush1.bf16.msra.mxu0 0
        %3175 = vmatprep.subr.bf16.mxu0 0
        %3176 = vmatpush1.bf16.msra.mxu0 0
        %3177 = vmatprep.subr.bf16.mxu0 0
        %3178 = vmatpush1.bf16.msra.mxu0 0
        %3179 = vmatprep.subr.bf16.mxu0 0
        %3180 = vmatpush1.bf16.msra.mxu0 0
        %3181 = vmatprep.subr.bf16.mxu0 0
        %3182 = vmatpush1.bf16.msra.mxu0 0
        %3183 = vmatprep.subr.bf16.mxu0 0
        %3184 = vmatpush1.bf16.msra.mxu0 0
        %3185 = vmatprep.subr.bf16.mxu0 0
        %3186 = vmatpush1.bf16.msra.mxu0 0
        %3187 = vmatprep.subr.bf16.mxu0 0
        %3188 = vmatpush1.bf16.msra.mxu0 0
        %3189 = vmatprep.subr.bf16.mxu0 0
        %3190 = vmatpush1.bf16.msra.mxu0 0
        %3191 = vmatprep.subr.bf16.mxu0 0
        %3192 = vmatpush1.bf16.msra.mxu0 0
        %3193 = vmatprep.subr.bf16.mxu0 0
        %3194 = vmatpush1.bf16.msra.mxu0 0
        %3195 = vmatprep.mubr.bf16.mxu0 0
        %3196 = vmatmul.mubr.bf16.gmra.mrb[0].mxu0 %v3158
        %v3197 = vpop.f32.mrb[0].mxu0
        %v3198 = vadd.f32 0.0, %v3197
        %v3199 = vpop.f32.mrb[0].mxu0
        %v3200 = vpop.f32.mrb[0].mxu0
        %v3201 = vpop.f32.mrb[0].mxu0
        %3202 = vdwg.mxu0
        %v3204 = vsel %vm1461, %v3109, 0
        %v3207 = vsel %vm1513, %v2868, 0
        %3209 = vmatprep.subr.bf16.mxu0 0
        %3210 = vmatpush1.bf16.msra.mxu0 %v3207
        %3211 = vmatprep.subr.bf16.mxu0 0
        %3212 = vmatpush1.bf16.msra.mxu0 0
        %3213 = vmatprep.subr.bf16.mxu0 0
        %3214 = vmatpush1.bf16.msra.mxu0 0
        %3215 = vmatprep.subr.bf16.mxu0 0
        %3216 = vmatpush1.bf16.msra.mxu0 0
        %3217 = vmatprep.subr.bf16.mxu0 0
        %3218 = vmatpush1.bf16.msra.mxu0 0
        %3219 = vmatprep.subr.bf16.mxu0 0
        %3220 = vmatpush1.bf16.msra.mxu0 0
        %3221 = vmatprep.subr.bf16.mxu0 0
        %3222 = vmatpush1.bf16.msra.mxu0 0
        %3223 = vmatprep.subr.bf16.mxu0 0
        %3224 = vmatpush1.bf16.msra.mxu0 0
        %3225 = vmatprep.subr.bf16.mxu0 0
        %3226 = vmatpush1.bf16.msra.mxu0 0
        %3227 = vmatprep.subr.bf16.mxu0 0
        %3228 = vmatpush1.bf16.msra.mxu0 0
        %3229 = vmatprep.subr.bf16.mxu0 0
        %3230 = vmatpush1.bf16.msra.mxu0 0
        %3231 = vmatprep.subr.bf16.mxu0 0
        %3232 = vmatpush1.bf16.msra.mxu0 0
        %3233 = vmatprep.subr.bf16.mxu0 0
        %3234 = vmatpush1.bf16.msra.mxu0 0
        %3235 = vmatprep.subr.bf16.mxu0 0
        %3236 = vmatpush1.bf16.msra.mxu0 0
        %3237 = vmatprep.subr.bf16.mxu0 0
        %3238 = vmatpush1.bf16.msra.mxu0 0
        %3239 = vmatprep.subr.bf16.mxu0 0
        %3240 = vmatpush1.bf16.msra.mxu0 0
        %3241 = vmatprep.mubr.bf16.mxu0 0
        %3242 = vmatmul.mubr.bf16.gmra.mrb[0].mxu0 %v3204
        %v3243 = vpop.f32.mrb[0].mxu0
        %v3244 = vadd.f32 0.0, %v3243
        %v3245 = vpop.f32.mrb[0].mxu0
        %v3246 = vpop.f32.mrb[0].mxu0
        %v3247 = vpop.f32.mrb[0].mxu0
        %3248 = vdwg.mxu0
        %v3250 = vsel %vm1461, %v3110, 0
        %v3253 = vsel %vm1513, %v2869, 0
        %3255 = vmatprep.subr.bf16.mxu0 0
        %3256 = vmatpush1.bf16.msra.mxu0 %v3253
        %3257 = vmatprep.subr.bf16.mxu0 0
        %3258 = vmatpush1.bf16.msra.mxu0 0
        %3259 = vmatprep.subr.bf16.mxu0 0
        %3260 = vmatpush1.bf16.msra.mxu0 0
        %3261 = vmatprep.subr.bf16.mxu0 0
        %3262 = vmatpush1.bf16.msra.mxu0 0
        %3263 = vmatprep.subr.bf16.mxu0 0
        %3264 = vmatpush1.bf16.msra.mxu0 0
        %3265 = vmatprep.subr.bf16.mxu0 0
        %3266 = vmatpush1.bf16.msra.mxu0 0
        %3267 = vmatprep.subr.bf16.mxu0 0
        %3268 = vmatpush1.bf16.msra.mxu0 0
        %3269 = vmatprep.subr.bf16.mxu0 0
        %3270 = vmatpush1.bf16.msra.mxu0 0
        %3271 = vmatprep.subr.bf16.mxu0 0
        %3272 = vmatpush1.bf16.msra.mxu0 0
        %3273 = vmatprep.subr.bf16.mxu0 0
        %3274 = vmatpush1.bf16.msra.mxu0 0
        %3275 = vmatprep.subr.bf16.mxu0 0
        %3276 = vmatpush1.bf16.msra.mxu0 0
        %3277 = vmatprep.subr.bf16.mxu0 0
        %3278 = vmatpush1.bf16.msra.mxu0 0
        %3279 = vmatprep.subr.bf16.mxu0 0
        %3280 = vmatpush1.bf16.msra.mxu0 0
        %3281 = vmatprep.subr.bf16.mxu0 0
        %3282 = vmatpush1.bf16.msra.mxu0 0
        %3283 = vmatprep.subr.bf16.mxu0 0
        %3284 = vmatpush1.bf16.msra.mxu0 0
        %3285 = vmatprep.subr.bf16.mxu0 0
        %3286 = vmatpush1.bf16.msra.mxu0 0
        %3287 = vmatprep.mubr.bf16.mxu0 0
        %3288 = vmatmul.mubr.bf16.gmra.mrb[0].mxu0 %v3250
        %v3289 = vpop.f32.mrb[0].mxu0
        %v3290 = vadd.f32 0.0, %v3289
        %v3291 = vpop.f32.mrb[0].mxu0
        %v3292 = vpop.f32.mrb[0].mxu0
        %v3293 = vpop.f32.mrb[0].mxu0
        %3294 = vdwg.mxu0
        %3296 = vrot.lane.b32.xlu0 %v3198, 32
        %v3297 = vpop.permute.xlu0 %3296
        %3300 = vrot.lane.b32.xlu0 %v3244, 64
        %v3301 = vpop.permute.xlu0 %3300
        %3304 = vrot.lane.b32.xlu0 %v3290, 96
        %v3305 = vpop.permute.xlu0 %3304
        %v3307 = vsel %vm1276, %v3152, %v3297
        %v3308 = vsel %vm1708, %v3307, %v3301
        %v3309 = vsel %vm1710, %v3308, %v3305
        %v3310 = vpack.c.bf16 %v3309, %v3309
        %v3312 = vlaneseq
        %v3313 = vshrl.u32 %v3312, 7
        %v3314 = vsub.s32 0, %v3313
        %v3315 = vrot.slane %v2469, %v3314
        %v3333 = vunpack.c.l.b16 %v2452
        %v3334 = vunpack.c.l.b16 %v2453
        %v3335 = vunpack.c.l.b16 %v2454
        %v3336 = vunpack.c.l.b16 %v2455
        %v3337 = vunpack.c.l.b16 %v2456
        %v3338 = vunpack.c.l.b16 %v2457
        %v3339 = vunpack.c.l.b16 %v2458
        %v3340 = vunpack.c.l.b16 %v2459
        %v3341 = vunpack.c.l.b16 %v2460
        %v3342 = vunpack.c.l.b16 %v2461
        %v3343 = vunpack.c.l.b16 %v2462
        %v3344 = vunpack.c.l.b16 %v2463
        %v3345 = vunpack.c.l.b16 %v2464
        %v3346 = vunpack.c.l.b16 %v2465
        %v3347 = vunpack.c.l.b16 %v2466
        %v3348 = vunpack.c.l.b16 %v2467
        %v3349 = vpack.c.b16 %v3334, %v3333
        %v3350 = vpack.c.b16 %v3336, %v3335
        %v3351 = vpack.c.b16 %v3338, %v3337
        %v3352 = vpack.c.b16 %v3340, %v3339
        %v3353 = vpack.c.b16 %v3342, %v3341
        %v3354 = vpack.c.b16 %v3344, %v3343
        %v3355 = vpack.c.b16 %v3346, %v3345
        %v3356 = vpack.c.b16 %v3348, %v3347
        %3365 = vmatprep.subr.bf16.mxu0 0
        %3366 = vmatpush1.bf16.msra.mxu0 %v3349
        %3367 = vmatprep.subr.bf16.mxu0 0
        %3368 = vmatpush1.bf16.msra.mxu0 %v3350
        %3369 = vmatprep.subr.bf16.mxu0 0
        %3370 = vmatpush1.bf16.msra.mxu0 %v3351
        %3371 = vmatprep.subr.bf16.mxu0 0
        %3372 = vmatpush1.bf16.msra.mxu0 %v3352
        %3373 = vmatprep.subr.bf16.mxu0 0
        %3374 = vmatpush1.bf16.msra.mxu0 %v3353
        %3375 = vmatprep.subr.bf16.mxu0 0
        %3376 = vmatpush1.bf16.msra.mxu0 %v3354
        %3377 = vmatprep.subr.bf16.mxu0 0
        %3378 = vmatpush1.bf16.msra.mxu0 %v3355
        %3379 = vmatprep.subr.bf16.mxu0 0
        %3380 = vmatpush1.bf16.msra.mxu0 %v3356
        %3381 = vmatprep.subr.bf16.mxu0 0
        %3382 = vmatpush1.bf16.msra.mxu0 0
        %3383 = vmatprep.subr.bf16.mxu0 0
        %3384 = vmatpush1.bf16.msra.mxu0 0
        %3385 = vmatprep.subr.bf16.mxu0 0
        %3386 = vmatpush1.bf16.msra.mxu0 0
        %3387 = vmatprep.subr.bf16.mxu0 0
        %3388 = vmatpush1.bf16.msra.mxu0 0
        %3389 = vmatprep.subr.bf16.mxu0 0
        %3390 = vmatpush1.bf16.msra.mxu0 0
        %3391 = vmatprep.subr.bf16.mxu0 0
        %3392 = vmatpush1.bf16.msra.mxu0 0
        %3393 = vmatprep.subr.bf16.mxu0 0
        %3394 = vmatpush1.bf16.msra.mxu0 0
        %3395 = vmatprep.subr.bf16.mxu0 0
        %3396 = vmatpush1.bf16.msra.mxu0 0
        %3397 = vmatprep.mubr.bf16.mxu0 0
        %3398 = vmatmul.mubr.bf16.gmra.mrb[0].mxu0 %v3310
        %v3399 = vpop.f32.mrb[0].mxu0
        %v3400 = vadd.f32 %v3315, %v3399
        %v3401 = vpop.f32.mrb[0].mxu0
        %v3402 = vpop.f32.mrb[0].mxu0
        %v3403 = vpop.f32.mrb[0].mxu0
        %3404 = vdwg.mxu0
        %v3406 = vrot.slane %v3400, 2
        %v3408 = vadd.f32 %v2411, %v3406
        %vm3409 = vcmask 1047558
        %v3410 = vsel %vm3409, %v3408, 0.0
        %3411 = vadd.xlane.f32.xlu0 %v3410
        %v3412 = vpop.xlane.xlu0 %3411
        %v3413 = vmul.f32 %v3412, %v806
        %v3414 = vsub.f32 %v3408, %v3413
        %v3415 = vmul.f32 %v3414, %v3414
        %v3416 = vsel %vm3409, %v3415, 0.0
        %3417 = vadd.xlane.f32.xlu0 %v3416
        %v3418 = vpop.xlane.xlu0 %3417
        %v3419 = vmul.f32 %v3418, %v806
        %v3420 = vadd.f32 %v3419, 1e-05
        %v3421 = vrsqrt.pop %v3420
        %v3422 = vmul.f32 %v3414, %v3421
        %v3424 = vlaneseq
        %v3425 = vshrl.u32 %v3424, 7
        %v3426 = vsub.s32 0, %v3425
        %v3427 = vrot.slane %v2471, %v3426
        %v3429 = vmul.f32 %v3422, %v3427
        %v3431 = vlaneseq
        %v3432 = vshrl.u32 %v3431, 7
        %v3433 = vsub.s32 0, %v3432
        %v3434 = vrot.slane %v2473, %v3433
        %v3436 = vadd.f32 %v3429, %v3434
        %v3437 = vpack.c.bf16 %v3436, %v3436
        %v3439 = vlaneseq
        %v3440 = vshrl.u32 %v3439, 7
        %v3441 = vsub.s32 0, %v3440
        %v3442 = vrot.slane %v2508, %v3441
        %v3443 = vlaneseq
        %v3444 = vshrl.u32 %v3443, 7
        %v3445 = vsub.s32 1, %v3444
        %v3446 = vrot.slane %v2508, %v3445
        %v3447 = vlaneseq
        %v3448 = vshrl.u32 %v3447, 7
        %v3449 = vsub.s32 2, %v3448
        %v3450 = vrot.slane %v2508, %v3449
        %v3451 = vlaneseq
        %v3452 = vshrl.u32 %v3451, 7
        %v3453 = vsub.s32 3, %v3452
        %v3454 = vrot.slane %v2508, %v3453
        %v3460 = vrot.slane %v3437, 3
        %v3494 = vunpack.c.l.b16 %v2475
        %v3495 = vunpack.c.h.b16 %v2475
        %v3496 = vunpack.c.l.b16 %v2476
        %v3497 = vunpack.c.h.b16 %v2476
        %v3498 = vunpack.c.l.b16 %v2477
        %v3499 = vunpack.c.h.b16 %v2477
        %v3500 = vunpack.c.l.b16 %v2478
        %v3501 = vunpack.c.h.b16 %v2478
        %v3502 = vunpack.c.l.b16 %v2479
        %v3503 = vunpack.c.h.b16 %v2479
        %v3504 = vunpack.c.l.b16 %v2480
        %v3505 = vunpack.c.h.b16 %v2480
        %v3506 = vunpack.c.l.b16 %v2481
        %v3507 = vunpack.c.h.b16 %v2481
        %v3508 = vunpack.c.l.b16 %v2482
        %v3509 = vunpack.c.h.b16 %v2482
        %v3510 = vunpack.c.l.b16 %v2483
        %v3511 = vunpack.c.h.b16 %v2483
        %v3512 = vunpack.c.l.b16 %v2484
        %v3513 = vunpack.c.h.b16 %v2484
        %v3514 = vunpack.c.l.b16 %v2485
        %v3515 = vunpack.c.h.b16 %v2485
        %v3516 = vunpack.c.l.b16 %v2486
        %v3517 = vunpack.c.h.b16 %v2486
        %v3518 = vunpack.c.l.b16 %v2487
        %v3519 = vunpack.c.h.b16 %v2487
        %v3520 = vunpack.c.l.b16 %v2488
        %v3521 = vunpack.c.h.b16 %v2488
        %v3522 = vunpack.c.l.b16 %v2489
        %v3523 = vunpack.c.h.b16 %v2489
        %v3524 = vunpack.c.l.b16 %v2490
        %v3525 = vunpack.c.h.b16 %v2490
        %v3526 = vunpack.c.l.b16 %v2491
        %v3527 = vunpack.c.h.b16 %v2491
        %v3528 = vunpack.c.l.b16 %v2492
        %v3529 = vunpack.c.h.b16 %v2492
        %v3530 = vunpack.c.l.b16 %v2493
        %v3531 = vunpack.c.h.b16 %v2493
        %v3532 = vunpack.c.l.b16 %v2494
        %v3533 = vunpack.c.h.b16 %v2494
        %v3534 = vunpack.c.l.b16 %v2495
        %v3535 = vunpack.c.h.b16 %v2495
        %v3536 = vunpack.c.l.b16 %v2496
        %v3537 = vunpack.c.h.b16 %v2496
        %v3538 = vunpack.c.l.b16 %v2497
        %v3539 = vunpack.c.h.b16 %v2497
        %v3540 = vunpack.c.l.b16 %v2498
        %v3541 = vunpack.c.h.b16 %v2498
        %v3542 = vunpack.c.l.b16 %v2499
        %v3543 = vunpack.c.h.b16 %v2499
        %v3544 = vunpack.c.l.b16 %v2500
        %v3545 = vunpack.c.h.b16 %v2500
        %v3546 = vunpack.c.l.b16 %v2501
        %v3547 = vunpack.c.h.b16 %v2501
        %v3548 = vunpack.c.l.b16 %v2502
        %v3549 = vunpack.c.h.b16 %v2502
        %v3550 = vunpack.c.l.b16 %v2503
        %v3551 = vunpack.c.h.b16 %v2503
        %v3552 = vunpack.c.l.b16 %v2504
        %v3553 = vunpack.c.h.b16 %v2504
        %v3554 = vunpack.c.l.b16 %v2505
        %v3555 = vunpack.c.h.b16 %v2505
        %v3556 = vunpack.c.l.b16 %v2506
        %v3557 = vunpack.c.h.b16 %v2506
        %v3558 = vpack.c.b16 %v3498, %v3494
        %v3559 = vpack.c.b16 %v3499, %v3495
        %v3560 = vpack.c.b16 %v3500, %v3496
        %v3561 = vpack.c.b16 %v3501, %v3497
        %v3562 = vpack.c.b16 %v3506, %v3502
        %v3563 = vpack.c.b16 %v3507, %v3503
        %v3564 = vpack.c.b16 %v3508, %v3504
        %v3565 = vpack.c.b16 %v3509, %v3505
        %v3566 = vpack.c.b16 %v3514, %v3510
        %v3567 = vpack.c.b16 %v3515, %v3511
        %v3568 = vpack.c.b16 %v3516, %v3512
        %v3569 = vpack.c.b16 %v3517, %v3513
        %v3570 = vpack.c.b16 %v3522, %v3518
        %v3571 = vpack.c.b16 %v3523, %v3519
        %v3572 = vpack.c.b16 %v3524, %v3520
        %v3573 = vpack.c.b16 %v3525, %v3521
        %v3574 = vpack.c.b16 %v3530, %v3526
        %v3575 = vpack.c.b16 %v3531, %v3527
        %v3576 = vpack.c.b16 %v3532, %v3528
        %v3577 = vpack.c.b16 %v3533, %v3529
        %v3578 = vpack.c.b16 %v3538, %v3534
        %v3579 = vpack.c.b16 %v3539, %v3535
        %v3580 = vpack.c.b16 %v3540, %v3536
        %v3581 = vpack.c.b16 %v3541, %v3537
        %v3582 = vpack.c.b16 %v3546, %v3542
        %v3583 = vpack.c.b16 %v3547, %v3543
        %v3584 = vpack.c.b16 %v3548, %v3544
        %v3585 = vpack.c.b16 %v3549, %v3545
        %v3586 = vpack.c.b16 %v3554, %v3550
        %v3587 = vpack.c.b16 %v3555, %v3551
        %v3588 = vpack.c.b16 %v3556, %v3552
        %v3589 = vpack.c.b16 %v3557, %v3553
        %3622 = vmatprep.subr.bf16.mxu0 %v3559
        %3623 = vmatpush1.bf16.msra.mxu0 %v3558
        %3624 = vmatprep.subr.bf16.mxu0 %v3563
        %3625 = vmatpush1.bf16.msra.mxu0 %v3562
        %3626 = vmatprep.subr.bf16.mxu0 %v3567
        %3627 = vmatpush1.bf16.msra.mxu0 %v3566
        %3628 = vmatprep.subr.bf16.mxu0 %v3571
        %3629 = vmatpush1.bf16.msra.mxu0 %v3570
        %3630 = vmatprep.subr.bf16.mxu0 %v3575
        %3631 = vmatpush1.bf16.msra.mxu0 %v3574
        %3632 = vmatprep.subr.bf16.mxu0 %v3579
        %3633 = vmatpush1.bf16.msra.mxu0 %v3578
        %3634 = vmatprep.subr.bf16.mxu0 %v3583
        %3635 = vmatpush1.bf16.msra.mxu0 %v3582
        %3636 = vmatprep.subr.bf16.mxu0 %v3587
        %3637 = vmatpush1.bf16.msra.mxu0 %v3586
        %3638 = vmatprep.subr.bf16.mxu0 0
        %3639 = vmatpush1.bf16.msra.mxu0 0
        %3640 = vmatprep.subr.bf16.mxu0 0
        %3641 = vmatpush1.bf16.msra.mxu0 0
        %3642 = vmatprep.subr.bf16.mxu0 0
        %3643 = vmatpush1.bf16.msra.mxu0 0
        %3644 = vmatprep.subr.bf16.mxu0 0
        %3645 = vmatpush1.bf16.msra.mxu0 0
        %3646 = vmatprep.subr.bf16.mxu0 0
        %3647 = vmatpush1.bf16.msra.mxu0 0
        %3648 = vmatprep.subr.bf16.mxu0 0
        %3649 = vmatpush1.bf16.msra.mxu0 0
        %3650 = vmatprep.subr.bf16.mxu0 0
        %3651 = vmatpush1.bf16.msra.mxu0 0
        %3652 = vmatprep.subr.bf16.mxu0 0
        %3653 = vmatpush1.bf16.msra.mxu0 0
        %3654 = vmatprep.mubr.bf16.mxu0 0
        %3655 = vmatmul.mubr.bf16.gmra.mrb[0].mxu0 %v3460
        %v3656 = vpop.f32.mrb[0].mxu0
        %v3657 = vadd.f32 %v3442, %v3656
        %v3658 = vpop.f32.mrb[0].mxu0
        %v3659 = vadd.f32 %v3446, %v3658
        %v3660 = vpop.f32.mrb[0].mxu0
        %v3661 = vpop.f32.mrb[0].mxu0
        %3662 = vdwg.mxu0
        %3663 = vmatprep.subr.bf16.mxu0 %v3561
        %3664 = vmatpush1.bf16.msra.mxu0 %v3560
        %3665 = vmatprep.subr.bf16.mxu0 %v3565
        %3666 = vmatpush1.bf16.msra.mxu0 %v3564
        %3667 = vmatprep.subr.bf16.mxu0 %v3569
        %3668 = vmatpush1.bf16.msra.mxu0 %v3568
        %3669 = vmatprep.subr.bf16.mxu0 %v3573
        %3670 = vmatpush1.bf16.msra.mxu0 %v3572
        %3671 = vmatprep.subr.bf16.mxu0 %v3577
        %3672 = vmatpush1.bf16.msra.mxu0 %v3576
        %3673 = vmatprep.subr.bf16.mxu0 %v3581
        %3674 = vmatpush1.bf16.msra.mxu0 %v3580
        %3675 = vmatprep.subr.bf16.mxu0 %v3585
        %3676 = vmatpush1.bf16.msra.mxu0 %v3584
        %3677 = vmatprep.subr.bf16.mxu0 %v3589
        %3678 = vmatpush1.bf16.msra.mxu0 %v3588
        %3679 = vmatprep.subr.bf16.mxu0 0
        %3680 = vmatpush1.bf16.msra.mxu0 0
        %3681 = vmatprep.subr.bf16.mxu0 0
        %3682 = vmatpush1.bf16.msra.mxu0 0
        %3683 = vmatprep.subr.bf16.mxu0 0
        %3684 = vmatpush1.bf16.msra.mxu0 0
        %3685 = vmatprep.subr.bf16.mxu0 0
        %3686 = vmatpush1.bf16.msra.mxu0 0
        %3687 = vmatprep.subr.bf16.mxu0 0
        %3688 = vmatpush1.bf16.msra.mxu0 0
        %3689 = vmatprep.subr.bf16.mxu0 0
        %3690 = vmatpush1.bf16.msra.mxu0 0
        %3691 = vmatprep.subr.bf16.mxu0 0
        %3692 = vmatpush1.bf16.msra.mxu0 0
        %3693 = vmatprep.subr.bf16.mxu0 0
        %3694 = vmatpush1.bf16.msra.mxu0 0
        %3695 = vmatprep.mubr.bf16.mxu0 0
        %3696 = vmatmul.mubr.bf16.gmra.mrb[0].mxu0 %v3460
        %v3697 = vpop.f32.mrb[0].mxu0
        %v3698 = vadd.f32 %v3450, %v3697
        %v3699 = vpop.f32.mrb[0].mxu0
        %v3700 = vadd.f32 %v3454, %v3699
        %v3701 = vpop.f32.mrb[0].mxu0
        %v3702 = vpop.f32.mrb[0].mxu0
        %3703 = vdwg.mxu0
        %v3704 = vmul.f32 %v3657, 1.702
        %v3705 = vmul.f32 %v3659, 1.702
        %v3706 = vmul.f32 %v3698, 1.702
        %v3707 = vmul.f32 %v3700, 1.702
        %v3708 = vxor.u32 %v3704, 2147483648
        %v3709 = vxor.u32 %v3705, 2147483648
        %v3710 = vxor.u32 %v3706, 2147483648
        %v3711 = vxor.u32 %v3707, 2147483648
        %v3712 = vmul.f32 %v3708, 1.442695
        %v3713 = vpow.pop %v3712
        %v3714 = vmul.f32 %v3709, 1.442695
        %v3715 = vpow.pop %v3714
        %v3716 = vmul.f32 %v3710, 1.442695
        %v3717 = vpow.pop %v3716
        %v3718 = vmul.f32 %v3711, 1.442695
        %v3719 = vpow.pop %v3718
        %v3720 = vadd.f32 %v3713, 1.0
        %v3721 = vadd.f32 %v3715, 1.0
        %v3722 = vadd.f32 %v3717, 1.0
        %v3723 = vadd.f32 %v3719, 1.0
        %v3724 = vrcp.pop %v3720
        %v3725 = vmul.f32 1.0, %v3724
        %v3726 = vrcp.pop %v3721
        %v3727 = vmul.f32 1.0, %v3726
        %v3728 = vrcp.pop %v3722
        %v3729 = vmul.f32 1.0, %v3728
        %v3730 = vrcp.pop %v3723
        %v3731 = vmul.f32 1.0, %v3730
        %v3732 = vmul.f32 %v3657, %v3725
        %v3733 = vmul.f32 %v3659, %v3727
        %v3734 = vmul.f32 %v3698, %v3729
        %v3735 = vmul.f32 %v3700, %v3731
        %v3736 = vpack.c.bf16 %v3732, %v3732
        %v3737 = vpack.c.bf16 %v3733, %v3733
        %v3738 = vpack.c.bf16 %v3734, %v3734
        %v3739 = vpack.c.bf16 %v3735, %v3735
        %v3741 = vlaneseq
        %v3742 = vshrl.u32 %v3741, 7
        %v3743 = vsub.s32 0, %v3742
        %v3744 = vrot.slane %v2575, %v3743
        %v3810 = vunpack.c.l.b16 %v2510
        %v3811 = vunpack.c.l.b16 %v2511
        %v3812 = vunpack.c.l.b16 %v2512
        %v3813 = vunpack.c.l.b16 %v2513
        %v3814 = vunpack.c.l.b16 %v2514
        %v3815 = vunpack.c.l.b16 %v2515
        %v3816 = vunpack.c.l.b16 %v2516
        %v3817 = vunpack.c.l.b16 %v2517
        %v3818 = vunpack.c.l.b16 %v2518
        %v3819 = vunpack.c.l.b16 %v2519
        %v3820 = vunpack.c.l.b16 %v2520
        %v3821 = vunpack.c.l.b16 %v2521
        %v3822 = vunpack.c.l.b16 %v2522
        %v3823 = vunpack.c.l.b16 %v2523
        %v3824 = vunpack.c.l.b16 %v2524
        %v3825 = vunpack.c.l.b16 %v2525
        %v3826 = vunpack.c.l.b16 %v2526
        %v3827 = vunpack.c.l.b16 %v2527
        %v3828 = vunpack.c.l.b16 %v2528
        %v3829 = vunpack.c.l.b16 %v2529
        %v3830 = vunpack.c.l.b16 %v2530
        %v3831 = vunpack.c.l.b16 %v2531
        %v3832 = vunpack.c.l.b16 %v2532
        %v3833 = vunpack.c.l.b16 %v2533
        %v3834 = vunpack.c.l.b16 %v2534
        %v3835 = vunpack.c.l.b16 %v2535
        %v3836 = vunpack.c.l.b16 %v2536
        %v3837 = vunpack.c.l.b16 %v2537
        %v3838 = vunpack.c.l.b16 %v2538
        %v3839 = vunpack.c.l.b16 %v2539
        %v3840 = vunpack.c.l.b16 %v2540
        %v3841 = vunpack.c.l.b16 %v2541
        %v3842 = vunpack.c.l.b16 %v2542
        %v3843 = vunpack.c.l.b16 %v2543
        %v3844 = vunpack.c.l.b16 %v2544
        %v3845 = vunpack.c.l.b16 %v2545
        %v3846 = vunpack.c.l.b16 %v2546
        %v3847 = vunpack.c.l.b16 %v2547
        %v3848 = vunpack.c.l.b16 %v2548
        %v3849 = vunpack.c.l.b16 %v2549
        %v3850 = vunpack.c.l.b16 %v2550
        %v3851 = vunpack.c.l.b16 %v2551
        %v3852 = vunpack.c.l.b16 %v2552
        %v3853 = vunpack.c.l.b16 %v2553
        %v3854 = vunpack.c.l.b16 %v2554
        %v3855 = vunpack.c.l.b16 %v2555
        %v3856 = vunpack.c.l.b16 %v2556
        %v3857 = vunpack.c.l.b16 %v2557
        %v3858 = vunpack.c.l.b16 %v2558
        %v3859 = vunpack.c.l.b16 %v2559
        %v3860 = vunpack.c.l.b16 %v2560
        %v3861 = vunpack.c.l.b16 %v2561
        %v3862 = vunpack.c.l.b16 %v2562
        %v3863 = vunpack.c.l.b16 %v2563
        %v3864 = vunpack.c.l.b16 %v2564
        %v3865 = vunpack.c.l.b16 %v2565
        %v3866 = vunpack.c.l.b16 %v2566
        %v3867 = vunpack.c.l.b16 %v2567
        %v3868 = vunpack.c.l.b16 %v2568
        %v3869 = vunpack.c.l.b16 %v2569
        %v3870 = vunpack.c.l.b16 %v2570
        %v3871 = vunpack.c.l.b16 %v2571
        %v3872 = vunpack.c.l.b16 %v2572
        %v3873 = vunpack.c.l.b16 %v2573
        %v3874 = vpack.c.b16 %v3811, %v3810
        %v3875 = vpack.c.b16 %v3813, %v3812
        %v3876 = vpack.c.b16 %v3815, %v3814
        %v3877 = vpack.c.b16 %v3817, %v3816
        %v3878 = vpack.c.b16 %v3819, %v3818
        %v3879 = vpack.c.b16 %v3821, %v3820
        %v3880 = vpack.c.b16 %v3823, %v3822
        %v3881 = vpack.c.b16 %v3825, %v3824
        %v3882 = vpack.c.b16 %v3827, %v3826
        %v3883 = vpack.c.b16 %v3829, %v3828
        %v3884 = vpack.c.b16 %v3831, %v3830
        %v3885 = vpack.c.b16 %v3833, %v3832
        %v3886 = vpack.c.b16 %v3835, %v3834
        %v3887 = vpack.c.b16 %v3837, %v3836
        %v3888 = vpack.c.b16 %v3839, %v3838
        %v3889 = vpack.c.b16 %v3841, %v3840
        %v3890 = vpack.c.b16 %v3843, %v3842
        %v3891 = vpack.c.b16 %v3845, %v3844
        %v3892 = vpack.c.b16 %v3847, %v3846
        %v3893 = vpack.c.b16 %v3849, %v3848
        %v3894 = vpack.c.b16 %v3851, %v3850
        %v3895 = vpack.c.b16 %v3853, %v3852
        %v3896 = vpack.c.b16 %v3855, %v3854
        %v3897 = vpack.c.b16 %v3857, %v3856
        %v3898 = vpack.c.b16 %v3859, %v3858
        %v3899 = vpack.c.b16 %v3861, %v3860
        %v3900 = vpack.c.b16 %v3863, %v3862
        %v3901 = vpack.c.b16 %v3865, %v3864
        %v3902 = vpack.c.b16 %v3867, %v3866
        %v3903 = vpack.c.b16 %v3869, %v3868
        %v3904 = vpack.c.b16 %v3871, %v3870
        %v3905 = vpack.c.b16 %v3873, %v3872
        %3938 = vmatprep.subr.bf16.mxu0 0
        %3939 = vmatpush1.bf16.msra.mxu0 %v3874
        %3940 = vmatprep.subr.bf16.mxu0 0
        %3941 = vmatpush1.bf16.msra.mxu0 %v3875
        %3942 = vmatprep.subr.bf16.mxu0 0
        %3943 = vmatpush1.bf16.msra.mxu0 %v3876
        %3944 = vmatprep.subr.bf16.mxu0 0
        %3945 = vmatpush1.bf16.msra.mxu0 %v3877
        %3946 = vmatprep.subr.bf16.mxu0 0
        %3947 = vmatpush1.bf16.msra.mxu0 %v3878
        %3948 = vmatprep.subr.bf16.mxu0 0
        %3949 = vmatpush1.bf16.msra.mxu0 %v3879
        %3950 = vmatprep.subr.bf16.mxu0 0
        %3951 = vmatpush1.bf16.msra.mxu0 %v3880
        %3952 = vmatprep.subr.bf16.mxu0 0
        %3953 = vmatpush1.bf16.msra.mxu0 %v3881
        %3954 = vmatprep.subr.bf16.mxu0 0
        %3955 = vmatpush1.bf16.msra.mxu0 %v3882
        %3956 = vmatprep.subr.bf16.mxu0 0
        %3957 = vmatpush1.bf16.msra.mxu0 %v3883
        %3958 = vmatprep.subr.bf16.mxu0 0
        %3959 = vmatpush1.bf16.msra.mxu0 %v3884
        %3960 = vmatprep.subr.bf16.mxu0 0
        %3961 = vmatpush1.bf16.msra.mxu0 %v3885
        %3962 = vmatprep.subr.bf16.mxu0 0
        %3963 = vmatpush1.bf16.msra.mxu0 %v3886
        %3964 = vmatprep.subr.bf16.mxu0 0
        %3965 = vmatpush1.bf16.msra.mxu0 %v3887
        %3966 = vmatprep.subr.bf16.mxu0 0
        %3967 = vmatpush1.bf16.msra.mxu0 %v3888
        %3968 = vmatprep.subr.bf16.mxu0 0
        %3969 = vmatpush1.bf16.msra.mxu0 %v3889
        %3970 = vmatprep.mubr.bf16.mxu0 %v3737
        %3971 = vmatmul.mubr.bf16.gmra.mrb[0].mxu0 %v3736
        %v3972 = vpop.f32.mrb[0].mxu0
        %v3973 = vadd.f32 %v3744, %v3972
        %v3974 = vpop.f32.mrb[0].mxu0
        %v3975 = vpop.f32.mrb[0].mxu0
        %v3976 = vpop.f32.mrb[0].mxu0
        %3977 = vdwg.mxu0
        %3978 = vmatprep.subr.bf16.mxu0 0
        %3979 = vmatpush1.bf16.msra.mxu0 %v3890
        %3980 = vmatprep.subr.bf16.mxu0 0
        %3981 = vmatpush1.bf16.msra.mxu0 %v3891
        %3982 = vmatprep.subr.bf16.mxu0 0
        %3983 = vmatpush1.bf16.msra.mxu0 %v3892
        %3984 = vmatprep.subr.bf16.mxu0 0
        %3985 = vmatpush1.bf16.msra.mxu0 %v3893
        %3986 = vmatprep.subr.bf16.mxu0 0
        %3987 = vmatpush1.bf16.msra.mxu0 %v3894
        %3988 = vmatprep.subr.bf16.mxu0 0
        %3989 = vmatpush1.bf16.msra.mxu0 %v3895
        %3990 = vmatprep.subr.bf16.mxu0 0
        %3991 = vmatpush1.bf16.msra.mxu0 %v3896
        %3992 = vmatprep.subr.bf16.mxu0 0
        %3993 = vmatpush1.bf16.msra.mxu0 %v3897
        %3994 = vmatprep.subr.bf16.mxu0 0
        %3995 = vmatpush1.bf16.msra.mxu0 %v3898
        %3996 = vmatprep.subr.bf16.mxu0 0
        %3997 = vmatpush1.bf16.msra.mxu0 %v3899
        %3998 = vmatprep.subr.bf16.mxu0 0
        %3999 = vmatpush1.bf16.msra.mxu0 %v3900
        %4000 = vmatprep.subr.bf16.mxu0 0
        %4001 = vmatpush1.bf16.msra.mxu0 %v3901
        %4002 = vmatprep.subr.bf16.mxu0 0
        %4003 = vmatpush1.bf16.msra.mxu0 %v3902
        %4004 = vmatprep.subr.bf16.mxu0 0
        %4005 = vmatpush1.bf16.msra.mxu0 %v3903
        %4006 = vmatprep.subr.bf16.mxu0 0
        %4007 = vmatpush1.bf16.msra.mxu0 %v3904
        %4008 = vmatprep.subr.bf16.mxu0 0
        %4009 = vmatpush1.bf16.msra.mxu0 %v3905
        %4010 = vmatprep.mubr.bf16.mxu0 %v3739
        %4011 = vmatmul.mubr.bf16.gmra.mrb[0].mxu0 %v3738
        %v4012 = vpop.f32.mrb[0].mxu0
        %v4013 = vadd.f32 %v3973, %v4012
        %v4014 = vpop.f32.mrb[0].mxu0
        %v4015 = vpop.f32.mrb[0].mxu0
        %v4016 = vpop.f32.mrb[0].mxu0
        %4017 = vdwg.mxu0
        %v4019 = vrot.slane %v4013, 2
        %v4021 = vadd.f32 %v3408, %v4019
        %4022 = vst [vmem:[#allocation2 - $0x6] sm:$0xc0] %v4021
        %4023 = vst [vmem:[%s741 - $0x6] sm:$0xc0] %v4021
        %p4024 = scmp.eq.s32.totalorder %s46, 2
        // Predicated region
        $region117: #{tpu_custom_call.1} parent=95 // pred_check
          %p4025 = pneg %p4024
        $region118: #{tpu_custom_call.1} parent=95 // pred_check_branch
          %4027 = sbr.rel (%p4025) target = $region120
        $region119: #{tpu_custom_call.1} parent=95 // pred_region
          %4028 = vst [vmem:[%s748 - $0x6] sm:$0xc0] %v4021
        $region120: #{tpu_custom_call.1} parent=95 // pred_fallthru
          _
        %s4029 = sand.u32 %s481, 1
        %s4030 = scalar_lea.sflag [#allocation5], %s4029
        %s4031 = sand.u32 %s481, 1
        %s4032 = smul.addr %s4031, 2
        %s4033 = scalar_lea.vmem [#allocation11], %s4032
        %s4034 = sand.u32 %s507, 1
        %s4035 = scalar_lea.sflag [#allocation13], %s4034
        %s4036 = sand.u32 %s507, 1
        %s4037 = smul.addr %s4036, 2
        %s4038 = scalar_lea.vmem [#allocation12], %s4037
        // Predicated region
        $region121: #{tpu_custom_call.1} parent=95 // pred_check
          %p4039 = pneg %p491
        $region122: #{tpu_custom_call.1} parent=95 // pred_check_branch
          %4041 = sbr.rel (%p4039) target = $region124
        $region123: #{tpu_custom_call.1} parent=95 // pred_region
          %s4043 = ssub.s32 32, 32
          %4044 = vsyncadd %s4030, %s4043
          %s4045 = smul.addr %s46, 2
          %s4046 = sadd.s32 %s45, %s4045
          %s4047 = smul.addr %s4046, 32
          %s4048 = scalar_lea.hbm %s19, %s4047
          %s4050 = sshll.u32 %s4033, 4
          %s4051 = int_to_ptr.vmem [resolvable:$true] %s4050
          %4053 = dma.vmem_to_hbm [thread:$0]  %s4051, 32, %s4048, %s4030
        $region124: #{tpu_custom_call.1} parent=95 // pred_fallthru
          _
        // Predicated region
        $region125: #{tpu_custom_call.1} parent=95 // pred_check
          %p4054 = pneg %p517
        $region126: #{tpu_custom_call.1} parent=95 // pred_check_branch
          %4056 = sbr.rel (%p4054) target = $region128
        $region127: #{tpu_custom_call.1} parent=95 // pred_region
          %s4058 = ssub.s32 32, 32
          %4059 = vsyncadd %s4035, %s4058
          %s4060 = smul.addr %s45, 32
          %s4061 = scalar_lea.hbm %s20, %s4060
          %s4063 = sshll.u32 %s4038, 4
          %s4064 = int_to_ptr.vmem [resolvable:$true] %s4063
          %4066 = dma.vmem_to_hbm [thread:$0]  %s4064, 32, %s4061, %s4035
        $region128: #{tpu_custom_call.1} parent=95 // pred_fallthru
          _
      $region96: #{tpu_custom_call.1} parent=5 // pred_fallthru
        _
      %p4067 = scmp.le.s32.totalorder 2, %s36
      // Predicated region
      $region129: #{tpu_custom_call.1} parent=5 // pred_check
        %p4068 = pneg %p4067
      $region130: #{tpu_custom_call.1} parent=5 // pred_check_branch
        %4070 = sbr.rel (%p4068) target = $region132
      $region131: #{tpu_custom_call.1} parent=5 // pred_region
        %s4071 = ssub.s32 %s36, 2
        // Predicated region
        $region133: #{tpu_custom_call.1} parent=131 // pred_check
          %p4072 = pneg %p497
        $region134: #{tpu_custom_call.1} parent=131 // pred_check_branch
          %4074 = sbr.rel (%p4072) target = $region136
        $region135: #{tpu_custom_call.1} parent=131 // pred_region
          %s4075 = sand.u32 %s482, 1
          %s4076 = scalar_lea.sflag [#allocation5], %s4075
          %s4077 = sand.u32 %s482, 1
          %s4078 = smul.addr %s4077, 2
          %s4079 = scalar_lea.vmem [#allocation11], %s4078
          %4080 = dma.done %s4076, 32
        $region136: #{tpu_custom_call.1} parent=131 // pred_fallthru
          _
        // Predicated region
        $region137: #{tpu_custom_call.1} parent=131 // pred_check
          %p4081 = pneg %p523
        $region138: #{tpu_custom_call.1} parent=131 // pred_check_branch
          %4083 = sbr.rel (%p4081) target = $region140
        $region139: #{tpu_custom_call.1} parent=131 // pred_region
          %s4084 = sand.u32 %s508, 1
          %s4085 = scalar_lea.sflag [#allocation13], %s4084
          %s4086 = sand.u32 %s508, 1
          %s4087 = smul.addr %s4086, 2
          %s4088 = scalar_lea.vmem [#allocation12], %s4087
          %4089 = dma.done %s4085, 32
        $region140: #{tpu_custom_call.1} parent=131 // pred_fallthru
          _
      $region132: #{tpu_custom_call.1} parent=5 // pred_fallthru
        _
    $region6: #{tpu_custom_call.1} parent=1 // loop_footer
      %s40 = sadd.s32 1, %s36
    $region7: #{tpu_custom_call.1} parent=1 // loop_footer_branch
      %35 = sbr.rel target = $region3
    $region8: #{tpu_custom_call.1} parent=1 // loop_exit
      _
    %4090 = vsyncpa [#allocation4], 1
    %s4091 = scalar_lea.sflag [#allocation4], 1
    %4092 = vsyncpa %s4091, 1
    %4093 = vsyncpa [#allocation7], 1
    %4094 = vsyncpa [#allocation10], 1
    %4095 = vsyncpa [#allocation5], 1
    %s4096 = scalar_lea.sflag [#allocation5], 1
    %4097 = vsyncpa %s4096, 1
    %4098 = vsyncpa [#allocation13], 1
    %s4099 = scalar_lea.sflag [#allocation13], 1
    %4100 = vsyncpa %s4099, 1

</llo_original>
